<compile_context>
chip_gen: v6e
topology: v6e:2x2x1
jax: 0.10.0
libtpu: 0.0.40
codegen_flags: <defaults>
</compile_context>

<pallas_src>
import functools

import jax
import jax.numpy as jnp
from jax.experimental import pallas as pl
from jax.experimental.pallas import tpu as pltpu

# ----------------------------- synthetic BERT config -----------------------------
VOCAB = 100
HIDDEN = 32
N_LAYERS = 2
N_HEADS = 4
HEAD_DIM = HIDDEN // N_HEADS
INTER = 64
MAX_POS = 16
LN_EPS = 1e-12

_FEAT_MULT = {"cls": 1, "mean": 1, "cls2": 2, "cls4": 4}


# ----------------------------- in-kernel helpers -----------------------------
def _layernorm(h, gamma, beta, eps):
    mu = jnp.mean(h, axis=-1, keepdims=True)
    d = h - mu
    var = jnp.mean(d * d, axis=-1, keepdims=True)
    return d * jax.lax.rsqrt(var + eps) * gamma + beta


def _gelu(y):
    # TODO(synk): PyTorch BERT default is exact erf-GELU; tanh approximation used here.
    return 0.5 * y * (1.0 + jnp.tanh(0.7978845608028654 * (y + 0.044715 * y * y * y)))


def _cls_rows(h, batch, seq):
    # h: (B*S, H) -> (B, H): row b*S is the CLS token of batch b.
    return jnp.concatenate([h[b * seq:b * seq + 1, :] for b in range(batch)], axis=0)


# ----------------------------- fully fused forward kernel -----------------------------
def _bert_finetune_kernel(ids_ref, mask_ref, word_ref, pos_ref, type_ref,
                          emb_g_ref, emb_b_ref,
                          wqkv_ref, bqkv_ref, wo_ref, bo_ref,
                          ln1_g_ref, ln1_b_ref, wi_ref, bi_ref, wf_ref, bf_ref,
                          ln2_g_ref, ln2_b_ref,
                          feat_ref,
                          *, n_layers, n_heads, head_dim, batch, seq, eps,
                          output_type):
    hidden = n_heads * head_dim
    scale = 1.0 / float(head_dim) ** 0.5

    # ---- fused embedding lookup: token gather via SMEM scalar ids driving
    # dynamic VMEM row slices, plus position and token-type embeddings ----
    rows = []
    for b in range(batch):
        for s in range(seq):
            tok = ids_ref[b, s]
            rows.append(word_ref[pl.ds(tok, 1), :])            # (1, H)
    tok_emb = jnp.concatenate(rows, axis=0)                    # (B*S, H)
    pos = pos_ref[0:seq, :]                                    # (S, H)
    pos_emb = jnp.concatenate([pos] * batch, axis=0)           # (B*S, H)
    # TODO(synk): token_type_ids hard-coded to type 0 (matches the test data).
    emb = tok_emb + pos_emb + type_ref[0:1, :]
    x = _layernorm(emb, emb_g_ref[...], emb_b_ref[...], eps)   # (B*S, H)

    # ---- fused attention-mask prep: (1 - m) * -10000, tiled over heads ----
    mask_f = mask_ref[...].astype(jnp.float32)                 # (B, S)
    add_mask = ((1.0 - mask_f) * -10000.0)[:, None, :]         # (B, 1, S)
    add_mask_bh = jnp.concatenate([add_mask] * n_heads, axis=0)  # (nH*B, 1, S)

    need_cls_stack = output_type in ("cls2", "cls4")
    cls_stack = [_cls_rows(x, batch, seq)] if need_cls_stack else []

    # Static layer loop: weights and activations stay VMEM-resident throughout.
    for l in range(n_layers):
        # ---- fused QKV projection: one (B*S, H) x (H, 3H) MXU matmul ----
        qkv = jnp.dot(x, wqkv_ref[l], preferred_element_type=jnp.float32) + bqkv_ref[l]
        q = qkv[:, 0 * hidden:1 * hidden].reshape(batch, seq, hidden)
        k = qkv[:, 1 * hidden:2 * hidden].reshape(batch, seq, hidden)
        v = qkv[:, 2 * hidden:3 * hidden].reshape(batch, seq, hidden)

        # ---- heads folded into the batch axis -> 2 batched einsums + 1 softmax ----
        def split_heads(t):
            return jnp.concatenate(
                [t[:, :, h * head_dim:(h + 1) * head_dim] for h in range(n_heads)],
                axis=0)                                        # (nH*B, S, dH)

        q_bh, k_bh, v_bh = split_heads(q), split_heads(k), split_heads(v)

        s = jnp.einsum('bqd,bkd->bqk', q_bh, k_bh,
                       preferred_element_type=jnp.float32) * scale
        s = s + add_mask_bh
        s = s - jnp.max(s, axis=-1, keepdims=True)
        p = jnp.exp(s)
        p = p * pl.reciprocal(jnp.sum(p, axis=-1, keepdims=True), approx=True)
        ctx_bh = jnp.einsum('bqk,bkd->bqd', p, v_bh,
                            preferred_element_type=jnp.float32)  # (nH*B, S, dH)
        ctx = jnp.concatenate(
            [ctx_bh[h * batch:(h + 1) * batch] for h in range(n_heads)],
            axis=-1).reshape(batch * seq, hidden)

        # ---- output projection + residual LayerNorm ----
        attn_out = jnp.dot(ctx, wo_ref[l], preferred_element_type=jnp.float32) + bo_ref[l]
        x = _layernorm(attn_out + x, ln1_g_ref[l], ln1_b_ref[l], eps)

        # ---- GELU FFN + residual LayerNorm ----
        inter = _gelu(jnp.dot(x, wi_ref[l], preferred_element_type=jnp.float32) + bi_ref[l])
        ffn_out = jnp.dot(inter, wf_ref[l], preferred_element_type=jnp.float32) + bf_ref[l]
        x = _layernorm(ffn_out + x, ln2_g_ref[l], ln2_b_ref[l], eps)

        if need_cls_stack:
            cls_stack.append(_cls_rows(x, batch, seq))

    # ---- fused feature head (only this tiny vector is written back to HBM) ----
    if output_type == "mean":
        x3 = x.reshape(batch, seq, hidden)
        num = jnp.sum(x3 * mask_f[:, :, None], axis=1)         # (B, H)
        den = jnp.sum(mask_f, axis=1, keepdims=True)           # (B, 1)
        feat = num / den
    elif output_type == "cls2":
        feat = jnp.concatenate([cls_stack[-1], cls_stack[-2]], axis=-1)
    elif output_type == "cls4":
        feat = jnp.concatenate([cls_stack[-i] for i in range(1, 5)], axis=-1)
    else:  # 'cls' (default)
        feat = _cls_rows(x, batch, seq)
    feat_ref[...] = feat.astype(feat_ref.dtype)


# ----------------------------- wrapper -----------------------------
def bert_finetune_forward(sp, input_ids, attention_mask, output_type="cls"):
    B, S = input_ids.shape
    kernel = functools.partial(
        _bert_finetune_kernel, n_layers=N_LAYERS, n_heads=N_HEADS,
        head_dim=HEAD_DIM, batch=B, seq=S, eps=LN_EPS, output_type=output_type)
    n_vmem_operands = 18
    return pl.pallas_call(
        kernel,
        out_shape=jax.ShapeDtypeStruct((B, _FEAT_MULT[output_type] * HIDDEN),
                                       jnp.float32),
        in_specs=([pl.BlockSpec(memory_space=pltpu.MemorySpace.SMEM)] +
                  [pl.BlockSpec(memory_space=pltpu.MemorySpace.VMEM)] * n_vmem_operands),
        out_specs=pl.BlockSpec(memory_space=pltpu.MemorySpace.VMEM),
        compiler_params=pltpu.CompilerParams(),
    )(input_ids.astype(jnp.int32), attention_mask.astype(jnp.int32),
      sp["word_emb"], sp["pos_emb"], sp["type_emb"],
      sp["emb_ln_g"], sp["emb_ln_b"],
      sp["wqkv"], sp["bqkv"], sp["wo"], sp["bo"],
      sp["ln1_g"], sp["ln1_b"], sp["wi"], sp["bi"], sp["wf"], sp["bf"],
      sp["ln2_g"], sp["ln2_b"])


# ----------------------------- parameters -----------------------------
def init_bert_params(key):
    def normal(k, shape):
        return (jax.random.normal(k, shape, jnp.float32) * 0.02).astype(jnp.float32)

    keys = jax.random.split(key, 3 + N_LAYERS)
    params = {
        "word_emb": normal(keys[0], (VOCAB, HIDDEN)),
        "pos_emb": normal(keys[1], (MAX_POS, HIDDEN)),
        "type_emb": normal(keys[2], (2, HIDDEN)),
        "emb_ln_g": jnp.ones((HIDDEN,), jnp.float32),
        "emb_ln_b": jnp.zeros((HIDDEN,), jnp.float32),
        "layers": [],
    }
    for l in range(N_LAYERS):
        lk = jax.random.split(keys[3 + l], 6)
        params["layers"].append({
            "wq": normal(lk[0], (HIDDEN, HIDDEN)), "bq": jnp.zeros((HIDDEN,), jnp.float32),
            "wk": normal(lk[1], (HIDDEN, HIDDEN)), "bk": jnp.zeros((HIDDEN,), jnp.float32),
            "wv": normal(lk[2], (HIDDEN, HIDDEN)), "bv": jnp.zeros((HIDDEN,), jnp.float32),
            "wo": normal(lk[3], (HIDDEN, HIDDEN)), "bo": jnp.zeros((HIDDEN,), jnp.float32),
            "ln1_g": jnp.ones((HIDDEN,), jnp.float32), "ln1_b": jnp.zeros((HIDDEN,), jnp.float32),
            "wi": normal(lk[4], (HIDDEN, INTER)), "bi": jnp.zeros((INTER,), jnp.float32),
            "wf": normal(lk[5], (INTER, HIDDEN)), "bf": jnp.zeros((HIDDEN,), jnp.float32),
            "ln2_g": jnp.ones((HIDDEN,), jnp.float32), "ln2_b": jnp.zeros((HIDDEN,), jnp.float32),
        })
    return params


def prepare_bert_params(params):
    """Stack / fuse weights ONCE at init (hoisted out of the jitted call path)."""
    layers = params["layers"]

    def st(fn):
        return jnp.stack([fn(l) for l in layers], axis=0)

    return {
        "word_emb": params["word_emb"],
        "pos_emb": params["pos_emb"],
        "type_emb": params["type_emb"],
        "emb_ln_g": params["emb_ln_g"].reshape(1, HIDDEN),
        "emb_ln_b": params["emb_ln_b"].reshape(1, HIDDEN),
        # Fused QKV weight/bias: (L, H, 3H) / (L, 1, 3H)
        "wqkv": st(lambda l: jnp.concatenate([l["wq"], l["wk"], l["wv"]], axis=1)),
        "bqkv": st(lambda l: jnp.concatenate([l["bq"], l["bk"], l["bv"]]).reshape(1, 3 * HIDDEN)),
        "wo": st(lambda l: l["wo"]),
        "bo": st(lambda l: l["bo"].reshape(1, HIDDEN)),
        "ln1_g": st(lambda l: l["ln1_g"].reshape(1, HIDDEN)),
        "ln1_b": st(lambda l: l["ln1_b"].reshape(1, HIDDEN)),
        "wi": st(lambda l: l["wi"]),
        "bi": st(lambda l: l["bi"].reshape(1, INTER)),
        "wf": st(lambda l: l["wf"]),
        "bf": st(lambda l: l["bf"].reshape(1, HIDDEN)),
        "ln2_g": st(lambda l: l["ln2_g"].reshape(1, HIDDEN)),
        "ln2_b": st(lambda l: l["ln2_b"].reshape(1, HIDDEN)),
    }


# ----------------------------- main -----------------------------
if __name__ == "__main__":
    root = jax.random.PRNGKey(0)
    k_param, k_ids = jax.random.split(root)

    params = init_bert_params(k_param)
    stacked = prepare_bert_params(params)   # one-time weight stacking (not per call)

    B, S = 2, 8
    input_ids = jax.random.randint(k_ids, (B, S), 0, VOCAB, dtype=jnp.int32)
    attention_mask = jnp.array(
        [[1, 1, 1, 1, 1, 1, 1, 1],
         [1, 1, 1, 1, 1, 1, 0, 0]], dtype=jnp.int32)

    fwd = jax.jit(functools.partial(bert_finetune_forward, output_type="cls"))
    feature = fwd(stacked, input_ids, attention_mask)
    feature = jax.block_until_ready(feature)
    assert feature.shape == (B, HIDDEN)
    print("KERNEL_OK")
</pallas_src>

<mosaic_0001>
module attributes {stable_mosaic.version = 11 : i64} {
  func.func @_bert_finetune_kernel(%arg0: memref<2x8xi32, #tpu.memory_space<smem>>, %arg1: memref<2x8xi32, #tpu.memory_space<vmem>>, %arg2: memref<100x32xf32, #tpu.memory_space<vmem>>, %arg3: memref<16x32xf32, #tpu.memory_space<vmem>>, %arg4: memref<2x32xf32, #tpu.memory_space<vmem>>, %arg5: memref<1x32xf32, #tpu.memory_space<vmem>>, %arg6: memref<1x32xf32, #tpu.memory_space<vmem>>, %arg7: memref<2x32x96xf32, #tpu.memory_space<vmem>>, %arg8: memref<2x1x96xf32, #tpu.memory_space<vmem>>, %arg9: memref<2x32x32xf32, #tpu.memory_space<vmem>>, %arg10: memref<2x1x32xf32, #tpu.memory_space<vmem>>, %arg11: memref<2x1x32xf32, #tpu.memory_space<vmem>>, %arg12: memref<2x1x32xf32, #tpu.memory_space<vmem>>, %arg13: memref<2x32x64xf32, #tpu.memory_space<vmem>>, %arg14: memref<2x1x64xf32, #tpu.memory_space<vmem>>, %arg15: memref<2x64x32xf32, #tpu.memory_space<vmem>>, %arg16: memref<2x1x32xf32, #tpu.memory_space<vmem>>, %arg17: memref<2x1x32xf32, #tpu.memory_space<vmem>>, %arg18: memref<2x1x32xf32, #tpu.memory_space<vmem>>, %arg19: memref<2x32xf32, #tpu.memory_space<vmem>>) attributes {dimension_semantics = [], scalar_prefetch = 0 : i64, scratch_operands = 0 : i64, tpu.core_type = #tpu.core_type<tc>} {
    %c0 = arith.constant 0 : index
    %c0_0 = arith.constant 0 : index
    %0 = memref.load %arg0[%c0, %c0_0] : memref<2x8xi32, #tpu.memory_space<smem>>
    %1 = arith.index_cast %0 : i32 to index
    %c0_1 = arith.constant 0 : index
    %2 = vector.load %arg2[%1, %c0_1] : memref<100x32xf32, #tpu.memory_space<vmem>>, vector<1x32xf32>
    %c0_2 = arith.constant 0 : index
    %c1 = arith.constant 1 : index
    %3 = memref.load %arg0[%c0_2, %c1] : memref<2x8xi32, #tpu.memory_space<smem>>
    %4 = arith.index_cast %3 : i32 to index
    %c0_3 = arith.constant 0 : index
    %5 = vector.load %arg2[%4, %c0_3] : memref<100x32xf32, #tpu.memory_space<vmem>>, vector<1x32xf32>
    %c0_4 = arith.constant 0 : index
    %c2 = arith.constant 2 : index
    %6 = memref.load %arg0[%c0_4, %c2] : memref<2x8xi32, #tpu.memory_space<smem>>
    %7 = arith.index_cast %6 : i32 to index
    %c0_5 = arith.constant 0 : index
    %8 = vector.load %arg2[%7, %c0_5] : memref<100x32xf32, #tpu.memory_space<vmem>>, vector<1x32xf32>
    %c0_6 = arith.constant 0 : index
    %c3 = arith.constant 3 : index
    %9 = memref.load %arg0[%c0_6, %c3] : memref<2x8xi32, #tpu.memory_space<smem>>
    %10 = arith.index_cast %9 : i32 to index
    %c0_7 = arith.constant 0 : index
    %11 = vector.load %arg2[%10, %c0_7] : memref<100x32xf32, #tpu.memory_space<vmem>>, vector<1x32xf32>
    %c0_8 = arith.constant 0 : index
    %c4 = arith.constant 4 : index
    %12 = memref.load %arg0[%c0_8, %c4] : memref<2x8xi32, #tpu.memory_space<smem>>
    %13 = arith.index_cast %12 : i32 to index
    %c0_9 = arith.constant 0 : index
    %14 = vector.load %arg2[%13, %c0_9] : memref<100x32xf32, #tpu.memory_space<vmem>>, vector<1x32xf32>
    %c0_10 = arith.constant 0 : index
    %c5 = arith.constant 5 : index
    %15 = memref.load %arg0[%c0_10, %c5] : memref<2x8xi32, #tpu.memory_space<smem>>
    %16 = arith.index_cast %15 : i32 to index
    %c0_11 = arith.constant 0 : index
    %17 = vector.load %arg2[%16, %c0_11] : memref<100x32xf32, #tpu.memory_space<vmem>>, vector<1x32xf32>
    %c0_12 = arith.constant 0 : index
    %c6 = arith.constant 6 : index
    %18 = memref.load %arg0[%c0_12, %c6] : memref<2x8xi32, #tpu.memory_space<smem>>
    %19 = arith.index_cast %18 : i32 to index
    %c0_13 = arith.constant 0 : index
    %20 = vector.load %arg2[%19, %c0_13] : memref<100x32xf32, #tpu.memory_space<vmem>>, vector<1x32xf32>
    %c0_14 = arith.constant 0 : index
    %c7 = arith.constant 7 : index
    %21 = memref.load %arg0[%c0_14, %c7] : memref<2x8xi32, #tpu.memory_space<smem>>
    %22 = arith.index_cast %21 : i32 to index
    %c0_15 = arith.constant 0 : index
    %23 = vector.load %arg2[%22, %c0_15] : memref<100x32xf32, #tpu.memory_space<vmem>>, vector<1x32xf32>
    %c1_16 = arith.constant 1 : index
    %c0_17 = arith.constant 0 : index
    %24 = memref.load %arg0[%c1_16, %c0_17] : memref<2x8xi32, #tpu.memory_space<smem>>
    %25 = arith.index_cast %24 : i32 to index
    %c0_18 = arith.constant 0 : index
    %26 = vector.load %arg2[%25, %c0_18] : memref<100x32xf32, #tpu.memory_space<vmem>>, vector<1x32xf32>
    %c1_19 = arith.constant 1 : index
    %c1_20 = arith.constant 1 : index
    %27 = memref.load %arg0[%c1_19, %c1_20] : memref<2x8xi32, #tpu.memory_space<smem>>
    %28 = arith.index_cast %27 : i32 to index
    %c0_21 = arith.constant 0 : index
    %29 = vector.load %arg2[%28, %c0_21] : memref<100x32xf32, #tpu.memory_space<vmem>>, vector<1x32xf32>
    %c1_22 = arith.constant 1 : index
    %c2_23 = arith.constant 2 : index
    %30 = memref.load %arg0[%c1_22, %c2_23] : memref<2x8xi32, #tpu.memory_space<smem>>
    %31 = arith.index_cast %30 : i32 to index
    %c0_24 = arith.constant 0 : index
    %32 = vector.load %arg2[%31, %c0_24] : memref<100x32xf32, #tpu.memory_space<vmem>>, vector<1x32xf32>
    %c1_25 = arith.constant 1 : index
    %c3_26 = arith.constant 3 : index
    %33 = memref.load %arg0[%c1_25, %c3_26] : memref<2x8xi32, #tpu.memory_space<smem>>
    %34 = arith.index_cast %33 : i32 to index
    %c0_27 = arith.constant 0 : index
    %35 = vector.load %arg2[%34, %c0_27] : memref<100x32xf32, #tpu.memory_space<vmem>>, vector<1x32xf32>
    %c1_28 = arith.constant 1 : index
    %c4_29 = arith.constant 4 : index
    %36 = memref.load %arg0[%c1_28, %c4_29] : memref<2x8xi32, #tpu.memory_space<smem>>
    %37 = arith.index_cast %36 : i32 to index
    %c0_30 = arith.constant 0 : index
    %38 = vector.load %arg2[%37, %c0_30] : memref<100x32xf32, #tpu.memory_space<vmem>>, vector<1x32xf32>
    %c1_31 = arith.constant 1 : index
    %c5_32 = arith.constant 5 : index
    %39 = memref.load %arg0[%c1_31, %c5_32] : memref<2x8xi32, #tpu.memory_space<smem>>
    %40 = arith.index_cast %39 : i32 to index
    %c0_33 = arith.constant 0 : index
    %41 = vector.load %arg2[%40, %c0_33] : memref<100x32xf32, #tpu.memory_space<vmem>>, vector<1x32xf32>
    %c1_34 = arith.constant 1 : index
    %c6_35 = arith.constant 6 : index
    %42 = memref.load %arg0[%c1_34, %c6_35] : memref<2x8xi32, #tpu.memory_space<smem>>
    %43 = arith.index_cast %42 : i32 to index
    %c0_36 = arith.constant 0 : index
    %44 = vector.load %arg2[%43, %c0_36] : memref<100x32xf32, #tpu.memory_space<vmem>>, vector<1x32xf32>
    %c1_37 = arith.constant 1 : index
    %c7_38 = arith.constant 7 : index
    %45 = memref.load %arg0[%c1_37, %c7_38] : memref<2x8xi32, #tpu.memory_space<smem>>
    %46 = arith.index_cast %45 : i32 to index
    %c0_39 = arith.constant 0 : index
    %47 = vector.load %arg2[%46, %c0_39] : memref<100x32xf32, #tpu.memory_space<vmem>>, vector<1x32xf32>
    %48 = tpu.concatenate %2, %5, %8, %11, %14, %17, %20, %23, %26, %29, %32, %35, %38, %41, %44, %47 in 0 : vector<1x32xf32>, vector<1x32xf32>, vector<1x32xf32>, vector<1x32xf32>, vector<1x32xf32>, vector<1x32xf32>, vector<1x32xf32>, vector<1x32xf32>, vector<1x32xf32>, vector<1x32xf32>, vector<1x32xf32>, vector<1x32xf32>, vector<1x32xf32>, vector<1x32xf32>, vector<1x32xf32>, vector<1x32xf32> -> vector<16x32xf32>
    %c0_40 = arith.constant 0 : index
    %c0_41 = arith.constant 0 : index
    %49 = vector.load %arg3[%c0_40, %c0_41] : memref<16x32xf32, #tpu.memory_space<vmem>>, vector<8x32xf32>
    %50 = tpu.concatenate %49, %49 in 0 : vector<8x32xf32>, vector<8x32xf32> -> vector<16x32xf32>
    %51 = arith.addf %48, %50 : vector<16x32xf32>
    %c0_42 = arith.constant 0 : index
    %c0_43 = arith.constant 0 : index
    %52 = vector.load %arg4[%c0_42, %c0_43] : memref<2x32xf32, #tpu.memory_space<vmem>>, vector<1x32xf32>
    %53 = vector.broadcast %52 : vector<1x32xf32> to vector<16x32xf32>
    %54 = arith.addf %51, %53 : vector<16x32xf32>
    %c0_44 = arith.constant 0 : index
    %c0_45 = arith.constant 0 : index
    %55 = vector.load %arg5[%c0_44, %c0_45] : memref<1x32xf32, #tpu.memory_space<vmem>>, vector<1x32xf32>
    %c0_46 = arith.constant 0 : index
    %c0_47 = arith.constant 0 : index
    %56 = vector.load %arg6[%c0_46, %c0_47] : memref<1x32xf32, #tpu.memory_space<vmem>>, vector<1x32xf32>
    %cst = arith.constant dense<0.000000e+00> : vector<16xf32>
    %57 = vector.multi_reduction <add>, %54, %cst [1] : vector<16x32xf32> to vector<16xf32>
    %58 = vector.shape_cast %57 : vector<16xf32> to vector<16x1xf32>
    %cst_48 = arith.constant 3.200000e+01 : f32
    %59 = vector.broadcast %cst_48 : f32 to vector<16x1xf32>
    %60 = arith.divf %58, %59 : vector<16x1xf32>
    %61 = vector.broadcast %60 : vector<16x1xf32> to vector<16x32xf32>
    %62 = arith.subf %54, %61 : vector<16x32xf32>
    %63 = arith.mulf %62, %62 : vector<16x32xf32>
    %cst_49 = arith.constant dense<0.000000e+00> : vector<16xf32>
    %64 = vector.multi_reduction <add>, %63, %cst_49 [1] : vector<16x32xf32> to vector<16xf32>
    %65 = vector.shape_cast %64 : vector<16xf32> to vector<16x1xf32>
    %cst_50 = arith.constant 3.200000e+01 : f32
    %66 = vector.broadcast %cst_50 : f32 to vector<16x1xf32>
    %67 = arith.divf %65, %66 : vector<16x1xf32>
    %cst_51 = arith.constant 9.99999996E-13 : f32
    %68 = vector.broadcast %cst_51 : f32 to vector<16x1xf32>
    %69 = arith.addf %67, %68 : vector<16x1xf32>
    %70 = math.rsqrt %69 : vector<16x1xf32>
    %71 = vector.broadcast %70 : vector<16x1xf32> to vector<16x32xf32>
    %72 = arith.mulf %62, %71 : vector<16x32xf32>
    %73 = vector.broadcast %55 : vector<1x32xf32> to vector<16x32xf32>
    %74 = arith.mulf %72, %73 : vector<16x32xf32>
    %75 = vector.broadcast %56 : vector<1x32xf32> to vector<16x32xf32>
    %76 = arith.addf %74, %75 : vector<16x32xf32>
    %c0_52 = arith.constant 0 : index
    %c0_53 = arith.constant 0 : index
    %77 = vector.load %arg1[%c0_52, %c0_53] : memref<2x8xi32, #tpu.memory_space<vmem>>, vector<2x8xi32>
    %78 = arith.sitofp %77 : vector<2x8xi32> to vector<2x8xf32>
    %cst_54 = arith.constant 1.000000e+00 : f32
    %79 = vector.broadcast %cst_54 : f32 to vector<2x8xf32>
    %80 = arith.subf %79, %78 : vector<2x8xf32>
    %cst_55 = arith.constant -1.000000e+04 : f32
    %81 = vector.broadcast %cst_55 : f32 to vector<2x8xf32>
    %82 = arith.mulf %80, %81 : vector<2x8xf32>
    %83 = vector.shape_cast %82 : vector<2x8xf32> to vector<2x1x8xf32>
    %84 = tpu.concatenate %83, %83, %83, %83 in 0 : vector<2x1x8xf32>, vector<2x1x8xf32>, vector<2x1x8xf32>, vector<2x1x8xf32> -> vector<8x1x8xf32>
    %c0_56 = arith.constant 0 : index
    %c0_57 = arith.constant 0 : index
    %c0_58 = arith.constant 0 : index
    %85 = vector.load %arg7[%c0_56, %c0_57, %c0_58] : memref<2x32x96xf32, #tpu.memory_space<vmem>>, vector<1x32x96xf32>
    %86 = vector.shape_cast %85 : vector<1x32x96xf32> to vector<32x96xf32>
    %cst_59 = arith.constant dense<0.000000e+00> : vector<16x96xf32>
    %87 = tpu.matmul %76, %86, %cst_59 {dimension_numbers = #tpu.dot_dimension_numbers<[1], [0], [0], [1], [0, 0, 1, 1], [], []>} : vector<16x32xf32>, vector<32x96xf32>, vector<16x96xf32> -> vector<16x96xf32>
    %c0_60 = arith.constant 0 : index
    %c0_61 = arith.constant 0 : index
    %c0_62 = arith.constant 0 : index
    %88 = vector.load %arg8[%c0_60, %c0_61, %c0_62] : memref<2x1x96xf32, #tpu.memory_space<vmem>>, vector<1x1x96xf32>
    %89 = vector.shape_cast %88 : vector<1x1x96xf32> to vector<1x96xf32>
    %90 = vector.broadcast %89 : vector<1x96xf32> to vector<16x96xf32>
    %91 = arith.addf %87, %90 : vector<16x96xf32>
    %92 = vector.extract_strided_slice %91 {offsets = [0, 0], sizes = [16, 32], strides = [1, 1]} : vector<16x96xf32> to vector<16x32xf32>
    %93 = vector.shape_cast %92 : vector<16x32xf32> to vector<2x8x32xf32>
    %94 = vector.extract_strided_slice %91 {offsets = [0, 32], sizes = [16, 32], strides = [1, 1]} : vector<16x96xf32> to vector<16x32xf32>
    %95 = vector.shape_cast %94 : vector<16x32xf32> to vector<2x8x32xf32>
    %96 = vector.extract_strided_slice %91 {offsets = [0, 64], sizes = [16, 32], strides = [1, 1]} : vector<16x96xf32> to vector<16x32xf32>
    %97 = vector.shape_cast %96 : vector<16x32xf32> to vector<2x8x32xf32>
    %98 = vector.extract_strided_slice %93 {offsets = [0, 0, 0], sizes = [2, 8, 8], strides = [1, 1, 1]} : vector<2x8x32xf32> to vector<2x8x8xf32>
    %99 = vector.extract_strided_slice %93 {offsets = [0, 0, 8], sizes = [2, 8, 8], strides = [1, 1, 1]} : vector<2x8x32xf32> to vector<2x8x8xf32>
    %100 = vector.extract_strided_slice %93 {offsets = [0, 0, 16], sizes = [2, 8, 8], strides = [1, 1, 1]} : vector<2x8x32xf32> to vector<2x8x8xf32>
    %101 = vector.extract_strided_slice %93 {offsets = [0, 0, 24], sizes = [2, 8, 8], strides = [1, 1, 1]} : vector<2x8x32xf32> to vector<2x8x8xf32>
    %102 = tpu.concatenate %98, %99, %100, %101 in 0 : vector<2x8x8xf32>, vector<2x8x8xf32>, vector<2x8x8xf32>, vector<2x8x8xf32> -> vector<8x8x8xf32>
    %103 = vector.extract_strided_slice %95 {offsets = [0, 0, 0], sizes = [2, 8, 8], strides = [1, 1, 1]} : vector<2x8x32xf32> to vector<2x8x8xf32>
    %104 = vector.extract_strided_slice %95 {offsets = [0, 0, 8], sizes = [2, 8, 8], strides = [1, 1, 1]} : vector<2x8x32xf32> to vector<2x8x8xf32>
    %105 = vector.extract_strided_slice %95 {offsets = [0, 0, 16], sizes = [2, 8, 8], strides = [1, 1, 1]} : vector<2x8x32xf32> to vector<2x8x8xf32>
    %106 = vector.extract_strided_slice %95 {offsets = [0, 0, 24], sizes = [2, 8, 8], strides = [1, 1, 1]} : vector<2x8x32xf32> to vector<2x8x8xf32>
    %107 = tpu.concatenate %103, %104, %105, %106 in 0 : vector<2x8x8xf32>, vector<2x8x8xf32>, vector<2x8x8xf32>, vector<2x8x8xf32> -> vector<8x8x8xf32>
    %108 = vector.extract_strided_slice %97 {offsets = [0, 0, 0], sizes = [2, 8, 8], strides = [1, 1, 1]} : vector<2x8x32xf32> to vector<2x8x8xf32>
    %109 = vector.extract_strided_slice %97 {offsets = [0, 0, 8], sizes = [2, 8, 8], strides = [1, 1, 1]} : vector<2x8x32xf32> to vector<2x8x8xf32>
    %110 = vector.extract_strided_slice %97 {offsets = [0, 0, 16], sizes = [2, 8, 8], strides = [1, 1, 1]} : vector<2x8x32xf32> to vector<2x8x8xf32>
    %111 = vector.extract_strided_slice %97 {offsets = [0, 0, 24], sizes = [2, 8, 8], strides = [1, 1, 1]} : vector<2x8x32xf32> to vector<2x8x8xf32>
    %112 = tpu.concatenate %108, %109, %110, %111 in 0 : vector<2x8x8xf32>, vector<2x8x8xf32>, vector<2x8x8xf32>, vector<2x8x8xf32> -> vector<8x8x8xf32>
    "tpu.trace_start"() <{level = 10 : i32, message = "bqd,bkd->bqk"}> : () -> ()
    %cst_63 = arith.constant dense<0.000000e+00> : vector<8x8x8xf32>
    %113 = tpu.matmul %102, %107, %cst_63 {dimension_numbers = #tpu.dot_dimension_numbers<[2], [2], [1], [1], [0, 0, 0, 1, 1, 1], [0], [0]>} : vector<8x8x8xf32>, vector<8x8x8xf32>, vector<8x8x8xf32> -> vector<8x8x8xf32>
    "tpu.trace_stop"() : () -> ()
    %cst_64 = arith.constant 0.353553385 : f32
    %114 = vector.broadcast %cst_64 : f32 to vector<8x8x8xf32>
    %115 = arith.mulf %113, %114 : vector<8x8x8xf32>
    %116 = vector.broadcast %84 : vector<8x1x8xf32> to vector<8x8x8xf32>
    %117 = arith.addf %115, %116 : vector<8x8x8xf32>
    %cst_65 = arith.constant dense<0xFF800000> : vector<8x8xf32>
    %118 = vector.multi_reduction <maximumf>, %117, %cst_65 [2] : vector<8x8x8xf32> to vector<8x8xf32>
    %119 = vector.shape_cast %118 : vector<8x8xf32> to vector<8x8x1xf32>
    %120 = vector.broadcast %119 : vector<8x8x1xf32> to vector<8x8x8xf32>
    %121 = arith.subf %117, %120 : vector<8x8x8xf32>
    %122 = math.exp %121 : vector<8x8x8xf32>
    %cst_66 = arith.constant dense<0.000000e+00> : vector<8x8xf32>
    %123 = vector.multi_reduction <add>, %122, %cst_66 [2] : vector<8x8x8xf32> to vector<8x8xf32>
    %124 = vector.shape_cast %123 : vector<8x8xf32> to vector<8x8x1xf32>
    %125 = tpu.reciprocal %124 {approx = true} : vector<8x8x1xf32> -> vector<8x8x1xf32>
    %126 = vector.broadcast %125 : vector<8x8x1xf32> to vector<8x8x8xf32>
    %127 = arith.mulf %122, %126 : vector<8x8x8xf32>
    "tpu.trace_start"() <{level = 10 : i32, message = "bqk,bkd->bqd"}> : () -> ()
    %cst_67 = arith.constant dense<0.000000e+00> : vector<8x8x8xf32>
    %128 = tpu.matmul %127, %112, %cst_67 {dimension_numbers = #tpu.dot_dimension_numbers<[2], [1], [1], [2], [0, 0, 0, 1, 1, 2], [0], [0]>} : vector<8x8x8xf32>, vector<8x8x8xf32>, vector<8x8x8xf32> -> vector<8x8x8xf32>
    "tpu.trace_stop"() : () -> ()
    %129 = vector.extract_strided_slice %128 {offsets = [0, 0, 0], sizes = [2, 8, 8], strides = [1, 1, 1]} : vector<8x8x8xf32> to vector<2x8x8xf32>
    %130 = vector.extract_strided_slice %128 {offsets = [2, 0, 0], sizes = [2, 8, 8], strides = [1, 1, 1]} : vector<8x8x8xf32> to vector<2x8x8xf32>
    %131 = vector.extract_strided_slice %128 {offsets = [4, 0, 0], sizes = [2, 8, 8], strides = [1, 1, 1]} : vector<8x8x8xf32> to vector<2x8x8xf32>
    %132 = vector.extract_strided_slice %128 {offsets = [6, 0, 0], sizes = [2, 8, 8], strides = [1, 1, 1]} : vector<8x8x8xf32> to vector<2x8x8xf32>
    %133 = tpu.concatenate %129, %130, %131, %132 in 2 : vector<2x8x8xf32>, vector<2x8x8xf32>, vector<2x8x8xf32>, vector<2x8x8xf32> -> vector<2x8x32xf32>
    %134 = vector.shape_cast %133 : vector<2x8x32xf32> to vector<16x32xf32>
    %c0_68 = arith.constant 0 : index
    %c0_69 = arith.constant 0 : index
    %c0_70 = arith.constant 0 : index
    %135 = vector.load %arg9[%c0_68, %c0_69, %c0_70] : memref<2x32x32xf32, #tpu.memory_space<vmem>>, vector<1x32x32xf32>
    %136 = vector.shape_cast %135 : vector<1x32x32xf32> to vector<32x32xf32>
    %cst_71 = arith.constant dense<0.000000e+00> : vector<16x32xf32>
    %137 = tpu.matmul %134, %136, %cst_71 {dimension_numbers = #tpu.dot_dimension_numbers<[1], [0], [0], [1], [0, 0, 1, 1], [], []>} : vector<16x32xf32>, vector<32x32xf32>, vector<16x32xf32> -> vector<16x32xf32>
    %c0_72 = arith.constant 0 : index
    %c0_73 = arith.constant 0 : index
    %c0_74 = arith.constant 0 : index
    %138 = vector.load %arg10[%c0_72, %c0_73, %c0_74] : memref<2x1x32xf32, #tpu.memory_space<vmem>>, vector<1x1x32xf32>
    %139 = vector.shape_cast %138 : vector<1x1x32xf32> to vector<1x32xf32>
    %140 = vector.broadcast %139 : vector<1x32xf32> to vector<16x32xf32>
    %141 = arith.addf %137, %140 : vector<16x32xf32>
    %142 = arith.addf %141, %76 : vector<16x32xf32>
    %c0_75 = arith.constant 0 : index
    %c0_76 = arith.constant 0 : index
    %c0_77 = arith.constant 0 : index
    %143 = vector.load %arg11[%c0_75, %c0_76, %c0_77] : memref<2x1x32xf32, #tpu.memory_space<vmem>>, vector<1x1x32xf32>
    %144 = vector.shape_cast %143 : vector<1x1x32xf32> to vector<1x32xf32>
    %c0_78 = arith.constant 0 : index
    %c0_79 = arith.constant 0 : index
    %c0_80 = arith.constant 0 : index
    %145 = vector.load %arg12[%c0_78, %c0_79, %c0_80] : memref<2x1x32xf32, #tpu.memory_space<vmem>>, vector<1x1x32xf32>
    %146 = vector.shape_cast %145 : vector<1x1x32xf32> to vector<1x32xf32>
    %cst_81 = arith.constant dense<0.000000e+00> : vector<16xf32>
    %147 = vector.multi_reduction <add>, %142, %cst_81 [1] : vector<16x32xf32> to vector<16xf32>
    %148 = vector.shape_cast %147 : vector<16xf32> to vector<16x1xf32>
    %cst_82 = arith.constant 3.200000e+01 : f32
    %149 = vector.broadcast %cst_82 : f32 to vector<16x1xf32>
    %150 = arith.divf %148, %149 : vector<16x1xf32>
    %151 = vector.broadcast %150 : vector<16x1xf32> to vector<16x32xf32>
    %152 = arith.subf %142, %151 : vector<16x32xf32>
    %153 = arith.mulf %152, %152 : vector<16x32xf32>
    %cst_83 = arith.constant dense<0.000000e+00> : vector<16xf32>
    %154 = vector.multi_reduction <add>, %153, %cst_83 [1] : vector<16x32xf32> to vector<16xf32>
    %155 = vector.shape_cast %154 : vector<16xf32> to vector<16x1xf32>
    %cst_84 = arith.constant 3.200000e+01 : f32
    %156 = vector.broadcast %cst_84 : f32 to vector<16x1xf32>
    %157 = arith.divf %155, %156 : vector<16x1xf32>
    %cst_85 = arith.constant 9.99999996E-13 : f32
    %158 = vector.broadcast %cst_85 : f32 to vector<16x1xf32>
    %159 = arith.addf %157, %158 : vector<16x1xf32>
    %160 = math.rsqrt %159 : vector<16x1xf32>
    %161 = vector.broadcast %160 : vector<16x1xf32> to vector<16x32xf32>
    %162 = arith.mulf %152, %161 : vector<16x32xf32>
    %163 = vector.broadcast %144 : vector<1x32xf32> to vector<16x32xf32>
    %164 = arith.mulf %162, %163 : vector<16x32xf32>
    %165 = vector.broadcast %146 : vector<1x32xf32> to vector<16x32xf32>
    %166 = arith.addf %164, %165 : vector<16x32xf32>
    %c0_86 = arith.constant 0 : index
    %c0_87 = arith.constant 0 : index
    %c0_88 = arith.constant 0 : index
    %167 = vector.load %arg13[%c0_86, %c0_87, %c0_88] : memref<2x32x64xf32, #tpu.memory_space<vmem>>, vector<1x32x64xf32>
    %168 = vector.shape_cast %167 : vector<1x32x64xf32> to vector<32x64xf32>
    %cst_89 = arith.constant dense<0.000000e+00> : vector<16x64xf32>
    %169 = tpu.matmul %166, %168, %cst_89 {dimension_numbers = #tpu.dot_dimension_numbers<[1], [0], [0], [1], [0, 0, 1, 1], [], []>} : vector<16x32xf32>, vector<32x64xf32>, vector<16x64xf32> -> vector<16x64xf32>
    %c0_90 = arith.constant 0 : index
    %c0_91 = arith.constant 0 : index
    %c0_92 = arith.constant 0 : index
    %170 = vector.load %arg14[%c0_90, %c0_91, %c0_92] : memref<2x1x64xf32, #tpu.memory_space<vmem>>, vector<1x1x64xf32>
    %171 = vector.shape_cast %170 : vector<1x1x64xf32> to vector<1x64xf32>
    %172 = vector.broadcast %171 : vector<1x64xf32> to vector<16x64xf32>
    %173 = arith.addf %169, %172 : vector<16x64xf32>
    %cst_93 = arith.constant 5.000000e-01 : f32
    %174 = vector.broadcast %cst_93 : f32 to vector<16x64xf32>
    %175 = arith.mulf %174, %173 : vector<16x64xf32>
    %cst_94 = arith.constant 4.471500e-02 : f32
    %176 = vector.broadcast %cst_94 : f32 to vector<16x64xf32>
    %177 = arith.mulf %176, %173 : vector<16x64xf32>
    %178 = arith.mulf %177, %173 : vector<16x64xf32>
    %179 = arith.mulf %178, %173 : vector<16x64xf32>
    %180 = arith.addf %173, %179 : vector<16x64xf32>
    %cst_95 = arith.constant 0.797884583 : f32
    %181 = vector.broadcast %cst_95 : f32 to vector<16x64xf32>
    %182 = arith.mulf %181, %180 : vector<16x64xf32>
    %183 = math.tanh %182 : vector<16x64xf32>
    %cst_96 = arith.constant 1.000000e+00 : f32
    %184 = vector.broadcast %cst_96 : f32 to vector<16x64xf32>
    %185 = arith.addf %184, %183 : vector<16x64xf32>
    %186 = arith.mulf %175, %185 : vector<16x64xf32>
    %c0_97 = arith.constant 0 : index
    %c0_98 = arith.constant 0 : index
    %c0_99 = arith.constant 0 : index
    %187 = vector.load %arg15[%c0_97, %c0_98, %c0_99] : memref<2x64x32xf32, #tpu.memory_space<vmem>>, vector<1x64x32xf32>
    %188 = vector.shape_cast %187 : vector<1x64x32xf32> to vector<64x32xf32>
    %cst_100 = arith.constant dense<0.000000e+00> : vector<16x32xf32>
    %189 = tpu.matmul %186, %188, %cst_100 {dimension_numbers = #tpu.dot_dimension_numbers<[1], [0], [0], [1], [0, 0, 1, 1], [], []>} : vector<16x64xf32>, vector<64x32xf32>, vector<16x32xf32> -> vector<16x32xf32>
    %c0_101 = arith.constant 0 : index
    %c0_102 = arith.constant 0 : index
    %c0_103 = arith.constant 0 : index
    %190 = vector.load %arg16[%c0_101, %c0_102, %c0_103] : memref<2x1x32xf32, #tpu.memory_space<vmem>>, vector<1x1x32xf32>
    %191 = vector.shape_cast %190 : vector<1x1x32xf32> to vector<1x32xf32>
    %192 = vector.broadcast %191 : vector<1x32xf32> to vector<16x32xf32>
    %193 = arith.addf %189, %192 : vector<16x32xf32>
    %194 = arith.addf %193, %166 : vector<16x32xf32>
    %c0_104 = arith.constant 0 : index
    %c0_105 = arith.constant 0 : index
    %c0_106 = arith.constant 0 : index
    %195 = vector.load %arg17[%c0_104, %c0_105, %c0_106] : memref<2x1x32xf32, #tpu.memory_space<vmem>>, vector<1x1x32xf32>
    %196 = vector.shape_cast %195 : vector<1x1x32xf32> to vector<1x32xf32>
    %c0_107 = arith.constant 0 : index
    %c0_108 = arith.constant 0 : index
    %c0_109 = arith.constant 0 : index
    %197 = vector.load %arg18[%c0_107, %c0_108, %c0_109] : memref<2x1x32xf32, #tpu.memory_space<vmem>>, vector<1x1x32xf32>
    %198 = vector.shape_cast %197 : vector<1x1x32xf32> to vector<1x32xf32>
    %cst_110 = arith.constant dense<0.000000e+00> : vector<16xf32>
    %199 = vector.multi_reduction <add>, %194, %cst_110 [1] : vector<16x32xf32> to vector<16xf32>
    %200 = vector.shape_cast %199 : vector<16xf32> to vector<16x1xf32>
    %cst_111 = arith.constant 3.200000e+01 : f32
    %201 = vector.broadcast %cst_111 : f32 to vector<16x1xf32>
    %202 = arith.divf %200, %201 : vector<16x1xf32>
    %203 = vector.broadcast %202 : vector<16x1xf32> to vector<16x32xf32>
    %204 = arith.subf %194, %203 : vector<16x32xf32>
    %205 = arith.mulf %204, %204 : vector<16x32xf32>
    %cst_112 = arith.constant dense<0.000000e+00> : vector<16xf32>
    %206 = vector.multi_reduction <add>, %205, %cst_112 [1] : vector<16x32xf32> to vector<16xf32>
    %207 = vector.shape_cast %206 : vector<16xf32> to vector<16x1xf32>
    %cst_113 = arith.constant 3.200000e+01 : f32
    %208 = vector.broadcast %cst_113 : f32 to vector<16x1xf32>
    %209 = arith.divf %207, %208 : vector<16x1xf32>
    %cst_114 = arith.constant 9.99999996E-13 : f32
    %210 = vector.broadcast %cst_114 : f32 to vector<16x1xf32>
    %211 = arith.addf %209, %210 : vector<16x1xf32>
    %212 = math.rsqrt %211 : vector<16x1xf32>
    %213 = vector.broadcast %212 : vector<16x1xf32> to vector<16x32xf32>
    %214 = arith.mulf %204, %213 : vector<16x32xf32>
    %215 = vector.broadcast %196 : vector<1x32xf32> to vector<16x32xf32>
    %216 = arith.mulf %214, %215 : vector<16x32xf32>
    %217 = vector.broadcast %198 : vector<1x32xf32> to vector<16x32xf32>
    %218 = arith.addf %216, %217 : vector<16x32xf32>
    %c1_115 = arith.constant 1 : index
    %c0_116 = arith.constant 0 : index
    %c0_117 = arith.constant 0 : index
    %219 = vector.load %arg7[%c1_115, %c0_116, %c0_117] : memref<2x32x96xf32, #tpu.memory_space<vmem>>, vector<1x32x96xf32>
    %220 = vector.shape_cast %219 : vector<1x32x96xf32> to vector<32x96xf32>
    %cst_118 = arith.constant dense<0.000000e+00> : vector<16x96xf32>
    %221 = tpu.matmul %218, %220, %cst_118 {dimension_numbers = #tpu.dot_dimension_numbers<[1], [0], [0], [1], [0, 0, 1, 1], [], []>} : vector<16x32xf32>, vector<32x96xf32>, vector<16x96xf32> -> vector<16x96xf32>
    %c1_119 = arith.constant 1 : index
    %c0_120 = arith.constant 0 : index
    %c0_121 = arith.constant 0 : index
    %222 = vector.load %arg8[%c1_119, %c0_120, %c0_121] : memref<2x1x96xf32, #tpu.memory_space<vmem>>, vector<1x1x96xf32>
    %223 = vector.shape_cast %222 : vector<1x1x96xf32> to vector<1x96xf32>
    %224 = vector.broadcast %223 : vector<1x96xf32> to vector<16x96xf32>
    %225 = arith.addf %221, %224 : vector<16x96xf32>
    %226 = vector.extract_strided_slice %225 {offsets = [0, 0], sizes = [16, 32], strides = [1, 1]} : vector<16x96xf32> to vector<16x32xf32>
    %227 = vector.shape_cast %226 : vector<16x32xf32> to vector<2x8x32xf32>
    %228 = vector.extract_strided_slice %225 {offsets = [0, 32], sizes = [16, 32], strides = [1, 1]} : vector<16x96xf32> to vector<16x32xf32>
    %229 = vector.shape_cast %228 : vector<16x32xf32> to vector<2x8x32xf32>
    %230 = vector.extract_strided_slice %225 {offsets = [0, 64], sizes = [16, 32], strides = [1, 1]} : vector<16x96xf32> to vector<16x32xf32>
    %231 = vector.shape_cast %230 : vector<16x32xf32> to vector<2x8x32xf32>
    %232 = vector.extract_strided_slice %227 {offsets = [0, 0, 0], sizes = [2, 8, 8], strides = [1, 1, 1]} : vector<2x8x32xf32> to vector<2x8x8xf32>
    %233 = vector.extract_strided_slice %227 {offsets = [0, 0, 8], sizes = [2, 8, 8], strides = [1, 1, 1]} : vector<2x8x32xf32> to vector<2x8x8xf32>
    %234 = vector.extract_strided_slice %227 {offsets = [0, 0, 16], sizes = [2, 8, 8], strides = [1, 1, 1]} : vector<2x8x32xf32> to vector<2x8x8xf32>
    %235 = vector.extract_strided_slice %227 {offsets = [0, 0, 24], sizes = [2, 8, 8], strides = [1, 1, 1]} : vector<2x8x32xf32> to vector<2x8x8xf32>
    %236 = tpu.concatenate %232, %233, %234, %235 in 0 : vector<2x8x8xf32>, vector<2x8x8xf32>, vector<2x8x8xf32>, vector<2x8x8xf32> -> vector<8x8x8xf32>
    %237 = vector.extract_strided_slice %229 {offsets = [0, 0, 0], sizes = [2, 8, 8], strides = [1, 1, 1]} : vector<2x8x32xf32> to vector<2x8x8xf32>
    %238 = vector.extract_strided_slice %229 {offsets = [0, 0, 8], sizes = [2, 8, 8], strides = [1, 1, 1]} : vector<2x8x32xf32> to vector<2x8x8xf32>
    %239 = vector.extract_strided_slice %229 {offsets = [0, 0, 16], sizes = [2, 8, 8], strides = [1, 1, 1]} : vector<2x8x32xf32> to vector<2x8x8xf32>
    %240 = vector.extract_strided_slice %229 {offsets = [0, 0, 24], sizes = [2, 8, 8], strides = [1, 1, 1]} : vector<2x8x32xf32> to vector<2x8x8xf32>
    %241 = tpu.concatenate %237, %238, %239, %240 in 0 : vector<2x8x8xf32>, vector<2x8x8xf32>, vector<2x8x8xf32>, vector<2x8x8xf32> -> vector<8x8x8xf32>
    %242 = vector.extract_strided_slice %231 {offsets = [0, 0, 0], sizes = [2, 8, 8], strides = [1, 1, 1]} : vector<2x8x32xf32> to vector<2x8x8xf32>
    %243 = vector.extract_strided_slice %231 {offsets = [0, 0, 8], sizes = [2, 8, 8], strides = [1, 1, 1]} : vector<2x8x32xf32> to vector<2x8x8xf32>
    %244 = vector.extract_strided_slice %231 {offsets = [0, 0, 16], sizes = [2, 8, 8], strides = [1, 1, 1]} : vector<2x8x32xf32> to vector<2x8x8xf32>
    %245 = vector.extract_strided_slice %231 {offsets = [0, 0, 24], sizes = [2, 8, 8], strides = [1, 1, 1]} : vector<2x8x32xf32> to vector<2x8x8xf32>
    %246 = tpu.concatenate %242, %243, %244, %245 in 0 : vector<2x8x8xf32>, vector<2x8x8xf32>, vector<2x8x8xf32>, vector<2x8x8xf32> -> vector<8x8x8xf32>
    "tpu.trace_start"() <{level = 10 : i32, message = "bqd,bkd->bqk"}> : () -> ()
    %cst_122 = arith.constant dense<0.000000e+00> : vector<8x8x8xf32>
    %247 = tpu.matmul %236, %241, %cst_122 {dimension_numbers = #tpu.dot_dimension_numbers<[2], [2], [1], [1], [0, 0, 0, 1, 1, 1], [0], [0]>} : vector<8x8x8xf32>, vector<8x8x8xf32>, vector<8x8x8xf32> -> vector<8x8x8xf32>
    "tpu.trace_stop"() : () -> ()
    %cst_123 = arith.constant 0.353553385 : f32
    %248 = vector.broadcast %cst_123 : f32 to vector<8x8x8xf32>
    %249 = arith.mulf %247, %248 : vector<8x8x8xf32>
    %250 = vector.broadcast %84 : vector<8x1x8xf32> to vector<8x8x8xf32>
    %251 = arith.addf %249, %250 : vector<8x8x8xf32>
    %cst_124 = arith.constant dense<0xFF800000> : vector<8x8xf32>
    %252 = vector.multi_reduction <maximumf>, %251, %cst_124 [2] : vector<8x8x8xf32> to vector<8x8xf32>
    %253 = vector.shape_cast %252 : vector<8x8xf32> to vector<8x8x1xf32>
    %254 = vector.broadcast %253 : vector<8x8x1xf32> to vector<8x8x8xf32>
    %255 = arith.subf %251, %254 : vector<8x8x8xf32>
    %256 = math.exp %255 : vector<8x8x8xf32>
    %cst_125 = arith.constant dense<0.000000e+00> : vector<8x8xf32>
    %257 = vector.multi_reduction <add>, %256, %cst_125 [2] : vector<8x8x8xf32> to vector<8x8xf32>
    %258 = vector.shape_cast %257 : vector<8x8xf32> to vector<8x8x1xf32>
    %259 = tpu.reciprocal %258 {approx = true} : vector<8x8x1xf32> -> vector<8x8x1xf32>
    %260 = vector.broadcast %259 : vector<8x8x1xf32> to vector<8x8x8xf32>
    %261 = arith.mulf %256, %260 : vector<8x8x8xf32>
    "tpu.trace_start"() <{level = 10 : i32, message = "bqk,bkd->bqd"}> : () -> ()
    %cst_126 = arith.constant dense<0.000000e+00> : vector<8x8x8xf32>
    %262 = tpu.matmul %261, %246, %cst_126 {dimension_numbers = #tpu.dot_dimension_numbers<[2], [1], [1], [2], [0, 0, 0, 1, 1, 2], [0], [0]>} : vector<8x8x8xf32>, vector<8x8x8xf32>, vector<8x8x8xf32> -> vector<8x8x8xf32>
    "tpu.trace_stop"() : () -> ()
    %263 = vector.extract_strided_slice %262 {offsets = [0, 0, 0], sizes = [2, 8, 8], strides = [1, 1, 1]} : vector<8x8x8xf32> to vector<2x8x8xf32>
    %264 = vector.extract_strided_slice %262 {offsets = [2, 0, 0], sizes = [2, 8, 8], strides = [1, 1, 1]} : vector<8x8x8xf32> to vector<2x8x8xf32>
    %265 = vector.extract_strided_slice %262 {offsets = [4, 0, 0], sizes = [2, 8, 8], strides = [1, 1, 1]} : vector<8x8x8xf32> to vector<2x8x8xf32>
    %266 = vector.extract_strided_slice %262 {offsets = [6, 0, 0], sizes = [2, 8, 8], strides = [1, 1, 1]} : vector<8x8x8xf32> to vector<2x8x8xf32>
    %267 = tpu.concatenate %263, %264, %265, %266 in 2 : vector<2x8x8xf32>, vector<2x8x8xf32>, vector<2x8x8xf32>, vector<2x8x8xf32> -> vector<2x8x32xf32>
    %268 = vector.shape_cast %267 : vector<2x8x32xf32> to vector<16x32xf32>
    %c1_127 = arith.constant 1 : index
    %c0_128 = arith.constant 0 : index
    %c0_129 = arith.constant 0 : index
    %269 = vector.load %arg9[%c1_127, %c0_128, %c0_129] : memref<2x32x32xf32, #tpu.memory_space<vmem>>, vector<1x32x32xf32>
    %270 = vector.shape_cast %269 : vector<1x32x32xf32> to vector<32x32xf32>
    %cst_130 = arith.constant dense<0.000000e+00> : vector<16x32xf32>
    %271 = tpu.matmul %268, %270, %cst_130 {dimension_numbers = #tpu.dot_dimension_numbers<[1], [0], [0], [1], [0, 0, 1, 1], [], []>} : vector<16x32xf32>, vector<32x32xf32>, vector<16x32xf32> -> vector<16x32xf32>
    %c1_131 = arith.constant 1 : index
    %c0_132 = arith.constant 0 : index
    %c0_133 = arith.constant 0 : index
    %272 = vector.load %arg10[%c1_131, %c0_132, %c0_133] : memref<2x1x32xf32, #tpu.memory_space<vmem>>, vector<1x1x32xf32>
    %273 = vector.shape_cast %272 : vector<1x1x32xf32> to vector<1x32xf32>
    %274 = vector.broadcast %273 : vector<1x32xf32> to vector<16x32xf32>
    %275 = arith.addf %271, %274 : vector<16x32xf32>
    %276 = arith.addf %275, %218 : vector<16x32xf32>
    %c1_134 = arith.constant 1 : index
    %c0_135 = arith.constant 0 : index
    %c0_136 = arith.constant 0 : index
    %277 = vector.load %arg11[%c1_134, %c0_135, %c0_136] : memref<2x1x32xf32, #tpu.memory_space<vmem>>, vector<1x1x32xf32>
    %278 = vector.shape_cast %277 : vector<1x1x32xf32> to vector<1x32xf32>
    %c1_137 = arith.constant 1 : index
    %c0_138 = arith.constant 0 : index
    %c0_139 = arith.constant 0 : index
    %279 = vector.load %arg12[%c1_137, %c0_138, %c0_139] : memref<2x1x32xf32, #tpu.memory_space<vmem>>, vector<1x1x32xf32>
    %280 = vector.shape_cast %279 : vector<1x1x32xf32> to vector<1x32xf32>
    %cst_140 = arith.constant dense<0.000000e+00> : vector<16xf32>
    %281 = vector.multi_reduction <add>, %276, %cst_140 [1] : vector<16x32xf32> to vector<16xf32>
    %282 = vector.shape_cast %281 : vector<16xf32> to vector<16x1xf32>
    %cst_141 = arith.constant 3.200000e+01 : f32
    %283 = vector.broadcast %cst_141 : f32 to vector<16x1xf32>
    %284 = arith.divf %282, %283 : vector<16x1xf32>
    %285 = vector.broadcast %284 : vector<16x1xf32> to vector<16x32xf32>
    %286 = arith.subf %276, %285 : vector<16x32xf32>
    %287 = arith.mulf %286, %286 : vector<16x32xf32>
    %cst_142 = arith.constant dense<0.000000e+00> : vector<16xf32>
    %288 = vector.multi_reduction <add>, %287, %cst_142 [1] : vector<16x32xf32> to vector<16xf32>
    %289 = vector.shape_cast %288 : vector<16xf32> to vector<16x1xf32>
    %cst_143 = arith.constant 3.200000e+01 : f32
    %290 = vector.broadcast %cst_143 : f32 to vector<16x1xf32>
    %291 = arith.divf %289, %290 : vector<16x1xf32>
    %cst_144 = arith.constant 9.99999996E-13 : f32
    %292 = vector.broadcast %cst_144 : f32 to vector<16x1xf32>
    %293 = arith.addf %291, %292 : vector<16x1xf32>
    %294 = math.rsqrt %293 : vector<16x1xf32>
    %295 = vector.broadcast %294 : vector<16x1xf32> to vector<16x32xf32>
    %296 = arith.mulf %286, %295 : vector<16x32xf32>
    %297 = vector.broadcast %278 : vector<1x32xf32> to vector<16x32xf32>
    %298 = arith.mulf %296, %297 : vector<16x32xf32>
    %299 = vector.broadcast %280 : vector<1x32xf32> to vector<16x32xf32>
    %300 = arith.addf %298, %299 : vector<16x32xf32>
    %c1_145 = arith.constant 1 : index
    %c0_146 = arith.constant 0 : index
    %c0_147 = arith.constant 0 : index
    %301 = vector.load %arg13[%c1_145, %c0_146, %c0_147] : memref<2x32x64xf32, #tpu.memory_space<vmem>>, vector<1x32x64xf32>
    %302 = vector.shape_cast %301 : vector<1x32x64xf32> to vector<32x64xf32>
    %cst_148 = arith.constant dense<0.000000e+00> : vector<16x64xf32>
    %303 = tpu.matmul %300, %302, %cst_148 {dimension_numbers = #tpu.dot_dimension_numbers<[1], [0], [0], [1], [0, 0, 1, 1], [], []>} : vector<16x32xf32>, vector<32x64xf32>, vector<16x64xf32> -> vector<16x64xf32>
    %c1_149 = arith.constant 1 : index
    %c0_150 = arith.constant 0 : index
    %c0_151 = arith.constant 0 : index
    %304 = vector.load %arg14[%c1_149, %c0_150, %c0_151] : memref<2x1x64xf32, #tpu.memory_space<vmem>>, vector<1x1x64xf32>
    %305 = vector.shape_cast %304 : vector<1x1x64xf32> to vector<1x64xf32>
    %306 = vector.broadcast %305 : vector<1x64xf32> to vector<16x64xf32>
    %307 = arith.addf %303, %306 : vector<16x64xf32>
    %cst_152 = arith.constant 5.000000e-01 : f32
    %308 = vector.broadcast %cst_152 : f32 to vector<16x64xf32>
    %309 = arith.mulf %308, %307 : vector<16x64xf32>
    %cst_153 = arith.constant 4.471500e-02 : f32
    %310 = vector.broadcast %cst_153 : f32 to vector<16x64xf32>
    %311 = arith.mulf %310, %307 : vector<16x64xf32>
    %312 = arith.mulf %311, %307 : vector<16x64xf32>
    %313 = arith.mulf %312, %307 : vector<16x64xf32>
    %314 = arith.addf %307, %313 : vector<16x64xf32>
    %cst_154 = arith.constant 0.797884583 : f32
    %315 = vector.broadcast %cst_154 : f32 to vector<16x64xf32>
    %316 = arith.mulf %315, %314 : vector<16x64xf32>
    %317 = math.tanh %316 : vector<16x64xf32>
    %cst_155 = arith.constant 1.000000e+00 : f32
    %318 = vector.broadcast %cst_155 : f32 to vector<16x64xf32>
    %319 = arith.addf %318, %317 : vector<16x64xf32>
    %320 = arith.mulf %309, %319 : vector<16x64xf32>
    %c1_156 = arith.constant 1 : index
    %c0_157 = arith.constant 0 : index
    %c0_158 = arith.constant 0 : index
    %321 = vector.load %arg15[%c1_156, %c0_157, %c0_158] : memref<2x64x32xf32, #tpu.memory_space<vmem>>, vector<1x64x32xf32>
    %322 = vector.shape_cast %321 : vector<1x64x32xf32> to vector<64x32xf32>
    %cst_159 = arith.constant dense<0.000000e+00> : vector<16x32xf32>
    %323 = tpu.matmul %320, %322, %cst_159 {dimension_numbers = #tpu.dot_dimension_numbers<[1], [0], [0], [1], [0, 0, 1, 1], [], []>} : vector<16x64xf32>, vector<64x32xf32>, vector<16x32xf32> -> vector<16x32xf32>
    %c1_160 = arith.constant 1 : index
    %c0_161 = arith.constant 0 : index
    %c0_162 = arith.constant 0 : index
    %324 = vector.load %arg16[%c1_160, %c0_161, %c0_162] : memref<2x1x32xf32, #tpu.memory_space<vmem>>, vector<1x1x32xf32>
    %325 = vector.shape_cast %324 : vector<1x1x32xf32> to vector<1x32xf32>
    %326 = vector.broadcast %325 : vector<1x32xf32> to vector<16x32xf32>
    %327 = arith.addf %323, %326 : vector<16x32xf32>
    %328 = arith.addf %327, %300 : vector<16x32xf32>
    %c1_163 = arith.constant 1 : index
    %c0_164 = arith.constant 0 : index
    %c0_165 = arith.constant 0 : index
    %329 = vector.load %arg17[%c1_163, %c0_164, %c0_165] : memref<2x1x32xf32, #tpu.memory_space<vmem>>, vector<1x1x32xf32>
    %330 = vector.shape_cast %329 : vector<1x1x32xf32> to vector<1x32xf32>
    %c1_166 = arith.constant 1 : index
    %c0_167 = arith.constant 0 : index
    %c0_168 = arith.constant 0 : index
    %331 = vector.load %arg18[%c1_166, %c0_167, %c0_168] : memref<2x1x32xf32, #tpu.memory_space<vmem>>, vector<1x1x32xf32>
    %332 = vector.shape_cast %331 : vector<1x1x32xf32> to vector<1x32xf32>
    %cst_169 = arith.constant dense<0.000000e+00> : vector<16xf32>
    %333 = vector.multi_reduction <add>, %328, %cst_169 [1] : vector<16x32xf32> to vector<16xf32>
    %334 = vector.shape_cast %333 : vector<16xf32> to vector<16x1xf32>
    %cst_170 = arith.constant 3.200000e+01 : f32
    %335 = vector.broadcast %cst_170 : f32 to vector<16x1xf32>
    %336 = arith.divf %334, %335 : vector<16x1xf32>
    %337 = vector.broadcast %336 : vector<16x1xf32> to vector<16x32xf32>
    %338 = arith.subf %328, %337 : vector<16x32xf32>
    %339 = arith.mulf %338, %338 : vector<16x32xf32>
    %cst_171 = arith.constant dense<0.000000e+00> : vector<16xf32>
    %340 = vector.multi_reduction <add>, %339, %cst_171 [1] : vector<16x32xf32> to vector<16xf32>
    %341 = vector.shape_cast %340 : vector<16xf32> to vector<16x1xf32>
    %cst_172 = arith.constant 3.200000e+01 : f32
    %342 = vector.broadcast %cst_172 : f32 to vector<16x1xf32>
    %343 = arith.divf %341, %342 : vector<16x1xf32>
    %cst_173 = arith.constant 9.99999996E-13 : f32
    %344 = vector.broadcast %cst_173 : f32 to vector<16x1xf32>
    %345 = arith.addf %343, %344 : vector<16x1xf32>
    %346 = math.rsqrt %345 : vector<16x1xf32>
    %347 = vector.broadcast %346 : vector<16x1xf32> to vector<16x32xf32>
    %348 = arith.mulf %338, %347 : vector<16x32xf32>
    %349 = vector.broadcast %330 : vector<1x32xf32> to vector<16x32xf32>
    %350 = arith.mulf %348, %349 : vector<16x32xf32>
    %351 = vector.broadcast %332 : vector<1x32xf32> to vector<16x32xf32>
    %352 = arith.addf %350, %351 : vector<16x32xf32>
    %353 = vector.extract_strided_slice %352 {offsets = [0, 0], sizes = [1, 32], strides = [1, 1]} : vector<16x32xf32> to vector<1x32xf32>
    %354 = vector.extract_strided_slice %352 {offsets = [8, 0], sizes = [1, 32], strides = [1, 1]} : vector<16x32xf32> to vector<1x32xf32>
    %355 = tpu.concatenate %353, %354 in 0 : vector<1x32xf32>, vector<1x32xf32> -> vector<2x32xf32>
    %c0_174 = arith.constant 0 : index
    %c0_175 = arith.constant 0 : index
    %356 = vector.load %arg19[%c0_174, %c0_175] : memref<2x32xf32, #tpu.memory_space<vmem>>, vector<2x32xf32>
    tpu.vector_store %arg19[%c0_174, %c0_175], %355 {strides = array<i32>} : memref<2x32xf32, #tpu.memory_space<vmem>>, vector<2x32xf32>,
    return
  }
}

</mosaic_0001>

<llo_original>
// kernel: bert_finetune_forward.1
$region0: #{bert_finetune_forward.1}
  #allocation0 [shape = 'u32[]', space=smem, size = 0x4, offset = 0x4, fixed_abs, tag = 'smem constant byte address 0x4 - core index']
  #allocation1 [shape = 'u32[144,128]{1,0:T(1,128)}', space=vmem, size = 0x12000, scoped, tag = 'internal scratch']
  %s0 = inlined_call_operand.vmem [shape: s32[2,8], index: 0, kind: input, shape index: {}]
  %s1 = inlined_call_operand.vmem [shape: s32[2,8], index: 1, kind: input, shape index: {}]
  %s2 = inlined_call_operand.vmem [shape: f32[100,32], index: 2, kind: input, shape index: {}]
  %s3 = inlined_call_operand.vmem [shape: f32[16,32], index: 3, kind: input, shape index: {}]
  %s4 = inlined_call_operand.vmem [shape: f32[2,32], index: 4, kind: input, shape index: {}]
  %s5 = inlined_call_operand.vmem [shape: f32[1,32], index: 5, kind: input, shape index: {}]
  %s6 = inlined_call_operand.vmem [shape: f32[1,32], index: 6, kind: input, shape index: {}]
  %s7 = inlined_call_operand.vmem [shape: f32[2,32,96], index: 7, kind: input, shape index: {}]
  %s8 = inlined_call_operand.vmem [shape: f32[2,1,96], index: 8, kind: input, shape index: {}]
  %s9 = inlined_call_operand.vmem [shape: f32[2,32,32], index: 9, kind: input, shape index: {}]
  %s10 = inlined_call_operand.vmem [shape: f32[2,1,32], index: 10, kind: input, shape index: {}]
  %s11 = inlined_call_operand.vmem [shape: f32[2,1,32], index: 11, kind: input, shape index: {}]
  %s12 = inlined_call_operand.vmem [shape: f32[2,1,32], index: 12, kind: input, shape index: {}]
  %s13 = inlined_call_operand.vmem [shape: f32[2,32,64], index: 13, kind: input, shape index: {}]
  %s14 = inlined_call_operand.vmem [shape: f32[2,1,64], index: 14, kind: input, shape index: {}]
  %s15 = inlined_call_operand.vmem [shape: f32[2,64,32], index: 15, kind: input, shape index: {}]
  %s16 = inlined_call_operand.vmem [shape: f32[2,1,32], index: 16, kind: input, shape index: {}]
  %s17 = inlined_call_operand.vmem [shape: f32[2,1,32], index: 17, kind: input, shape index: {}]
  %s18 = inlined_call_operand.vmem [shape: f32[2,1,32], index: 18, kind: input, shape index: {}]
  %s19 = inlined_call_operand.hbm [shape: f32[2,32], index: 19, kind: output, shape index: {}]
  %s20 = sld [smem:[#allocation0]]
  $region90: #{bert_finetune_forward.1} parent=0
    _
  %s22 = ssub.s32 1, %s20
  %s23 = scalar_select 0, %s22, %s20
  $region1: #{bert_finetune_forward.1} parent=0
    #allocation2 [shape = 'u8[1024]{0}', space=smem, size = 0x400, scoped, tag = 'input window, operand 0, single buffered']
    #allocation3 [shape = 's32[1]{0}', space=sflag, size = 0x4, scoped, tag = 'scoped memory for bert_finetune_forward.1']
    #allocation4 [shape = 's32[1]{0}', space=sflag, size = 0x4, scoped, tag = 'scoped memory for bert_finetune_forward.1']
    #allocation5 [shape = 'u8[1024]{0}', space=vmem, size = 0x400, scoped, tag = 'output window, operand 0, single buffered']
    %24 = vsyncpa [#allocation4], 0
    %25 = vsyncpa [#allocation3], 0
    // Predicated region
    $region2: #{bert_finetune_forward.1} parent=1 // pred_check
      _
    $region3: #{bert_finetune_forward.1} parent=1 // pred_check_branch
      %27 = sbr.rel (0) target = $region5
    $region4: #{bert_finetune_forward.1} parent=1 // pred_region
      %s29 = ssub.s32 32, 32
      %30 = vsyncadd [#allocation4], %s29
      %s32 = sshll.u32 %s0, 4
      %s33 = int_to_ptr.vmem [resolvable:$true] %s32
      %35 = dma.vmem_to_smem %s33, 32, [#allocation2], [#allocation4]
    $region5: #{bert_finetune_forward.1} parent=1 // pred_fallthru
      _
    // Predicated region
    $region6: #{bert_finetune_forward.1} parent=1 // pred_check
      _
    $region7: #{bert_finetune_forward.1} parent=1 // pred_check_branch
      %37 = sbr.rel (0) target = $region9
    $region8: #{bert_finetune_forward.1} parent=1 // pred_region
      _
    $region9: #{bert_finetune_forward.1} parent=1 // pred_fallthru
      _
    // Predicated region
    $region10: #{bert_finetune_forward.1} parent=1 // pred_check
      _
    $region11: #{bert_finetune_forward.1} parent=1 // pred_check_branch
      %39 = sbr.rel (0) target = $region13
    $region12: #{bert_finetune_forward.1} parent=1 // pred_region
      _
    $region13: #{bert_finetune_forward.1} parent=1 // pred_fallthru
      _
    // Predicated region
    $region14: #{bert_finetune_forward.1} parent=1 // pred_check
      _
    $region15: #{bert_finetune_forward.1} parent=1 // pred_check_branch
      %41 = sbr.rel (0) target = $region17
    $region16: #{bert_finetune_forward.1} parent=1 // pred_region
      _
    $region17: #{bert_finetune_forward.1} parent=1 // pred_fallthru
      _
    // Predicated region
    $region18: #{bert_finetune_forward.1} parent=1 // pred_check
      _
    $region19: #{bert_finetune_forward.1} parent=1 // pred_check_branch
      %43 = sbr.rel (0) target = $region21
    $region20: #{bert_finetune_forward.1} parent=1 // pred_region
      _
    $region21: #{bert_finetune_forward.1} parent=1 // pred_fallthru
      _
    // Predicated region
    $region22: #{bert_finetune_forward.1} parent=1 // pred_check
      _
    $region23: #{bert_finetune_forward.1} parent=1 // pred_check_branch
      %45 = sbr.rel (0) target = $region25
    $region24: #{bert_finetune_forward.1} parent=1 // pred_region
      _
    $region25: #{bert_finetune_forward.1} parent=1 // pred_fallthru
      _
    // Predicated region
    $region26: #{bert_finetune_forward.1} parent=1 // pred_check
      _
    $region27: #{bert_finetune_forward.1} parent=1 // pred_check_branch
      %47 = sbr.rel (0) target = $region29
    $region28: #{bert_finetune_forward.1} parent=1 // pred_region
      _
    $region29: #{bert_finetune_forward.1} parent=1 // pred_fallthru
      _
    // Predicated region
    $region30: #{bert_finetune_forward.1} parent=1 // pred_check
      _
    $region31: #{bert_finetune_forward.1} parent=1 // pred_check_branch
      %49 = sbr.rel (0) target = $region33
    $region32: #{bert_finetune_forward.1} parent=1 // pred_region
      _
    $region33: #{bert_finetune_forward.1} parent=1 // pred_fallthru
      _
    // Predicated region
    $region34: #{bert_finetune_forward.1} parent=1 // pred_check
      _
    $region35: #{bert_finetune_forward.1} parent=1 // pred_check_branch
      %51 = sbr.rel (0) target = $region37
    $region36: #{bert_finetune_forward.1} parent=1 // pred_region
      _
    $region37: #{bert_finetune_forward.1} parent=1 // pred_fallthru
      _
    // Predicated region
    $region38: #{bert_finetune_forward.1} parent=1 // pred_check
      _
    $region39: #{bert_finetune_forward.1} parent=1 // pred_check_branch
      %53 = sbr.rel (0) target = $region41
    $region40: #{bert_finetune_forward.1} parent=1 // pred_region
      _
    $region41: #{bert_finetune_forward.1} parent=1 // pred_fallthru
      _
    // Predicated region
    $region42: #{bert_finetune_forward.1} parent=1 // pred_check
      _
    $region43: #{bert_finetune_forward.1} parent=1 // pred_check_branch
      %55 = sbr.rel (0) target = $region45
    $region44: #{bert_finetune_forward.1} parent=1 // pred_region
      _
    $region45: #{bert_finetune_forward.1} parent=1 // pred_fallthru
      _
    // Predicated region
    $region46: #{bert_finetune_forward.1} parent=1 // pred_check
      _
    $region47: #{bert_finetune_forward.1} parent=1 // pred_check_branch
      %57 = sbr.rel (0) target = $region49
    $region48: #{bert_finetune_forward.1} parent=1 // pred_region
      _
    $region49: #{bert_finetune_forward.1} parent=1 // pred_fallthru
      _
    // Predicated region
    $region50: #{bert_finetune_forward.1} parent=1 // pred_check
      _
    $region51: #{bert_finetune_forward.1} parent=1 // pred_check_branch
      %59 = sbr.rel (0) target = $region53
    $region52: #{bert_finetune_forward.1} parent=1 // pred_region
      _
    $region53: #{bert_finetune_forward.1} parent=1 // pred_fallthru
      _
    // Predicated region
    $region54: #{bert_finetune_forward.1} parent=1 // pred_check
      _
    $region55: #{bert_finetune_forward.1} parent=1 // pred_check_branch
      %61 = sbr.rel (0) target = $region57
    $region56: #{bert_finetune_forward.1} parent=1 // pred_region
      _
    $region57: #{bert_finetune_forward.1} parent=1 // pred_fallthru
      _
    // Predicated region
    $region58: #{bert_finetune_forward.1} parent=1 // pred_check
      _
    $region59: #{bert_finetune_forward.1} parent=1 // pred_check_branch
      %63 = sbr.rel (0) target = $region61
    $region60: #{bert_finetune_forward.1} parent=1 // pred_region
      _
    $region61: #{bert_finetune_forward.1} parent=1 // pred_fallthru
      _
    // Predicated region
    $region62: #{bert_finetune_forward.1} parent=1 // pred_check
      _
    $region63: #{bert_finetune_forward.1} parent=1 // pred_check_branch
      %65 = sbr.rel (0) target = $region65
    $region64: #{bert_finetune_forward.1} parent=1 // pred_region
      _
    $region65: #{bert_finetune_forward.1} parent=1 // pred_fallthru
      _
    // Predicated region
    $region66: #{bert_finetune_forward.1} parent=1 // pred_check
      _
    $region67: #{bert_finetune_forward.1} parent=1 // pred_check_branch
      %67 = sbr.rel (0) target = $region69
    $region68: #{bert_finetune_forward.1} parent=1 // pred_region
      _
    $region69: #{bert_finetune_forward.1} parent=1 // pred_fallthru
      _
    // Predicated region
    $region70: #{bert_finetune_forward.1} parent=1 // pred_check
      _
    $region71: #{bert_finetune_forward.1} parent=1 // pred_check_branch
      %69 = sbr.rel (0) target = $region73
    $region72: #{bert_finetune_forward.1} parent=1 // pred_region
      _
    $region73: #{bert_finetune_forward.1} parent=1 // pred_fallthru
      _
    // Predicated region
    $region74: #{bert_finetune_forward.1} parent=1 // pred_check
      _
    $region75: #{bert_finetune_forward.1} parent=1 // pred_check_branch
      %71 = sbr.rel (0) target = $region77
    $region76: #{bert_finetune_forward.1} parent=1 // pred_region
      _
    $region77: #{bert_finetune_forward.1} parent=1 // pred_fallthru
      _
    // Predicated region
    $region78: #{bert_finetune_forward.1} parent=1 // pred_check
      _
    $region79: #{bert_finetune_forward.1} parent=1 // pred_check_branch
      %73 = sbr.rel (0) target = $region81
    $region80: #{bert_finetune_forward.1} parent=1 // pred_region
      %74 = dma.done [#allocation4], 32
    $region81: #{bert_finetune_forward.1} parent=1 // pred_fallthru
      _
    %75 = sfence
    %s76 = sld [smem:[#allocation2]]
    %s77 = scalar_lea.vmem %s2, %s76
    %v78 = vld [vmem:[%s77] sm:$0x1]
    %s79 = sld [smem:[#allocation2 + $0x1]]
    %s80 = scalar_lea.vmem %s2, %s79
    %v81 = vld [vmem:[%s80] sm:$0x1]
    %s82 = sld [smem:[#allocation2 + $0x2]]
    %s83 = scalar_lea.vmem %s2, %s82
    %v84 = vld [vmem:[%s83] sm:$0x1]
    %s85 = sld [smem:[#allocation2 + $0x3]]
    %s86 = scalar_lea.vmem %s2, %s85
    %v87 = vld [vmem:[%s86] sm:$0x1]
    %s88 = sld [smem:[#allocation2 + $0x4]]
    %s89 = scalar_lea.vmem %s2, %s88
    %v90 = vld [vmem:[%s89] sm:$0x1]
    %s91 = sld [smem:[#allocation2 + $0x5]]
    %s92 = scalar_lea.vmem %s2, %s91
    %v93 = vld [vmem:[%s92] sm:$0x1]
    %s94 = sld [smem:[#allocation2 + $0x6]]
    %s95 = scalar_lea.vmem %s2, %s94
    %v96 = vld [vmem:[%s95] sm:$0x1]
    %s97 = sld [smem:[#allocation2 + $0x7]]
    %s98 = scalar_lea.vmem %s2, %s97
    %v99 = vld [vmem:[%s98] sm:$0x1]
    %s100 = sld [smem:[#allocation2 + $0x80]]
    %s101 = scalar_lea.vmem %s2, %s100
    %v102 = vld [vmem:[%s101] sm:$0x1]
    %s103 = sld [smem:[#allocation2 + $0x81]]
    %s104 = scalar_lea.vmem %s2, %s103
    %v105 = vld [vmem:[%s104] sm:$0x1]
    %s106 = sld [smem:[#allocation2 + $0x82]]
    %s107 = scalar_lea.vmem %s2, %s106
    %v108 = vld [vmem:[%s107] sm:$0x1]
    %s109 = sld [smem:[#allocation2 + $0x83]]
    %s110 = scalar_lea.vmem %s2, %s109
    %v111 = vld [vmem:[%s110] sm:$0x1]
    %s112 = sld [smem:[#allocation2 + $0x84]]
    %s113 = scalar_lea.vmem %s2, %s112
    %v114 = vld [vmem:[%s113] sm:$0x1]
    %s115 = sld [smem:[#allocation2 + $0x85]]
    %s116 = scalar_lea.vmem %s2, %s115
    %v117 = vld [vmem:[%s116] sm:$0x1]
    %s118 = sld [smem:[#allocation2 + $0x86]]
    %s119 = scalar_lea.vmem %s2, %s118
    %v120 = vld [vmem:[%s119] sm:$0x1]
    %s121 = sld [smem:[#allocation2 + $0x87]]
    %s122 = scalar_lea.vmem %s2, %s121
    %v123 = vld [vmem:[%s122] sm:$0x1]
    %v125 = vrot.slane %v81, 7
    %v128 = vrot.slane %v84, 6
    %v131 = vrot.slane %v87, 5
    %v134 = vrot.slane %v90, 4
    %v137 = vrot.slane %v93, 3
    %v140 = vrot.slane %v96, 2
    %v143 = vrot.slane %v99, 1
    %v146 = vrot.slane %v105, 7
    %v149 = vrot.slane %v108, 6
    %v152 = vrot.slane %v111, 5
    %v155 = vrot.slane %v114, 4
    %v158 = vrot.slane %v117, 3
    %v161 = vrot.slane %v120, 2
    %v164 = vrot.slane %v123, 1
    %vm166 = vcmask 1040384
    %v167 = vsel %vm166, %v78, %v125
    %vm168 = vcmask 1041408
    %v169 = vsel %vm168, %v167, %v128
    %vm170 = vcmask 1042432
    %v171 = vsel %vm170, %v169, %v131
    %vm172 = vcmask 1043456
    %v173 = vsel %vm172, %v171, %v134
    %vm174 = vcmask 1044480
    %v175 = vsel %vm174, %v173, %v137
    %vm176 = vcmask 1045504
    %v177 = vsel %vm176, %v175, %v140
    %vm178 = vcmask 1046528
    %v179 = vsel %vm178, %v177, %v143
    %v180 = vsel %vm166, %v102, %v146
    %v181 = vsel %vm168, %v180, %v149
    %v182 = vsel %vm170, %v181, %v152
    %v183 = vsel %vm172, %v182, %v155
    %v184 = vsel %vm174, %v183, %v158
    %v185 = vsel %vm176, %v184, %v161
    %v186 = vsel %vm178, %v185, %v164
    %v187 = vld [vmem:[%s3] sm:$0xff]
    %v188 = vadd.f32 %v179, %v187
    %v189 = vadd.f32 %v186, %v187
    %v190 = vld [vmem:[%s4] sm:$0x1]
    %v191 = vlaneseq
    %v192 = vshrl.u32 %v191, 7
    %v193 = vsub.s32 0, %v192
    %v194 = vrot.slane %v190, %v193
    %v195 = vadd.f32 %v188, %v194
    %v196 = vadd.f32 %v189, %v194
    %v197 = vld [vmem:[%s5] sm:$0x1]
    %v198 = vld [vmem:[%s6] sm:$0x1]
    %vm199 = vcmask 261120
    %v200 = vsel %vm199, %v195, 0.0
    %201 = vadd.xlane.f32.xlu0 %v200
    %v202 = vpop.xlane.xlu0 %201
    %v203 = vsel %vm199, %v196, 0.0
    %204 = vadd.xlane.f32.xlu0 %v203
    %v205 = vpop.xlane.xlu0 %204
    %v206 = vrcp.pop 32.0
    %v207 = vmul.f32 %v202, %v206
    %v208 = vmul.f32 %v205, %v206
    %v209 = vsub.f32 %v195, %v207
    %v210 = vsub.f32 %v196, %v208
    %v211 = vmul.f32 %v209, %v209
    %v212 = vmul.f32 %v210, %v210
    %v213 = vsel %vm199, %v211, 0.0
    %214 = vadd.xlane.f32.xlu0 %v213
    %v215 = vpop.xlane.xlu0 %214
    %v216 = vsel %vm199, %v212, 0.0
    %217 = vadd.xlane.f32.xlu0 %v216
    %v218 = vpop.xlane.xlu0 %217
    %v219 = vmul.f32 %v215, %v206
    %v220 = vmul.f32 %v218, %v206
    %v221 = vadd.f32 %v219, 1e-12
    %v222 = vadd.f32 %v220, 1e-12
    %v223 = vrsqrt.pop %v221
    %v224 = vrsqrt.pop %v222
    %v225 = vmul.f32 %v209, %v223
    %v226 = vmul.f32 %v210, %v224
    %v228 = vlaneseq
    %v229 = vshrl.u32 %v228, 7
    %v230 = vsub.s32 0, %v229
    %v231 = vrot.slane %v197, %v230
    %v233 = vmul.f32 %v225, %v231
    %v234 = vmul.f32 %v226, %v231
    %v236 = vlaneseq
    %v237 = vshrl.u32 %v236, 7
    %v238 = vsub.s32 0, %v237
    %v239 = vrot.slane %v198, %v238
    %v241 = vadd.f32 %v233, %v239
    %v242 = vadd.f32 %v234, %v239
    %v243 = vld [vmem:[%s1] sm:$0x3]
    %v244 = vcvt.s32.f32 %v243
    %v245 = vsub.f32 1.0, %v244
    %v246 = vmul.f32 %v245, -10000.0
    %v249 = vunpack.c.l.s4 1966171168
    %v250 = vunpack.c.0.s8 %v249
    %v251 = vlaneseq
    %v252 = vshrl.u32 %v251, 7
    %v253 = vsub.s32 %v250, %v252
    %v254 = vrot.slane %v246, %v253
    %v255 = vcombine.high %v254, %v254
    %v257 = vunpack.c.l.s4 1966171168
    %v258 = vunpack.c.0.s8 %v257
    %v259 = vlaneseq
    %v260 = vshrl.u32 %v259, 7
    %v261 = vsub.s32 %v258, %v260
    %v262 = vrot.slane %v254, %v261
    %v264 = vunpack.c.l.s4 1966171168
    %v265 = vunpack.c.0.s8 %v264
    %v266 = vlaneseq
    %v267 = vshrl.u32 %v266, 7
    %v268 = vsub.s32 %v265, %v267
    %v269 = vrot.slane %v255, %v268
    %v270 = vld [vmem:[%s7] sm:$0xff]
    %v271 = vld [vmem:[%s7 + $0x8] sm:$0xff]
    %v272 = vld [vmem:[%s7 + $0x10] sm:$0xff]
    %v273 = vld [vmem:[%s7 + $0x18] sm:$0xff]
    %v274 = vld [vmem:[%s8] sm:$0x1]
    %v276 = vlaneseq
    %v277 = vshrl.u32 %v276, 7
    %v278 = vsub.s32 0, %v277
    %v279 = vrot.slane %v274, %v278
    %v282 = vsel %vm199, %v241, 0
    %v285 = vsel %vm199, %v242, 0
    %287 = vmatprep.subr.mxu0 0.0
    %288 = vmatpush1.msra.mxu0 0.0
    %289 = vmatprep.subr.mxu0 0.0
    %290 = vmatpush1.msra.mxu0 0.0
    %291 = vmatprep.subr.mxu0 0.0
    %292 = vmatpush1.msra.mxu0 0.0
    %293 = vmatprep.subr.mxu0 0.0
    %294 = vmatpush1.msra.mxu0 0.0
    %295 = vmatprep.subr.mxu0 0.0
    %296 = vmatpush1.msra.mxu0 0.0
    %297 = vmatprep.subr.mxu0 0.0
    %298 = vmatpush1.msra.mxu0 0.0
    %299 = vmatprep.subr.mxu0 0.0
    %300 = vmatpush1.msra.mxu0 0.0
    %301 = vmatprep.subr.mxu0 0.0
    %302 = vmatpush1.msra.mxu0 0.0
    %303 = vmatprep.subr.mxu0 0.0
    %304 = vmatpush1.msra.mxu0 0.0
    %305 = vmatprep.subr.mxu0 0.0
    %306 = vmatpush1.msra.mxu0 0.0
    %307 = vmatprep.subr.mxu0 0.0
    %308 = vmatpush1.msra.mxu0 0.0
    %309 = vmatprep.subr.mxu0 0.0
    %310 = vmatpush1.msra.mxu0 0.0
    %311 = vmatprep.subr.mxu0 0.0
    %312 = vmatpush1.msra.mxu0 %v273
    %313 = vmatprep.subr.mxu0 0.0
    %314 = vmatpush1.msra.mxu0 %v272
    %315 = vmatprep.subr.mxu0 0.0
    %316 = vmatpush1.msra.mxu0 %v271
    %317 = vmatprep.subr.mxu0 0.0
    %318 = vmatpush1.msra.mxu0 %v270
    %319 = vmatprep.subr.mxu0 0.0
    %320 = vmatpush2.msra.mxu0 0.0
    %321 = vmatprep.subr.mxu0 0.0
    %322 = vmatpush2.msra.mxu0 0.0
    %323 = vmatprep.subr.mxu0 0.0
    %324 = vmatpush2.msra.mxu0 0.0
    %325 = vmatprep.subr.mxu0 0.0
    %326 = vmatpush2.msra.mxu0 0.0
    %327 = vmatprep.subr.mxu0 0.0
    %328 = vmatpush2.msra.mxu0 0.0
    %329 = vmatprep.subr.mxu0 0.0
    %330 = vmatpush2.msra.mxu0 0.0
    %331 = vmatprep.subr.mxu0 0.0
    %332 = vmatpush2.msra.mxu0 0.0
    %333 = vmatprep.subr.mxu0 0.0
    %334 = vmatpush2.msra.mxu0 0.0
    %335 = vmatprep.subr.mxu0 0.0
    %336 = vmatpush2.msra.mxu0 0.0
    %337 = vmatprep.subr.mxu0 0.0
    %338 = vmatpush2.msra.mxu0 0.0
    %339 = vmatprep.subr.mxu0 0.0
    %340 = vmatpush2.msra.mxu0 0.0
    %341 = vmatprep.subr.mxu0 0.0
    %342 = vmatpush2.msra.mxu0 0.0
    %343 = vmatprep.subr.mxu0 0.0
    %344 = vmatpush2.msra.mxu0 0.0
    %345 = vmatprep.subr.mxu0 0.0
    %346 = vmatpush2.msra.mxu0 0.0
    %347 = vmatprep.subr.mxu0 0.0
    %348 = vmatpush2.msra.mxu0 0.0
    %349 = vmatprep.subr.mxu0 0.0
    %350 = vmatpush2.msra.mxu0 0.0
    %351 = vmatprep.mubr.f32.mxu0 0.0
    %352 = vmatmul.mubr.f32.gmra.mxu0 %v282
    %v353 = vpop.f32.mrf.mxu0
    %v354 = vadd.f32 %v279, %v353
    %v355 = vpop.f32.mrf.mxu0
    %356 = vmatprep.mubr.f32.mxu0 0.0
    %357 = vmatmul.mubr.f32.gmra.mxu0 %v285
    %v358 = vpop.f32.mrf.mxu0
    %v359 = vadd.f32 %v279, %v358
    %v360 = vpop.f32.mrf.mxu0
    %361 = vdwg.mxu0
    %364 = vrot.lane.b32.xlu0 %v354, 120
    %v365 = vpop.permute.xlu0 %364
    %366 = vrot.lane.b32.xlu0 %v359, 120
    %v367 = vpop.permute.xlu0 %366
    %368 = vrot.lane.b32.xlu0 %v354, 112
    %v369 = vpop.permute.xlu0 %368
    %370 = vrot.lane.b32.xlu0 %v359, 112
    %v371 = vpop.permute.xlu0 %370
    %372 = vrot.lane.b32.xlu0 %v354, 104
    %v373 = vpop.permute.xlu0 %372
    %374 = vrot.lane.b32.xlu0 %v359, 104
    %v375 = vpop.permute.xlu0 %374
    %376 = vrot.lane.b32.xlu0 %v354, 96
    %v377 = vpop.permute.xlu0 %376
    %vm378 = vcmask 64512
    %v379 = vsel %vm378, %v354, 0
    %v381 = vsel %vm378, %v377, 0
    %383 = vmatprep.subr.mxu0 0.0
    %384 = vmatpush1.xpose.msra.mxu0 0.0
    %385 = vmatprep.subr.mxu0 0.0
    %386 = vmatpush1.xpose.msra.mxu0 0.0
    %387 = vmatprep.subr.mxu0 0.0
    %388 = vmatpush1.xpose.msra.mxu0 0.0
    %389 = vmatprep.subr.mxu0 0.0
    %390 = vmatpush1.xpose.msra.mxu0 0.0
    %391 = vmatprep.subr.mxu0 0.0
    %392 = vmatpush1.xpose.msra.mxu0 0.0
    %393 = vmatprep.subr.mxu0 0.0
    %394 = vmatpush1.xpose.msra.mxu0 0.0
    %395 = vmatprep.subr.mxu0 0.0
    %396 = vmatpush1.xpose.msra.mxu0 0.0
    %397 = vmatprep.subr.mxu0 0.0
    %398 = vmatpush1.xpose.msra.mxu0 0.0
    %399 = vmatprep.subr.mxu0 0.0
    %400 = vmatpush1.xpose.msra.mxu0 0.0
    %401 = vmatprep.subr.mxu0 0.0
    %402 = vmatpush1.xpose.msra.mxu0 0.0
    %403 = vmatprep.subr.mxu0 0.0
    %404 = vmatpush1.xpose.msra.mxu0 0.0
    %405 = vmatprep.subr.mxu0 0.0
    %406 = vmatpush1.xpose.msra.mxu0 0.0
    %407 = vmatprep.subr.mxu0 0.0
    %408 = vmatpush1.xpose.msra.mxu0 0.0
    %409 = vmatprep.subr.mxu0 0.0
    %410 = vmatpush1.xpose.msra.mxu0 0.0
    %411 = vmatprep.subr.mxu0 0.0
    %412 = vmatpush1.xpose.msra.mxu0 0.0
    %413 = vmatprep.subr.mxu0 0.0
    %414 = vmatpush1.xpose.msra.mxu0 %v381
    %415 = vmatprep.subr.mxu0 0.0
    %416 = vmatpush2.xpose.msra.mxu0 0.0
    %417 = vmatprep.subr.mxu0 0.0
    %418 = vmatpush2.xpose.msra.mxu0 0.0
    %419 = vmatprep.subr.mxu0 0.0
    %420 = vmatpush2.xpose.msra.mxu0 0.0
    %421 = vmatprep.subr.mxu0 0.0
    %422 = vmatpush2.xpose.msra.mxu0 0.0
    %423 = vmatprep.subr.mxu0 0.0
    %424 = vmatpush2.xpose.msra.mxu0 0.0
    %425 = vmatprep.subr.mxu0 0.0
    %426 = vmatpush2.xpose.msra.mxu0 0.0
    %427 = vmatprep.subr.mxu0 0.0
    %428 = vmatpush2.xpose.msra.mxu0 0.0
    %429 = vmatprep.subr.mxu0 0.0
    %430 = vmatpush2.xpose.msra.mxu0 0.0
    %431 = vmatprep.subr.mxu0 0.0
    %432 = vmatpush2.xpose.msra.mxu0 0.0
    %433 = vmatprep.subr.mxu0 0.0
    %434 = vmatpush2.xpose.msra.mxu0 0.0
    %435 = vmatprep.subr.mxu0 0.0
    %436 = vmatpush2.xpose.msra.mxu0 0.0
    %437 = vmatprep.subr.mxu0 0.0
    %438 = vmatpush2.xpose.msra.mxu0 0.0
    %439 = vmatprep.subr.mxu0 0.0
    %440 = vmatpush2.xpose.msra.mxu0 0.0
    %441 = vmatprep.subr.mxu0 0.0
    %442 = vmatpush2.xpose.msra.mxu0 0.0
    %443 = vmatprep.subr.mxu0 0.0
    %444 = vmatpush2.xpose.msra.mxu0 0.0
    %445 = vmatprep.subr.mxu0 0.0
    %446 = vmatpush2.xpose.msra.mxu0 0.0
    %447 = vmatprep.mubr.f32.mxu0 0.0
    %448 = vmatmul.mubr.f32.gmra.mxu0 %v379
    %v449 = vpop.f32.mrf.mxu0
    %v450 = vadd.f32 0.0, %v449
    %v451 = vpop.f32.mrf.mxu0
    %452 = vdwg.mxu0
    %453 = vrot.lane.b32.xlu0 %v359, 96
    %v454 = vpop.permute.xlu0 %453
    %v455 = vsel %vm378, %v359, 0
    %v457 = vsel %vm378, %v454, 0
    %459 = vmatprep.subr.mxu0 0.0
    %460 = vmatpush1.xpose.msra.mxu0 0.0
    %461 = vmatprep.subr.mxu0 0.0
    %462 = vmatpush1.xpose.msra.mxu0 0.0
    %463 = vmatprep.subr.mxu0 0.0
    %464 = vmatpush1.xpose.msra.mxu0 0.0
    %465 = vmatprep.subr.mxu0 0.0
    %466 = vmatpush1.xpose.msra.mxu0 0.0
    %467 = vmatprep.subr.mxu0 0.0
    %468 = vmatpush1.xpose.msra.mxu0 0.0
    %469 = vmatprep.subr.mxu0 0.0
    %470 = vmatpush1.xpose.msra.mxu0 0.0
    %471 = vmatprep.subr.mxu0 0.0
    %472 = vmatpush1.xpose.msra.mxu0 0.0
    %473 = vmatprep.subr.mxu0 0.0
    %474 = vmatpush1.xpose.msra.mxu0 0.0
    %475 = vmatprep.subr.mxu0 0.0
    %476 = vmatpush1.xpose.msra.mxu0 0.0
    %477 = vmatprep.subr.mxu0 0.0
    %478 = vmatpush1.xpose.msra.mxu0 0.0
    %479 = vmatprep.subr.mxu0 0.0
    %480 = vmatpush1.xpose.msra.mxu0 0.0
    %481 = vmatprep.subr.mxu0 0.0
    %482 = vmatpush1.xpose.msra.mxu0 0.0
    %483 = vmatprep.subr.mxu0 0.0
    %484 = vmatpush1.xpose.msra.mxu0 0.0
    %485 = vmatprep.subr.mxu0 0.0
    %486 = vmatpush1.xpose.msra.mxu0 0.0
    %487 = vmatprep.subr.mxu0 0.0
    %488 = vmatpush1.xpose.msra.mxu0 0.0
    %489 = vmatprep.subr.mxu0 0.0
    %490 = vmatpush1.xpose.msra.mxu0 %v457
    %491 = vmatprep.subr.mxu0 0.0
    %492 = vmatpush2.xpose.msra.mxu0 0.0
    %493 = vmatprep.subr.mxu0 0.0
    %494 = vmatpush2.xpose.msra.mxu0 0.0
    %495 = vmatprep.subr.mxu0 0.0
    %496 = vmatpush2.xpose.msra.mxu0 0.0
    %497 = vmatprep.subr.mxu0 0.0
    %498 = vmatpush2.xpose.msra.mxu0 0.0
    %499 = vmatprep.subr.mxu0 0.0
    %500 = vmatpush2.xpose.msra.mxu0 0.0
    %501 = vmatprep.subr.mxu0 0.0
    %502 = vmatpush2.xpose.msra.mxu0 0.0
    %503 = vmatprep.subr.mxu0 0.0
    %504 = vmatpush2.xpose.msra.mxu0 0.0
    %505 = vmatprep.subr.mxu0 0.0
    %506 = vmatpush2.xpose.msra.mxu0 0.0
    %507 = vmatprep.subr.mxu0 0.0
    %508 = vmatpush2.xpose.msra.mxu0 0.0
    %509 = vmatprep.subr.mxu0 0.0
    %510 = vmatpush2.xpose.msra.mxu0 0.0
    %511 = vmatprep.subr.mxu0 0.0
    %512 = vmatpush2.xpose.msra.mxu0 0.0
    %513 = vmatprep.subr.mxu0 0.0
    %514 = vmatpush2.xpose.msra.mxu0 0.0
    %515 = vmatprep.subr.mxu0 0.0
    %516 = vmatpush2.xpose.msra.mxu0 0.0
    %517 = vmatprep.subr.mxu0 0.0
    %518 = vmatpush2.xpose.msra.mxu0 0.0
    %519 = vmatprep.subr.mxu0 0.0
    %520 = vmatpush2.xpose.msra.mxu0 0.0
    %521 = vmatprep.subr.mxu0 0.0
    %522 = vmatpush2.xpose.msra.mxu0 0.0
    %523 = vmatprep.mubr.f32.mxu0 0.0
    %524 = vmatmul.mubr.f32.gmra.mxu0 %v455
    %v525 = vpop.f32.mrf.mxu0
    %v526 = vadd.f32 0.0, %v525
    %v527 = vpop.f32.mrf.mxu0
    %528 = vdwg.mxu0
    %529 = vrot.lane.b32.xlu0 %v365, 96
    %v530 = vpop.permute.xlu0 %529
    %v531 = vsel %vm378, %v365, 0
    %v533 = vsel %vm378, %v530, 0
    %535 = vmatprep.subr.mxu0 0.0
    %536 = vmatpush1.xpose.msra.mxu0 0.0
    %537 = vmatprep.subr.mxu0 0.0
    %538 = vmatpush1.xpose.msra.mxu0 0.0
    %539 = vmatprep.subr.mxu0 0.0
    %540 = vmatpush1.xpose.msra.mxu0 0.0
    %541 = vmatprep.subr.mxu0 0.0
    %542 = vmatpush1.xpose.msra.mxu0 0.0
    %543 = vmatprep.subr.mxu0 0.0
    %544 = vmatpush1.xpose.msra.mxu0 0.0
    %545 = vmatprep.subr.mxu0 0.0
    %546 = vmatpush1.xpose.msra.mxu0 0.0
    %547 = vmatprep.subr.mxu0 0.0
    %548 = vmatpush1.xpose.msra.mxu0 0.0
    %549 = vmatprep.subr.mxu0 0.0
    %550 = vmatpush1.xpose.msra.mxu0 0.0
    %551 = vmatprep.subr.mxu0 0.0
    %552 = vmatpush1.xpose.msra.mxu0 0.0
    %553 = vmatprep.subr.mxu0 0.0
    %554 = vmatpush1.xpose.msra.mxu0 0.0
    %555 = vmatprep.subr.mxu0 0.0
    %556 = vmatpush1.xpose.msra.mxu0 0.0
    %557 = vmatprep.subr.mxu0 0.0
    %558 = vmatpush1.xpose.msra.mxu0 0.0
    %559 = vmatprep.subr.mxu0 0.0
    %560 = vmatpush1.xpose.msra.mxu0 0.0
    %561 = vmatprep.subr.mxu0 0.0
    %562 = vmatpush1.xpose.msra.mxu0 0.0
    %563 = vmatprep.subr.mxu0 0.0
    %564 = vmatpush1.xpose.msra.mxu0 0.0
    %565 = vmatprep.subr.mxu0 0.0
    %566 = vmatpush1.xpose.msra.mxu0 %v533
    %567 = vmatprep.subr.mxu0 0.0
    %568 = vmatpush2.xpose.msra.mxu0 0.0
    %569 = vmatprep.subr.mxu0 0.0
    %570 = vmatpush2.xpose.msra.mxu0 0.0
    %571 = vmatprep.subr.mxu0 0.0
    %572 = vmatpush2.xpose.msra.mxu0 0.0
    %573 = vmatprep.subr.mxu0 0.0
    %574 = vmatpush2.xpose.msra.mxu0 0.0
    %575 = vmatprep.subr.mxu0 0.0
    %576 = vmatpush2.xpose.msra.mxu0 0.0
    %577 = vmatprep.subr.mxu0 0.0
    %578 = vmatpush2.xpose.msra.mxu0 0.0
    %579 = vmatprep.subr.mxu0 0.0
    %580 = vmatpush2.xpose.msra.mxu0 0.0
    %581 = vmatprep.subr.mxu0 0.0
    %582 = vmatpush2.xpose.msra.mxu0 0.0
    %583 = vmatprep.subr.mxu0 0.0
    %584 = vmatpush2.xpose.msra.mxu0 0.0
    %585 = vmatprep.subr.mxu0 0.0
    %586 = vmatpush2.xpose.msra.mxu0 0.0
    %587 = vmatprep.subr.mxu0 0.0
    %588 = vmatpush2.xpose.msra.mxu0 0.0
    %589 = vmatprep.subr.mxu0 0.0
    %590 = vmatpush2.xpose.msra.mxu0 0.0
    %591 = vmatprep.subr.mxu0 0.0
    %592 = vmatpush2.xpose.msra.mxu0 0.0
    %593 = vmatprep.subr.mxu0 0.0
    %594 = vmatpush2.xpose.msra.mxu0 0.0
    %595 = vmatprep.subr.mxu0 0.0
    %596 = vmatpush2.xpose.msra.mxu0 0.0
    %597 = vmatprep.subr.mxu0 0.0
    %598 = vmatpush2.xpose.msra.mxu0 0.0
    %599 = vmatprep.mubr.f32.mxu0 0.0
    %600 = vmatmul.mubr.f32.gmra.mxu0 %v531
    %v601 = vpop.f32.mrf.mxu0
    %v602 = vadd.f32 0.0, %v601
    %v603 = vpop.f32.mrf.mxu0
    %604 = vdwg.mxu0
    %605 = vrot.lane.b32.xlu0 %v367, 96
    %v606 = vpop.permute.xlu0 %605
    %v607 = vsel %vm378, %v367, 0
    %v609 = vsel %vm378, %v606, 0
    %611 = vmatprep.subr.mxu0 0.0
    %612 = vmatpush1.xpose.msra.mxu0 0.0
    %613 = vmatprep.subr.mxu0 0.0
    %614 = vmatpush1.xpose.msra.mxu0 0.0
    %615 = vmatprep.subr.mxu0 0.0
    %616 = vmatpush1.xpose.msra.mxu0 0.0
    %617 = vmatprep.subr.mxu0 0.0
    %618 = vmatpush1.xpose.msra.mxu0 0.0
    %619 = vmatprep.subr.mxu0 0.0
    %620 = vmatpush1.xpose.msra.mxu0 0.0
    %621 = vmatprep.subr.mxu0 0.0
    %622 = vmatpush1.xpose.msra.mxu0 0.0
    %623 = vmatprep.subr.mxu0 0.0
    %624 = vmatpush1.xpose.msra.mxu0 0.0
    %625 = vmatprep.subr.mxu0 0.0
    %626 = vmatpush1.xpose.msra.mxu0 0.0
    %627 = vmatprep.subr.mxu0 0.0
    %628 = vmatpush1.xpose.msra.mxu0 0.0
    %629 = vmatprep.subr.mxu0 0.0
    %630 = vmatpush1.xpose.msra.mxu0 0.0
    %631 = vmatprep.subr.mxu0 0.0
    %632 = vmatpush1.xpose.msra.mxu0 0.0
    %633 = vmatprep.subr.mxu0 0.0
    %634 = vmatpush1.xpose.msra.mxu0 0.0
    %635 = vmatprep.subr.mxu0 0.0
    %636 = vmatpush1.xpose.msra.mxu0 0.0
    %637 = vmatprep.subr.mxu0 0.0
    %638 = vmatpush1.xpose.msra.mxu0 0.0
    %639 = vmatprep.subr.mxu0 0.0
    %640 = vmatpush1.xpose.msra.mxu0 0.0
    %641 = vmatprep.subr.mxu0 0.0
    %642 = vmatpush1.xpose.msra.mxu0 %v609
    %643 = vmatprep.subr.mxu0 0.0
    %644 = vmatpush2.xpose.msra.mxu0 0.0
    %645 = vmatprep.subr.mxu0 0.0
    %646 = vmatpush2.xpose.msra.mxu0 0.0
    %647 = vmatprep.subr.mxu0 0.0
    %648 = vmatpush2.xpose.msra.mxu0 0.0
    %649 = vmatprep.subr.mxu0 0.0
    %650 = vmatpush2.xpose.msra.mxu0 0.0
    %651 = vmatprep.subr.mxu0 0.0
    %652 = vmatpush2.xpose.msra.mxu0 0.0
    %653 = vmatprep.subr.mxu0 0.0
    %654 = vmatpush2.xpose.msra.mxu0 0.0
    %655 = vmatprep.subr.mxu0 0.0
    %656 = vmatpush2.xpose.msra.mxu0 0.0
    %657 = vmatprep.subr.mxu0 0.0
    %658 = vmatpush2.xpose.msra.mxu0 0.0
    %659 = vmatprep.subr.mxu0 0.0
    %660 = vmatpush2.xpose.msra.mxu0 0.0
    %661 = vmatprep.subr.mxu0 0.0
    %662 = vmatpush2.xpose.msra.mxu0 0.0
    %663 = vmatprep.subr.mxu0 0.0
    %664 = vmatpush2.xpose.msra.mxu0 0.0
    %665 = vmatprep.subr.mxu0 0.0
    %666 = vmatpush2.xpose.msra.mxu0 0.0
    %667 = vmatprep.subr.mxu0 0.0
    %668 = vmatpush2.xpose.msra.mxu0 0.0
    %669 = vmatprep.subr.mxu0 0.0
    %670 = vmatpush2.xpose.msra.mxu0 0.0
    %671 = vmatprep.subr.mxu0 0.0
    %672 = vmatpush2.xpose.msra.mxu0 0.0
    %673 = vmatprep.subr.mxu0 0.0
    %674 = vmatpush2.xpose.msra.mxu0 0.0
    %675 = vmatprep.mubr.f32.mxu0 0.0
    %676 = vmatmul.mubr.f32.gmra.mxu0 %v607
    %v677 = vpop.f32.mrf.mxu0
    %v678 = vadd.f32 0.0, %v677
    %v679 = vpop.f32.mrf.mxu0
    %680 = vdwg.mxu0
    %681 = vrot.lane.b32.xlu0 %v369, 96
    %v682 = vpop.permute.xlu0 %681
    %v683 = vsel %vm378, %v369, 0
    %v685 = vsel %vm378, %v682, 0
    %687 = vmatprep.subr.mxu0 0.0
    %688 = vmatpush1.xpose.msra.mxu0 0.0
    %689 = vmatprep.subr.mxu0 0.0
    %690 = vmatpush1.xpose.msra.mxu0 0.0
    %691 = vmatprep.subr.mxu0 0.0
    %692 = vmatpush1.xpose.msra.mxu0 0.0
    %693 = vmatprep.subr.mxu0 0.0
    %694 = vmatpush1.xpose.msra.mxu0 0.0
    %695 = vmatprep.subr.mxu0 0.0
    %696 = vmatpush1.xpose.msra.mxu0 0.0
    %697 = vmatprep.subr.mxu0 0.0
    %698 = vmatpush1.xpose.msra.mxu0 0.0
    %699 = vmatprep.subr.mxu0 0.0
    %700 = vmatpush1.xpose.msra.mxu0 0.0
    %701 = vmatprep.subr.mxu0 0.0
    %702 = vmatpush1.xpose.msra.mxu0 0.0
    %703 = vmatprep.subr.mxu0 0.0
    %704 = vmatpush1.xpose.msra.mxu0 0.0
    %705 = vmatprep.subr.mxu0 0.0
    %706 = vmatpush1.xpose.msra.mxu0 0.0
    %707 = vmatprep.subr.mxu0 0.0
    %708 = vmatpush1.xpose.msra.mxu0 0.0
    %709 = vmatprep.subr.mxu0 0.0
    %710 = vmatpush1.xpose.msra.mxu0 0.0
    %711 = vmatprep.subr.mxu0 0.0
    %712 = vmatpush1.xpose.msra.mxu0 0.0
    %713 = vmatprep.subr.mxu0 0.0
    %714 = vmatpush1.xpose.msra.mxu0 0.0
    %715 = vmatprep.subr.mxu0 0.0
    %716 = vmatpush1.xpose.msra.mxu0 0.0
    %717 = vmatprep.subr.mxu0 0.0
    %718 = vmatpush1.xpose.msra.mxu0 %v685
    %719 = vmatprep.subr.mxu0 0.0
    %720 = vmatpush2.xpose.msra.mxu0 0.0
    %721 = vmatprep.subr.mxu0 0.0
    %722 = vmatpush2.xpose.msra.mxu0 0.0
    %723 = vmatprep.subr.mxu0 0.0
    %724 = vmatpush2.xpose.msra.mxu0 0.0
    %725 = vmatprep.subr.mxu0 0.0
    %726 = vmatpush2.xpose.msra.mxu0 0.0
    %727 = vmatprep.subr.mxu0 0.0
    %728 = vmatpush2.xpose.msra.mxu0 0.0
    %729 = vmatprep.subr.mxu0 0.0
    %730 = vmatpush2.xpose.msra.mxu0 0.0
    %731 = vmatprep.subr.mxu0 0.0
    %732 = vmatpush2.xpose.msra.mxu0 0.0
    %733 = vmatprep.subr.mxu0 0.0
    %734 = vmatpush2.xpose.msra.mxu0 0.0
    %735 = vmatprep.subr.mxu0 0.0
    %736 = vmatpush2.xpose.msra.mxu0 0.0
    %737 = vmatprep.subr.mxu0 0.0
    %738 = vmatpush2.xpose.msra.mxu0 0.0
    %739 = vmatprep.subr.mxu0 0.0
    %740 = vmatpush2.xpose.msra.mxu0 0.0
    %741 = vmatprep.subr.mxu0 0.0
    %742 = vmatpush2.xpose.msra.mxu0 0.0
    %743 = vmatprep.subr.mxu0 0.0
    %744 = vmatpush2.xpose.msra.mxu0 0.0
    %745 = vmatprep.subr.mxu0 0.0
    %746 = vmatpush2.xpose.msra.mxu0 0.0
    %747 = vmatprep.subr.mxu0 0.0
    %748 = vmatpush2.xpose.msra.mxu0 0.0
    %749 = vmatprep.subr.mxu0 0.0
    %750 = vmatpush2.xpose.msra.mxu0 0.0
    %751 = vmatprep.mubr.f32.mxu0 0.0
    %752 = vmatmul.mubr.f32.gmra.mxu0 %v683
    %v753 = vpop.f32.mrf.mxu0
    %v754 = vadd.f32 0.0, %v753
    %v755 = vpop.f32.mrf.mxu0
    %756 = vdwg.mxu0
    %757 = vrot.lane.b32.xlu0 %v371, 96
    %v758 = vpop.permute.xlu0 %757
    %v759 = vsel %vm378, %v371, 0
    %v761 = vsel %vm378, %v758, 0
    %763 = vmatprep.subr.mxu0 0.0
    %764 = vmatpush1.xpose.msra.mxu0 0.0
    %765 = vmatprep.subr.mxu0 0.0
    %766 = vmatpush1.xpose.msra.mxu0 0.0
    %767 = vmatprep.subr.mxu0 0.0
    %768 = vmatpush1.xpose.msra.mxu0 0.0
    %769 = vmatprep.subr.mxu0 0.0
    %770 = vmatpush1.xpose.msra.mxu0 0.0
    %771 = vmatprep.subr.mxu0 0.0
    %772 = vmatpush1.xpose.msra.mxu0 0.0
    %773 = vmatprep.subr.mxu0 0.0
    %774 = vmatpush1.xpose.msra.mxu0 0.0
    %775 = vmatprep.subr.mxu0 0.0
    %776 = vmatpush1.xpose.msra.mxu0 0.0
    %777 = vmatprep.subr.mxu0 0.0
    %778 = vmatpush1.xpose.msra.mxu0 0.0
    %779 = vmatprep.subr.mxu0 0.0
    %780 = vmatpush1.xpose.msra.mxu0 0.0
    %781 = vmatprep.subr.mxu0 0.0
    %782 = vmatpush1.xpose.msra.mxu0 0.0
    %783 = vmatprep.subr.mxu0 0.0
    %784 = vmatpush1.xpose.msra.mxu0 0.0
    %785 = vmatprep.subr.mxu0 0.0
    %786 = vmatpush1.xpose.msra.mxu0 0.0
    %787 = vmatprep.subr.mxu0 0.0
    %788 = vmatpush1.xpose.msra.mxu0 0.0
    %789 = vmatprep.subr.mxu0 0.0
    %790 = vmatpush1.xpose.msra.mxu0 0.0
    %791 = vmatprep.subr.mxu0 0.0
    %792 = vmatpush1.xpose.msra.mxu0 0.0
    %793 = vmatprep.subr.mxu0 0.0
    %794 = vmatpush1.xpose.msra.mxu0 %v761
    %795 = vmatprep.subr.mxu0 0.0
    %796 = vmatpush2.xpose.msra.mxu0 0.0
    %797 = vmatprep.subr.mxu0 0.0
    %798 = vmatpush2.xpose.msra.mxu0 0.0
    %799 = vmatprep.subr.mxu0 0.0
    %800 = vmatpush2.xpose.msra.mxu0 0.0
    %801 = vmatprep.subr.mxu0 0.0
    %802 = vmatpush2.xpose.msra.mxu0 0.0
    %803 = vmatprep.subr.mxu0 0.0
    %804 = vmatpush2.xpose.msra.mxu0 0.0
    %805 = vmatprep.subr.mxu0 0.0
    %806 = vmatpush2.xpose.msra.mxu0 0.0
    %807 = vmatprep.subr.mxu0 0.0
    %808 = vmatpush2.xpose.msra.mxu0 0.0
    %809 = vmatprep.subr.mxu0 0.0
    %810 = vmatpush2.xpose.msra.mxu0 0.0
    %811 = vmatprep.subr.mxu0 0.0
    %812 = vmatpush2.xpose.msra.mxu0 0.0
    %813 = vmatprep.subr.mxu0 0.0
    %814 = vmatpush2.xpose.msra.mxu0 0.0
    %815 = vmatprep.subr.mxu0 0.0
    %816 = vmatpush2.xpose.msra.mxu0 0.0
    %817 = vmatprep.subr.mxu0 0.0
    %818 = vmatpush2.xpose.msra.mxu0 0.0
    %819 = vmatprep.subr.mxu0 0.0
    %820 = vmatpush2.xpose.msra.mxu0 0.0
    %821 = vmatprep.subr.mxu0 0.0
    %822 = vmatpush2.xpose.msra.mxu0 0.0
    %823 = vmatprep.subr.mxu0 0.0
    %824 = vmatpush2.xpose.msra.mxu0 0.0
    %825 = vmatprep.subr.mxu0 0.0
    %826 = vmatpush2.xpose.msra.mxu0 0.0
    %827 = vmatprep.mubr.f32.mxu0 0.0
    %828 = vmatmul.mubr.f32.gmra.mxu0 %v759
    %v829 = vpop.f32.mrf.mxu0
    %v830 = vadd.f32 0.0, %v829
    %v831 = vpop.f32.mrf.mxu0
    %832 = vdwg.mxu0
    %833 = vrot.lane.b32.xlu0 %v373, 96
    %v834 = vpop.permute.xlu0 %833
    %v835 = vsel %vm378, %v373, 0
    %v837 = vsel %vm378, %v834, 0
    %839 = vmatprep.subr.mxu0 0.0
    %840 = vmatpush1.xpose.msra.mxu0 0.0
    %841 = vmatprep.subr.mxu0 0.0
    %842 = vmatpush1.xpose.msra.mxu0 0.0
    %843 = vmatprep.subr.mxu0 0.0
    %844 = vmatpush1.xpose.msra.mxu0 0.0
    %845 = vmatprep.subr.mxu0 0.0
    %846 = vmatpush1.xpose.msra.mxu0 0.0
    %847 = vmatprep.subr.mxu0 0.0
    %848 = vmatpush1.xpose.msra.mxu0 0.0
    %849 = vmatprep.subr.mxu0 0.0
    %850 = vmatpush1.xpose.msra.mxu0 0.0
    %851 = vmatprep.subr.mxu0 0.0
    %852 = vmatpush1.xpose.msra.mxu0 0.0
    %853 = vmatprep.subr.mxu0 0.0
    %854 = vmatpush1.xpose.msra.mxu0 0.0
    %855 = vmatprep.subr.mxu0 0.0
    %856 = vmatpush1.xpose.msra.mxu0 0.0
    %857 = vmatprep.subr.mxu0 0.0
    %858 = vmatpush1.xpose.msra.mxu0 0.0
    %859 = vmatprep.subr.mxu0 0.0
    %860 = vmatpush1.xpose.msra.mxu0 0.0
    %861 = vmatprep.subr.mxu0 0.0
    %862 = vmatpush1.xpose.msra.mxu0 0.0
    %863 = vmatprep.subr.mxu0 0.0
    %864 = vmatpush1.xpose.msra.mxu0 0.0
    %865 = vmatprep.subr.mxu0 0.0
    %866 = vmatpush1.xpose.msra.mxu0 0.0
    %867 = vmatprep.subr.mxu0 0.0
    %868 = vmatpush1.xpose.msra.mxu0 0.0
    %869 = vmatprep.subr.mxu0 0.0
    %870 = vmatpush1.xpose.msra.mxu0 %v837
    %871 = vmatprep.subr.mxu0 0.0
    %872 = vmatpush2.xpose.msra.mxu0 0.0
    %873 = vmatprep.subr.mxu0 0.0
    %874 = vmatpush2.xpose.msra.mxu0 0.0
    %875 = vmatprep.subr.mxu0 0.0
    %876 = vmatpush2.xpose.msra.mxu0 0.0
    %877 = vmatprep.subr.mxu0 0.0
    %878 = vmatpush2.xpose.msra.mxu0 0.0
    %879 = vmatprep.subr.mxu0 0.0
    %880 = vmatpush2.xpose.msra.mxu0 0.0
    %881 = vmatprep.subr.mxu0 0.0
    %882 = vmatpush2.xpose.msra.mxu0 0.0
    %883 = vmatprep.subr.mxu0 0.0
    %884 = vmatpush2.xpose.msra.mxu0 0.0
    %885 = vmatprep.subr.mxu0 0.0
    %886 = vmatpush2.xpose.msra.mxu0 0.0
    %887 = vmatprep.subr.mxu0 0.0
    %888 = vmatpush2.xpose.msra.mxu0 0.0
    %889 = vmatprep.subr.mxu0 0.0
    %890 = vmatpush2.xpose.msra.mxu0 0.0
    %891 = vmatprep.subr.mxu0 0.0
    %892 = vmatpush2.xpose.msra.mxu0 0.0
    %893 = vmatprep.subr.mxu0 0.0
    %894 = vmatpush2.xpose.msra.mxu0 0.0
    %895 = vmatprep.subr.mxu0 0.0
    %896 = vmatpush2.xpose.msra.mxu0 0.0
    %897 = vmatprep.subr.mxu0 0.0
    %898 = vmatpush2.xpose.msra.mxu0 0.0
    %899 = vmatprep.subr.mxu0 0.0
    %900 = vmatpush2.xpose.msra.mxu0 0.0
    %901 = vmatprep.subr.mxu0 0.0
    %902 = vmatpush2.xpose.msra.mxu0 0.0
    %903 = vmatprep.mubr.f32.mxu0 0.0
    %904 = vmatmul.mubr.f32.gmra.mxu0 %v835
    %v905 = vpop.f32.mrf.mxu0
    %v906 = vadd.f32 0.0, %v905
    %v907 = vpop.f32.mrf.mxu0
    %908 = vdwg.mxu0
    %909 = vrot.lane.b32.xlu0 %v375, 96
    %v910 = vpop.permute.xlu0 %909
    %v911 = vsel %vm378, %v375, 0
    %v913 = vsel %vm378, %v910, 0
    %915 = vmatprep.subr.mxu0 0.0
    %916 = vmatpush1.xpose.msra.mxu0 0.0
    %917 = vmatprep.subr.mxu0 0.0
    %918 = vmatpush1.xpose.msra.mxu0 0.0
    %919 = vmatprep.subr.mxu0 0.0
    %920 = vmatpush1.xpose.msra.mxu0 0.0
    %921 = vmatprep.subr.mxu0 0.0
    %922 = vmatpush1.xpose.msra.mxu0 0.0
    %923 = vmatprep.subr.mxu0 0.0
    %924 = vmatpush1.xpose.msra.mxu0 0.0
    %925 = vmatprep.subr.mxu0 0.0
    %926 = vmatpush1.xpose.msra.mxu0 0.0
    %927 = vmatprep.subr.mxu0 0.0
    %928 = vmatpush1.xpose.msra.mxu0 0.0
    %929 = vmatprep.subr.mxu0 0.0
    %930 = vmatpush1.xpose.msra.mxu0 0.0
    %931 = vmatprep.subr.mxu0 0.0
    %932 = vmatpush1.xpose.msra.mxu0 0.0
    %933 = vmatprep.subr.mxu0 0.0
    %934 = vmatpush1.xpose.msra.mxu0 0.0
    %935 = vmatprep.subr.mxu0 0.0
    %936 = vmatpush1.xpose.msra.mxu0 0.0
    %937 = vmatprep.subr.mxu0 0.0
    %938 = vmatpush1.xpose.msra.mxu0 0.0
    %939 = vmatprep.subr.mxu0 0.0
    %940 = vmatpush1.xpose.msra.mxu0 0.0
    %941 = vmatprep.subr.mxu0 0.0
    %942 = vmatpush1.xpose.msra.mxu0 0.0
    %943 = vmatprep.subr.mxu0 0.0
    %944 = vmatpush1.xpose.msra.mxu0 0.0
    %945 = vmatprep.subr.mxu0 0.0
    %946 = vmatpush1.xpose.msra.mxu0 %v913
    %947 = vmatprep.subr.mxu0 0.0
    %948 = vmatpush2.xpose.msra.mxu0 0.0
    %949 = vmatprep.subr.mxu0 0.0
    %950 = vmatpush2.xpose.msra.mxu0 0.0
    %951 = vmatprep.subr.mxu0 0.0
    %952 = vmatpush2.xpose.msra.mxu0 0.0
    %953 = vmatprep.subr.mxu0 0.0
    %954 = vmatpush2.xpose.msra.mxu0 0.0
    %955 = vmatprep.subr.mxu0 0.0
    %956 = vmatpush2.xpose.msra.mxu0 0.0
    %957 = vmatprep.subr.mxu0 0.0
    %958 = vmatpush2.xpose.msra.mxu0 0.0
    %959 = vmatprep.subr.mxu0 0.0
    %960 = vmatpush2.xpose.msra.mxu0 0.0
    %961 = vmatprep.subr.mxu0 0.0
    %962 = vmatpush2.xpose.msra.mxu0 0.0
    %963 = vmatprep.subr.mxu0 0.0
    %964 = vmatpush2.xpose.msra.mxu0 0.0
    %965 = vmatprep.subr.mxu0 0.0
    %966 = vmatpush2.xpose.msra.mxu0 0.0
    %967 = vmatprep.subr.mxu0 0.0
    %968 = vmatpush2.xpose.msra.mxu0 0.0
    %969 = vmatprep.subr.mxu0 0.0
    %970 = vmatpush2.xpose.msra.mxu0 0.0
    %971 = vmatprep.subr.mxu0 0.0
    %972 = vmatpush2.xpose.msra.mxu0 0.0
    %973 = vmatprep.subr.mxu0 0.0
    %974 = vmatpush2.xpose.msra.mxu0 0.0
    %975 = vmatprep.subr.mxu0 0.0
    %976 = vmatpush2.xpose.msra.mxu0 0.0
    %977 = vmatprep.subr.mxu0 0.0
    %978 = vmatpush2.xpose.msra.mxu0 0.0
    %979 = vmatprep.mubr.f32.mxu0 0.0
    %980 = vmatmul.mubr.f32.gmra.mxu0 %v911
    %v981 = vpop.f32.mrf.mxu0
    %v982 = vadd.f32 0.0, %v981
    %v983 = vpop.f32.mrf.mxu0
    %984 = vdwg.mxu0
    %v985 = vmul.f32 %v450, 0.35355338
    %v986 = vmul.f32 %v526, 0.35355338
    %v987 = vmul.f32 %v602, 0.35355338
    %v988 = vmul.f32 %v678, 0.35355338
    %v989 = vmul.f32 %v754, 0.35355338
    %v990 = vmul.f32 %v830, 0.35355338
    %v991 = vmul.f32 %v906, 0.35355338
    %v992 = vmul.f32 %v982, 0.35355338
    %v993 = vlaneseq
    %v994 = vshrl.u32 %v993, 7
    %v995 = vsub.s32 0, %v994
    %v996 = vrot.slane %v262, %v995
    %v997 = vlaneseq
    %v998 = vshrl.u32 %v997, 7
    %v999 = vsub.s32 0, %v998
    %v1000 = vrot.slane %v269, %v999
    %v1003 = vadd.f32 %v985, %v996
    %v1004 = vadd.f32 %v986, %v1000
    %v1005 = vadd.f32 %v987, %v996
    %v1006 = vadd.f32 %v988, %v1000
    %v1007 = vadd.f32 %v989, %v996
    %v1008 = vadd.f32 %v990, %v1000
    %v1009 = vadd.f32 %v991, %v996
    %v1010 = vadd.f32 %v992, %v1000
    %v1011 = vsel %vm378, %v1003, -inf
    %1012 = vmax.xlane.f32.xlu0 %v1011
    %v1013 = vpop.xlane.xlu0 %1012
    %v1014 = vsel %vm378, %v1004, -inf
    %1015 = vmax.xlane.f32.xlu0 %v1014
    %v1016 = vpop.xlane.xlu0 %1015
    %v1017 = vsel %vm378, %v1005, -inf
    %1018 = vmax.xlane.f32.xlu0 %v1017
    %v1019 = vpop.xlane.xlu0 %1018
    %v1020 = vsel %vm378, %v1006, -inf
    %1021 = vmax.xlane.f32.xlu0 %v1020
    %v1022 = vpop.xlane.xlu0 %1021
    %v1023 = vsel %vm378, %v1007, -inf
    %1024 = vmax.xlane.f32.xlu0 %v1023
    %v1025 = vpop.xlane.xlu0 %1024
    %v1026 = vsel %vm378, %v1008, -inf
    %1027 = vmax.xlane.f32.xlu0 %v1026
    %v1028 = vpop.xlane.xlu0 %1027
    %v1029 = vsel %vm378, %v1009, -inf
    %1030 = vmax.xlane.f32.xlu0 %v1029
    %v1031 = vpop.xlane.xlu0 %1030
    %v1032 = vsel %vm378, %v1010, -inf
    %1033 = vmax.xlane.f32.xlu0 %v1032
    %v1034 = vpop.xlane.xlu0 %1033
    %v1035 = vsub.f32 %v1003, %v1013
    %v1036 = vsub.f32 %v1004, %v1016
    %v1037 = vsub.f32 %v1005, %v1019
    %v1038 = vsub.f32 %v1006, %v1022
    %v1039 = vsub.f32 %v1007, %v1025
    %v1040 = vsub.f32 %v1008, %v1028
    %v1041 = vsub.f32 %v1009, %v1031
    %v1042 = vsub.f32 %v1010, %v1034
    %v1043 = vmul.f32 %v1035, 1.442695
    %v1044 = vpow.pop %v1043
    %v1045 = vmul.f32 %v1036, 1.442695
    %v1046 = vpow.pop %v1045
    %v1047 = vmul.f32 %v1037, 1.442695
    %v1048 = vpow.pop %v1047
    %v1049 = vmul.f32 %v1038, 1.442695
    %v1050 = vpow.pop %v1049
    %v1051 = vmul.f32 %v1039, 1.442695
    %v1052 = vpow.pop %v1051
    %v1053 = vmul.f32 %v1040, 1.442695
    %v1054 = vpow.pop %v1053
    %v1055 = vmul.f32 %v1041, 1.442695
    %v1056 = vpow.pop %v1055
    %v1057 = vmul.f32 %v1042, 1.442695
    %v1058 = vpow.pop %v1057
    %v1059 = vsel %vm378, %v1044, 0.0
    %1060 = vadd.xlane.f32.xlu0 %v1059
    %v1061 = vpop.xlane.xlu0 %1060
    %v1062 = vsel %vm378, %v1046, 0.0
    %1063 = vadd.xlane.f32.xlu0 %v1062
    %v1064 = vpop.xlane.xlu0 %1063
    %v1065 = vsel %vm378, %v1048, 0.0
    %1066 = vadd.xlane.f32.xlu0 %v1065
    %v1067 = vpop.xlane.xlu0 %1066
    %v1068 = vsel %vm378, %v1050, 0.0
    %1069 = vadd.xlane.f32.xlu0 %v1068
    %v1070 = vpop.xlane.xlu0 %1069
    %v1071 = vsel %vm378, %v1052, 0.0
    %1072 = vadd.xlane.f32.xlu0 %v1071
    %v1073 = vpop.xlane.xlu0 %1072
    %v1074 = vsel %vm378, %v1054, 0.0
    %1075 = vadd.xlane.f32.xlu0 %v1074
    %v1076 = vpop.xlane.xlu0 %1075
    %v1077 = vsel %vm378, %v1056, 0.0
    %1078 = vadd.xlane.f32.xlu0 %v1077
    %v1079 = vpop.xlane.xlu0 %1078
    %v1080 = vsel %vm378, %v1058, 0.0
    %1081 = vadd.xlane.f32.xlu0 %v1080
    %v1082 = vpop.xlane.xlu0 %1081
    %v1083 = vrcp.pop %v1061
    %v1084 = vrcp.pop %v1064
    %v1085 = vrcp.pop %v1067
    %v1086 = vrcp.pop %v1070
    %v1087 = vrcp.pop %v1073
    %v1088 = vrcp.pop %v1076
    %v1089 = vrcp.pop %v1079
    %v1090 = vrcp.pop %v1082
    %v1091 = vmul.f32 %v1044, %v1083
    %v1092 = vmul.f32 %v1046, %v1084
    %v1093 = vmul.f32 %v1048, %v1085
    %v1094 = vmul.f32 %v1050, %v1086
    %v1095 = vmul.f32 %v1052, %v1087
    %v1096 = vmul.f32 %v1054, %v1088
    %v1097 = vmul.f32 %v1056, %v1089
    %v1098 = vmul.f32 %v1058, %v1090
    %1099 = vrot.lane.b32.xlu0 %v354, 64
    %v1100 = vpop.permute.xlu0 %1099
    %v1103 = vsel %vm378, %v1091, 0
    %1105 = vmatprep.subr.mxu0 0.0
    %1106 = vmatpush1.msra.mxu0 0.0
    %1107 = vmatprep.subr.mxu0 0.0
    %1108 = vmatpush1.msra.mxu0 0.0
    %1109 = vmatprep.subr.mxu0 0.0
    %1110 = vmatpush1.msra.mxu0 0.0
    %1111 = vmatprep.subr.mxu0 0.0
    %1112 = vmatpush1.msra.mxu0 0.0
    %1113 = vmatprep.subr.mxu0 0.0
    %1114 = vmatpush1.msra.mxu0 0.0
    %1115 = vmatprep.subr.mxu0 0.0
    %1116 = vmatpush1.msra.mxu0 0.0
    %1117 = vmatprep.subr.mxu0 0.0
    %1118 = vmatpush1.msra.mxu0 0.0
    %1119 = vmatprep.subr.mxu0 0.0
    %1120 = vmatpush1.msra.mxu0 0.0
    %1121 = vmatprep.subr.mxu0 0.0
    %1122 = vmatpush1.msra.mxu0 0.0
    %1123 = vmatprep.subr.mxu0 0.0
    %1124 = vmatpush1.msra.mxu0 0.0
    %1125 = vmatprep.subr.mxu0 0.0
    %1126 = vmatpush1.msra.mxu0 0.0
    %1127 = vmatprep.subr.mxu0 0.0
    %1128 = vmatpush1.msra.mxu0 0.0
    %1129 = vmatprep.subr.mxu0 0.0
    %1130 = vmatpush1.msra.mxu0 0.0
    %1131 = vmatprep.subr.mxu0 0.0
    %1132 = vmatpush1.msra.mxu0 0.0
    %1133 = vmatprep.subr.mxu0 0.0
    %1134 = vmatpush1.msra.mxu0 0.0
    %1135 = vmatprep.subr.mxu0 0.0
    %1136 = vmatpush1.msra.mxu0 %v1100
    %1137 = vmatprep.subr.mxu0 0.0
    %1138 = vmatpush2.msra.mxu0 0.0
    %1139 = vmatprep.subr.mxu0 0.0
    %1140 = vmatpush2.msra.mxu0 0.0
    %1141 = vmatprep.subr.mxu0 0.0
    %1142 = vmatpush2.msra.mxu0 0.0
    %1143 = vmatprep.subr.mxu0 0.0
    %1144 = vmatpush2.msra.mxu0 0.0
    %1145 = vmatprep.subr.mxu0 0.0
    %1146 = vmatpush2.msra.mxu0 0.0
    %1147 = vmatprep.subr.mxu0 0.0
    %1148 = vmatpush2.msra.mxu0 0.0
    %1149 = vmatprep.subr.mxu0 0.0
    %1150 = vmatpush2.msra.mxu0 0.0
    %1151 = vmatprep.subr.mxu0 0.0
    %1152 = vmatpush2.msra.mxu0 0.0
    %1153 = vmatprep.subr.mxu0 0.0
    %1154 = vmatpush2.msra.mxu0 0.0
    %1155 = vmatprep.subr.mxu0 0.0
    %1156 = vmatpush2.msra.mxu0 0.0
    %1157 = vmatprep.subr.mxu0 0.0
    %1158 = vmatpush2.msra.mxu0 0.0
    %1159 = vmatprep.subr.mxu0 0.0
    %1160 = vmatpush2.msra.mxu0 0.0
    %1161 = vmatprep.subr.mxu0 0.0
    %1162 = vmatpush2.msra.mxu0 0.0
    %1163 = vmatprep.subr.mxu0 0.0
    %1164 = vmatpush2.msra.mxu0 0.0
    %1165 = vmatprep.subr.mxu0 0.0
    %1166 = vmatpush2.msra.mxu0 0.0
    %1167 = vmatprep.subr.mxu0 0.0
    %1168 = vmatpush2.msra.mxu0 0.0
    %1169 = vmatprep.mubr.f32.mxu0 0.0
    %1170 = vmatmul.mubr.f32.gmra.mxu0 %v1103
    %v1171 = vpop.f32.mrf.mxu0
    %v1172 = vadd.f32 0.0, %v1171
    %v1173 = vpop.f32.mrf.mxu0
    %1174 = vdwg.mxu0
    %1175 = vrot.lane.b32.xlu0 %v359, 64
    %v1176 = vpop.permute.xlu0 %1175
    %v1179 = vsel %vm378, %v1092, 0
    %1181 = vmatprep.subr.mxu0 0.0
    %1182 = vmatpush1.msra.mxu0 0.0
    %1183 = vmatprep.subr.mxu0 0.0
    %1184 = vmatpush1.msra.mxu0 0.0
    %1185 = vmatprep.subr.mxu0 0.0
    %1186 = vmatpush1.msra.mxu0 0.0
    %1187 = vmatprep.subr.mxu0 0.0
    %1188 = vmatpush1.msra.mxu0 0.0
    %1189 = vmatprep.subr.mxu0 0.0
    %1190 = vmatpush1.msra.mxu0 0.0
    %1191 = vmatprep.subr.mxu0 0.0
    %1192 = vmatpush1.msra.mxu0 0.0
    %1193 = vmatprep.subr.mxu0 0.0
    %1194 = vmatpush1.msra.mxu0 0.0
    %1195 = vmatprep.subr.mxu0 0.0
    %1196 = vmatpush1.msra.mxu0 0.0
    %1197 = vmatprep.subr.mxu0 0.0
    %1198 = vmatpush1.msra.mxu0 0.0
    %1199 = vmatprep.subr.mxu0 0.0
    %1200 = vmatpush1.msra.mxu0 0.0
    %1201 = vmatprep.subr.mxu0 0.0
    %1202 = vmatpush1.msra.mxu0 0.0
    %1203 = vmatprep.subr.mxu0 0.0
    %1204 = vmatpush1.msra.mxu0 0.0
    %1205 = vmatprep.subr.mxu0 0.0
    %1206 = vmatpush1.msra.mxu0 0.0
    %1207 = vmatprep.subr.mxu0 0.0
    %1208 = vmatpush1.msra.mxu0 0.0
    %1209 = vmatprep.subr.mxu0 0.0
    %1210 = vmatpush1.msra.mxu0 0.0
    %1211 = vmatprep.subr.mxu0 0.0
    %1212 = vmatpush1.msra.mxu0 %v1176
    %1213 = vmatprep.subr.mxu0 0.0
    %1214 = vmatpush2.msra.mxu0 0.0
    %1215 = vmatprep.subr.mxu0 0.0
    %1216 = vmatpush2.msra.mxu0 0.0
    %1217 = vmatprep.subr.mxu0 0.0
    %1218 = vmatpush2.msra.mxu0 0.0
    %1219 = vmatprep.subr.mxu0 0.0
    %1220 = vmatpush2.msra.mxu0 0.0
    %1221 = vmatprep.subr.mxu0 0.0
    %1222 = vmatpush2.msra.mxu0 0.0
    %1223 = vmatprep.subr.mxu0 0.0
    %1224 = vmatpush2.msra.mxu0 0.0
    %1225 = vmatprep.subr.mxu0 0.0
    %1226 = vmatpush2.msra.mxu0 0.0
    %1227 = vmatprep.subr.mxu0 0.0
    %1228 = vmatpush2.msra.mxu0 0.0
    %1229 = vmatprep.subr.mxu0 0.0
    %1230 = vmatpush2.msra.mxu0 0.0
    %1231 = vmatprep.subr.mxu0 0.0
    %1232 = vmatpush2.msra.mxu0 0.0
    %1233 = vmatprep.subr.mxu0 0.0
    %1234 = vmatpush2.msra.mxu0 0.0
    %1235 = vmatprep.subr.mxu0 0.0
    %1236 = vmatpush2.msra.mxu0 0.0
    %1237 = vmatprep.subr.mxu0 0.0
    %1238 = vmatpush2.msra.mxu0 0.0
    %1239 = vmatprep.subr.mxu0 0.0
    %1240 = vmatpush2.msra.mxu0 0.0
    %1241 = vmatprep.subr.mxu0 0.0
    %1242 = vmatpush2.msra.mxu0 0.0
    %1243 = vmatprep.subr.mxu0 0.0
    %1244 = vmatpush2.msra.mxu0 0.0
    %1245 = vmatprep.mubr.f32.mxu0 0.0
    %1246 = vmatmul.mubr.f32.gmra.mxu0 %v1179
    %v1247 = vpop.f32.mrf.mxu0
    %v1248 = vadd.f32 0.0, %v1247
    %v1249 = vpop.f32.mrf.mxu0
    %1250 = vdwg.mxu0
    %1251 = vrot.lane.b32.xlu0 %v365, 64
    %v1252 = vpop.permute.xlu0 %1251
    %v1255 = vsel %vm378, %v1093, 0
    %1257 = vmatprep.subr.mxu0 0.0
    %1258 = vmatpush1.msra.mxu0 0.0
    %1259 = vmatprep.subr.mxu0 0.0
    %1260 = vmatpush1.msra.mxu0 0.0
    %1261 = vmatprep.subr.mxu0 0.0
    %1262 = vmatpush1.msra.mxu0 0.0
    %1263 = vmatprep.subr.mxu0 0.0
    %1264 = vmatpush1.msra.mxu0 0.0
    %1265 = vmatprep.subr.mxu0 0.0
    %1266 = vmatpush1.msra.mxu0 0.0
    %1267 = vmatprep.subr.mxu0 0.0
    %1268 = vmatpush1.msra.mxu0 0.0
    %1269 = vmatprep.subr.mxu0 0.0
    %1270 = vmatpush1.msra.mxu0 0.0
    %1271 = vmatprep.subr.mxu0 0.0
    %1272 = vmatpush1.msra.mxu0 0.0
    %1273 = vmatprep.subr.mxu0 0.0
    %1274 = vmatpush1.msra.mxu0 0.0
    %1275 = vmatprep.subr.mxu0 0.0
    %1276 = vmatpush1.msra.mxu0 0.0
    %1277 = vmatprep.subr.mxu0 0.0
    %1278 = vmatpush1.msra.mxu0 0.0
    %1279 = vmatprep.subr.mxu0 0.0
    %1280 = vmatpush1.msra.mxu0 0.0
    %1281 = vmatprep.subr.mxu0 0.0
    %1282 = vmatpush1.msra.mxu0 0.0
    %1283 = vmatprep.subr.mxu0 0.0
    %1284 = vmatpush1.msra.mxu0 0.0
    %1285 = vmatprep.subr.mxu0 0.0
    %1286 = vmatpush1.msra.mxu0 0.0
    %1287 = vmatprep.subr.mxu0 0.0
    %1288 = vmatpush1.msra.mxu0 %v1252
    %1289 = vmatprep.subr.mxu0 0.0
    %1290 = vmatpush2.msra.mxu0 0.0
    %1291 = vmatprep.subr.mxu0 0.0
    %1292 = vmatpush2.msra.mxu0 0.0
    %1293 = vmatprep.subr.mxu0 0.0
    %1294 = vmatpush2.msra.mxu0 0.0
    %1295 = vmatprep.subr.mxu0 0.0
    %1296 = vmatpush2.msra.mxu0 0.0
    %1297 = vmatprep.subr.mxu0 0.0
    %1298 = vmatpush2.msra.mxu0 0.0
    %1299 = vmatprep.subr.mxu0 0.0
    %1300 = vmatpush2.msra.mxu0 0.0
    %1301 = vmatprep.subr.mxu0 0.0
    %1302 = vmatpush2.msra.mxu0 0.0
    %1303 = vmatprep.subr.mxu0 0.0
    %1304 = vmatpush2.msra.mxu0 0.0
    %1305 = vmatprep.subr.mxu0 0.0
    %1306 = vmatpush2.msra.mxu0 0.0
    %1307 = vmatprep.subr.mxu0 0.0
    %1308 = vmatpush2.msra.mxu0 0.0
    %1309 = vmatprep.subr.mxu0 0.0
    %1310 = vmatpush2.msra.mxu0 0.0
    %1311 = vmatprep.subr.mxu0 0.0
    %1312 = vmatpush2.msra.mxu0 0.0
    %1313 = vmatprep.subr.mxu0 0.0
    %1314 = vmatpush2.msra.mxu0 0.0
    %1315 = vmatprep.subr.mxu0 0.0
    %1316 = vmatpush2.msra.mxu0 0.0
    %1317 = vmatprep.subr.mxu0 0.0
    %1318 = vmatpush2.msra.mxu0 0.0
    %1319 = vmatprep.subr.mxu0 0.0
    %1320 = vmatpush2.msra.mxu0 0.0
    %1321 = vmatprep.mubr.f32.mxu0 0.0
    %1322 = vmatmul.mubr.f32.gmra.mxu0 %v1255
    %v1323 = vpop.f32.mrf.mxu0
    %v1324 = vadd.f32 0.0, %v1323
    %v1325 = vpop.f32.mrf.mxu0
    %1326 = vdwg.mxu0
    %1327 = vrot.lane.b32.xlu0 %v367, 64
    %v1328 = vpop.permute.xlu0 %1327
    %v1331 = vsel %vm378, %v1094, 0
    %1333 = vmatprep.subr.mxu0 0.0
    %1334 = vmatpush1.msra.mxu0 0.0
    %1335 = vmatprep.subr.mxu0 0.0
    %1336 = vmatpush1.msra.mxu0 0.0
    %1337 = vmatprep.subr.mxu0 0.0
    %1338 = vmatpush1.msra.mxu0 0.0
    %1339 = vmatprep.subr.mxu0 0.0
    %1340 = vmatpush1.msra.mxu0 0.0
    %1341 = vmatprep.subr.mxu0 0.0
    %1342 = vmatpush1.msra.mxu0 0.0
    %1343 = vmatprep.subr.mxu0 0.0
    %1344 = vmatpush1.msra.mxu0 0.0
    %1345 = vmatprep.subr.mxu0 0.0
    %1346 = vmatpush1.msra.mxu0 0.0
    %1347 = vmatprep.subr.mxu0 0.0
    %1348 = vmatpush1.msra.mxu0 0.0
    %1349 = vmatprep.subr.mxu0 0.0
    %1350 = vmatpush1.msra.mxu0 0.0
    %1351 = vmatprep.subr.mxu0 0.0
    %1352 = vmatpush1.msra.mxu0 0.0
    %1353 = vmatprep.subr.mxu0 0.0
    %1354 = vmatpush1.msra.mxu0 0.0
    %1355 = vmatprep.subr.mxu0 0.0
    %1356 = vmatpush1.msra.mxu0 0.0
    %1357 = vmatprep.subr.mxu0 0.0
    %1358 = vmatpush1.msra.mxu0 0.0
    %1359 = vmatprep.subr.mxu0 0.0
    %1360 = vmatpush1.msra.mxu0 0.0
    %1361 = vmatprep.subr.mxu0 0.0
    %1362 = vmatpush1.msra.mxu0 0.0
    %1363 = vmatprep.subr.mxu0 0.0
    %1364 = vmatpush1.msra.mxu0 %v1328
    %1365 = vmatprep.subr.mxu0 0.0
    %1366 = vmatpush2.msra.mxu0 0.0
    %1367 = vmatprep.subr.mxu0 0.0
    %1368 = vmatpush2.msra.mxu0 0.0
    %1369 = vmatprep.subr.mxu0 0.0
    %1370 = vmatpush2.msra.mxu0 0.0
    %1371 = vmatprep.subr.mxu0 0.0
    %1372 = vmatpush2.msra.mxu0 0.0
    %1373 = vmatprep.subr.mxu0 0.0
    %1374 = vmatpush2.msra.mxu0 0.0
    %1375 = vmatprep.subr.mxu0 0.0
    %1376 = vmatpush2.msra.mxu0 0.0
    %1377 = vmatprep.subr.mxu0 0.0
    %1378 = vmatpush2.msra.mxu0 0.0
    %1379 = vmatprep.subr.mxu0 0.0
    %1380 = vmatpush2.msra.mxu0 0.0
    %1381 = vmatprep.subr.mxu0 0.0
    %1382 = vmatpush2.msra.mxu0 0.0
    %1383 = vmatprep.subr.mxu0 0.0
    %1384 = vmatpush2.msra.mxu0 0.0
    %1385 = vmatprep.subr.mxu0 0.0
    %1386 = vmatpush2.msra.mxu0 0.0
    %1387 = vmatprep.subr.mxu0 0.0
    %1388 = vmatpush2.msra.mxu0 0.0
    %1389 = vmatprep.subr.mxu0 0.0
    %1390 = vmatpush2.msra.mxu0 0.0
    %1391 = vmatprep.subr.mxu0 0.0
    %1392 = vmatpush2.msra.mxu0 0.0
    %1393 = vmatprep.subr.mxu0 0.0
    %1394 = vmatpush2.msra.mxu0 0.0
    %1395 = vmatprep.subr.mxu0 0.0
    %1396 = vmatpush2.msra.mxu0 0.0
    %1397 = vmatprep.mubr.f32.mxu0 0.0
    %1398 = vmatmul.mubr.f32.gmra.mxu0 %v1331
    %v1399 = vpop.f32.mrf.mxu0
    %v1400 = vadd.f32 0.0, %v1399
    %v1401 = vpop.f32.mrf.mxu0
    %1402 = vdwg.mxu0
    %1403 = vrot.lane.b32.xlu0 %v369, 64
    %v1404 = vpop.permute.xlu0 %1403
    %v1407 = vsel %vm378, %v1095, 0
    %1409 = vmatprep.subr.mxu0 0.0
    %1410 = vmatpush1.msra.mxu0 0.0
    %1411 = vmatprep.subr.mxu0 0.0
    %1412 = vmatpush1.msra.mxu0 0.0
    %1413 = vmatprep.subr.mxu0 0.0
    %1414 = vmatpush1.msra.mxu0 0.0
    %1415 = vmatprep.subr.mxu0 0.0
    %1416 = vmatpush1.msra.mxu0 0.0
    %1417 = vmatprep.subr.mxu0 0.0
    %1418 = vmatpush1.msra.mxu0 0.0
    %1419 = vmatprep.subr.mxu0 0.0
    %1420 = vmatpush1.msra.mxu0 0.0
    %1421 = vmatprep.subr.mxu0 0.0
    %1422 = vmatpush1.msra.mxu0 0.0
    %1423 = vmatprep.subr.mxu0 0.0
    %1424 = vmatpush1.msra.mxu0 0.0
    %1425 = vmatprep.subr.mxu0 0.0
    %1426 = vmatpush1.msra.mxu0 0.0
    %1427 = vmatprep.subr.mxu0 0.0
    %1428 = vmatpush1.msra.mxu0 0.0
    %1429 = vmatprep.subr.mxu0 0.0
    %1430 = vmatpush1.msra.mxu0 0.0
    %1431 = vmatprep.subr.mxu0 0.0
    %1432 = vmatpush1.msra.mxu0 0.0
    %1433 = vmatprep.subr.mxu0 0.0
    %1434 = vmatpush1.msra.mxu0 0.0
    %1435 = vmatprep.subr.mxu0 0.0
    %1436 = vmatpush1.msra.mxu0 0.0
    %1437 = vmatprep.subr.mxu0 0.0
    %1438 = vmatpush1.msra.mxu0 0.0
    %1439 = vmatprep.subr.mxu0 0.0
    %1440 = vmatpush1.msra.mxu0 %v1404
    %1441 = vmatprep.subr.mxu0 0.0
    %1442 = vmatpush2.msra.mxu0 0.0
    %1443 = vmatprep.subr.mxu0 0.0
    %1444 = vmatpush2.msra.mxu0 0.0
    %1445 = vmatprep.subr.mxu0 0.0
    %1446 = vmatpush2.msra.mxu0 0.0
    %1447 = vmatprep.subr.mxu0 0.0
    %1448 = vmatpush2.msra.mxu0 0.0
    %1449 = vmatprep.subr.mxu0 0.0
    %1450 = vmatpush2.msra.mxu0 0.0
    %1451 = vmatprep.subr.mxu0 0.0
    %1452 = vmatpush2.msra.mxu0 0.0
    %1453 = vmatprep.subr.mxu0 0.0
    %1454 = vmatpush2.msra.mxu0 0.0
    %1455 = vmatprep.subr.mxu0 0.0
    %1456 = vmatpush2.msra.mxu0 0.0
    %1457 = vmatprep.subr.mxu0 0.0
    %1458 = vmatpush2.msra.mxu0 0.0
    %1459 = vmatprep.subr.mxu0 0.0
    %1460 = vmatpush2.msra.mxu0 0.0
    %1461 = vmatprep.subr.mxu0 0.0
    %1462 = vmatpush2.msra.mxu0 0.0
    %1463 = vmatprep.subr.mxu0 0.0
    %1464 = vmatpush2.msra.mxu0 0.0
    %1465 = vmatprep.subr.mxu0 0.0
    %1466 = vmatpush2.msra.mxu0 0.0
    %1467 = vmatprep.subr.mxu0 0.0
    %1468 = vmatpush2.msra.mxu0 0.0
    %1469 = vmatprep.subr.mxu0 0.0
    %1470 = vmatpush2.msra.mxu0 0.0
    %1471 = vmatprep.subr.mxu0 0.0
    %1472 = vmatpush2.msra.mxu0 0.0
    %1473 = vmatprep.mubr.f32.mxu0 0.0
    %1474 = vmatmul.mubr.f32.gmra.mxu0 %v1407
    %v1475 = vpop.f32.mrf.mxu0
    %v1476 = vadd.f32 0.0, %v1475
    %v1477 = vpop.f32.mrf.mxu0
    %1478 = vdwg.mxu0
    %1479 = vrot.lane.b32.xlu0 %v371, 64
    %v1480 = vpop.permute.xlu0 %1479
    %v1483 = vsel %vm378, %v1096, 0
    %1485 = vmatprep.subr.mxu0 0.0
    %1486 = vmatpush1.msra.mxu0 0.0
    %1487 = vmatprep.subr.mxu0 0.0
    %1488 = vmatpush1.msra.mxu0 0.0
    %1489 = vmatprep.subr.mxu0 0.0
    %1490 = vmatpush1.msra.mxu0 0.0
    %1491 = vmatprep.subr.mxu0 0.0
    %1492 = vmatpush1.msra.mxu0 0.0
    %1493 = vmatprep.subr.mxu0 0.0
    %1494 = vmatpush1.msra.mxu0 0.0
    %1495 = vmatprep.subr.mxu0 0.0
    %1496 = vmatpush1.msra.mxu0 0.0
    %1497 = vmatprep.subr.mxu0 0.0
    %1498 = vmatpush1.msra.mxu0 0.0
    %1499 = vmatprep.subr.mxu0 0.0
    %1500 = vmatpush1.msra.mxu0 0.0
    %1501 = vmatprep.subr.mxu0 0.0
    %1502 = vmatpush1.msra.mxu0 0.0
    %1503 = vmatprep.subr.mxu0 0.0
    %1504 = vmatpush1.msra.mxu0 0.0
    %1505 = vmatprep.subr.mxu0 0.0
    %1506 = vmatpush1.msra.mxu0 0.0
    %1507 = vmatprep.subr.mxu0 0.0
    %1508 = vmatpush1.msra.mxu0 0.0
    %1509 = vmatprep.subr.mxu0 0.0
    %1510 = vmatpush1.msra.mxu0 0.0
    %1511 = vmatprep.subr.mxu0 0.0
    %1512 = vmatpush1.msra.mxu0 0.0
    %1513 = vmatprep.subr.mxu0 0.0
    %1514 = vmatpush1.msra.mxu0 0.0
    %1515 = vmatprep.subr.mxu0 0.0
    %1516 = vmatpush1.msra.mxu0 %v1480
    %1517 = vmatprep.subr.mxu0 0.0
    %1518 = vmatpush2.msra.mxu0 0.0
    %1519 = vmatprep.subr.mxu0 0.0
    %1520 = vmatpush2.msra.mxu0 0.0
    %1521 = vmatprep.subr.mxu0 0.0
    %1522 = vmatpush2.msra.mxu0 0.0
    %1523 = vmatprep.subr.mxu0 0.0
    %1524 = vmatpush2.msra.mxu0 0.0
    %1525 = vmatprep.subr.mxu0 0.0
    %1526 = vmatpush2.msra.mxu0 0.0
    %1527 = vmatprep.subr.mxu0 0.0
    %1528 = vmatpush2.msra.mxu0 0.0
    %1529 = vmatprep.subr.mxu0 0.0
    %1530 = vmatpush2.msra.mxu0 0.0
    %1531 = vmatprep.subr.mxu0 0.0
    %1532 = vmatpush2.msra.mxu0 0.0
    %1533 = vmatprep.subr.mxu0 0.0
    %1534 = vmatpush2.msra.mxu0 0.0
    %1535 = vmatprep.subr.mxu0 0.0
    %1536 = vmatpush2.msra.mxu0 0.0
    %1537 = vmatprep.subr.mxu0 0.0
    %1538 = vmatpush2.msra.mxu0 0.0
    %1539 = vmatprep.subr.mxu0 0.0
    %1540 = vmatpush2.msra.mxu0 0.0
    %1541 = vmatprep.subr.mxu0 0.0
    %1542 = vmatpush2.msra.mxu0 0.0
    %1543 = vmatprep.subr.mxu0 0.0
    %1544 = vmatpush2.msra.mxu0 0.0
    %1545 = vmatprep.subr.mxu0 0.0
    %1546 = vmatpush2.msra.mxu0 0.0
    %1547 = vmatprep.subr.mxu0 0.0
    %1548 = vmatpush2.msra.mxu0 0.0
    %1549 = vmatprep.mubr.f32.mxu0 0.0
    %1550 = vmatmul.mubr.f32.gmra.mxu0 %v1483
    %v1551 = vpop.f32.mrf.mxu0
    %v1552 = vadd.f32 0.0, %v1551
    %v1553 = vpop.f32.mrf.mxu0
    %1554 = vdwg.mxu0
    %1555 = vrot.lane.b32.xlu0 %v373, 64
    %v1556 = vpop.permute.xlu0 %1555
    %v1559 = vsel %vm378, %v1097, 0
    %1561 = vmatprep.subr.mxu0 0.0
    %1562 = vmatpush1.msra.mxu0 0.0
    %1563 = vmatprep.subr.mxu0 0.0
    %1564 = vmatpush1.msra.mxu0 0.0
    %1565 = vmatprep.subr.mxu0 0.0
    %1566 = vmatpush1.msra.mxu0 0.0
    %1567 = vmatprep.subr.mxu0 0.0
    %1568 = vmatpush1.msra.mxu0 0.0
    %1569 = vmatprep.subr.mxu0 0.0
    %1570 = vmatpush1.msra.mxu0 0.0
    %1571 = vmatprep.subr.mxu0 0.0
    %1572 = vmatpush1.msra.mxu0 0.0
    %1573 = vmatprep.subr.mxu0 0.0
    %1574 = vmatpush1.msra.mxu0 0.0
    %1575 = vmatprep.subr.mxu0 0.0
    %1576 = vmatpush1.msra.mxu0 0.0
    %1577 = vmatprep.subr.mxu0 0.0
    %1578 = vmatpush1.msra.mxu0 0.0
    %1579 = vmatprep.subr.mxu0 0.0
    %1580 = vmatpush1.msra.mxu0 0.0
    %1581 = vmatprep.subr.mxu0 0.0
    %1582 = vmatpush1.msra.mxu0 0.0
    %1583 = vmatprep.subr.mxu0 0.0
    %1584 = vmatpush1.msra.mxu0 0.0
    %1585 = vmatprep.subr.mxu0 0.0
    %1586 = vmatpush1.msra.mxu0 0.0
    %1587 = vmatprep.subr.mxu0 0.0
    %1588 = vmatpush1.msra.mxu0 0.0
    %1589 = vmatprep.subr.mxu0 0.0
    %1590 = vmatpush1.msra.mxu0 0.0
    %1591 = vmatprep.subr.mxu0 0.0
    %1592 = vmatpush1.msra.mxu0 %v1556
    %1593 = vmatprep.subr.mxu0 0.0
    %1594 = vmatpush2.msra.mxu0 0.0
    %1595 = vmatprep.subr.mxu0 0.0
    %1596 = vmatpush2.msra.mxu0 0.0
    %1597 = vmatprep.subr.mxu0 0.0
    %1598 = vmatpush2.msra.mxu0 0.0
    %1599 = vmatprep.subr.mxu0 0.0
    %1600 = vmatpush2.msra.mxu0 0.0
    %1601 = vmatprep.subr.mxu0 0.0
    %1602 = vmatpush2.msra.mxu0 0.0
    %1603 = vmatprep.subr.mxu0 0.0
    %1604 = vmatpush2.msra.mxu0 0.0
    %1605 = vmatprep.subr.mxu0 0.0
    %1606 = vmatpush2.msra.mxu0 0.0
    %1607 = vmatprep.subr.mxu0 0.0
    %1608 = vmatpush2.msra.mxu0 0.0
    %1609 = vmatprep.subr.mxu0 0.0
    %1610 = vmatpush2.msra.mxu0 0.0
    %1611 = vmatprep.subr.mxu0 0.0
    %1612 = vmatpush2.msra.mxu0 0.0
    %1613 = vmatprep.subr.mxu0 0.0
    %1614 = vmatpush2.msra.mxu0 0.0
    %1615 = vmatprep.subr.mxu0 0.0
    %1616 = vmatpush2.msra.mxu0 0.0
    %1617 = vmatprep.subr.mxu0 0.0
    %1618 = vmatpush2.msra.mxu0 0.0
    %1619 = vmatprep.subr.mxu0 0.0
    %1620 = vmatpush2.msra.mxu0 0.0
    %1621 = vmatprep.subr.mxu0 0.0
    %1622 = vmatpush2.msra.mxu0 0.0
    %1623 = vmatprep.subr.mxu0 0.0
    %1624 = vmatpush2.msra.mxu0 0.0
    %1625 = vmatprep.mubr.f32.mxu0 0.0
    %1626 = vmatmul.mubr.f32.gmra.mxu0 %v1559
    %v1627 = vpop.f32.mrf.mxu0
    %v1628 = vadd.f32 0.0, %v1627
    %v1629 = vpop.f32.mrf.mxu0
    %1630 = vdwg.mxu0
    %1631 = vrot.lane.b32.xlu0 %v375, 64
    %v1632 = vpop.permute.xlu0 %1631
    %v1635 = vsel %vm378, %v1098, 0
    %1637 = vmatprep.subr.mxu0 0.0
    %1638 = vmatpush1.msra.mxu0 0.0
    %1639 = vmatprep.subr.mxu0 0.0
    %1640 = vmatpush1.msra.mxu0 0.0
    %1641 = vmatprep.subr.mxu0 0.0
    %1642 = vmatpush1.msra.mxu0 0.0
    %1643 = vmatprep.subr.mxu0 0.0
    %1644 = vmatpush1.msra.mxu0 0.0
    %1645 = vmatprep.subr.mxu0 0.0
    %1646 = vmatpush1.msra.mxu0 0.0
    %1647 = vmatprep.subr.mxu0 0.0
    %1648 = vmatpush1.msra.mxu0 0.0
    %1649 = vmatprep.subr.mxu0 0.0
    %1650 = vmatpush1.msra.mxu0 0.0
    %1651 = vmatprep.subr.mxu0 0.0
    %1652 = vmatpush1.msra.mxu0 0.0
    %1653 = vmatprep.subr.mxu0 0.0
    %1654 = vmatpush1.msra.mxu0 0.0
    %1655 = vmatprep.subr.mxu0 0.0
    %1656 = vmatpush1.msra.mxu0 0.0
    %1657 = vmatprep.subr.mxu0 0.0
    %1658 = vmatpush1.msra.mxu0 0.0
    %1659 = vmatprep.subr.mxu0 0.0
    %1660 = vmatpush1.msra.mxu0 0.0
    %1661 = vmatprep.subr.mxu0 0.0
    %1662 = vmatpush1.msra.mxu0 0.0
    %1663 = vmatprep.subr.mxu0 0.0
    %1664 = vmatpush1.msra.mxu0 0.0
    %1665 = vmatprep.subr.mxu0 0.0
    %1666 = vmatpush1.msra.mxu0 0.0
    %1667 = vmatprep.subr.mxu0 0.0
    %1668 = vmatpush1.msra.mxu0 %v1632
    %1669 = vmatprep.subr.mxu0 0.0
    %1670 = vmatpush2.msra.mxu0 0.0
    %1671 = vmatprep.subr.mxu0 0.0
    %1672 = vmatpush2.msra.mxu0 0.0
    %1673 = vmatprep.subr.mxu0 0.0
    %1674 = vmatpush2.msra.mxu0 0.0
    %1675 = vmatprep.subr.mxu0 0.0
    %1676 = vmatpush2.msra.mxu0 0.0
    %1677 = vmatprep.subr.mxu0 0.0
    %1678 = vmatpush2.msra.mxu0 0.0
    %1679 = vmatprep.subr.mxu0 0.0
    %1680 = vmatpush2.msra.mxu0 0.0
    %1681 = vmatprep.subr.mxu0 0.0
    %1682 = vmatpush2.msra.mxu0 0.0
    %1683 = vmatprep.subr.mxu0 0.0
    %1684 = vmatpush2.msra.mxu0 0.0
    %1685 = vmatprep.subr.mxu0 0.0
    %1686 = vmatpush2.msra.mxu0 0.0
    %1687 = vmatprep.subr.mxu0 0.0
    %1688 = vmatpush2.msra.mxu0 0.0
    %1689 = vmatprep.subr.mxu0 0.0
    %1690 = vmatpush2.msra.mxu0 0.0
    %1691 = vmatprep.subr.mxu0 0.0
    %1692 = vmatpush2.msra.mxu0 0.0
    %1693 = vmatprep.subr.mxu0 0.0
    %1694 = vmatpush2.msra.mxu0 0.0
    %1695 = vmatprep.subr.mxu0 0.0
    %1696 = vmatpush2.msra.mxu0 0.0
    %1697 = vmatprep.subr.mxu0 0.0
    %1698 = vmatpush2.msra.mxu0 0.0
    %1699 = vmatprep.subr.mxu0 0.0
    %1700 = vmatpush2.msra.mxu0 0.0
    %1701 = vmatprep.mubr.f32.mxu0 0.0
    %1702 = vmatmul.mubr.f32.gmra.mxu0 %v1635
    %v1703 = vpop.f32.mrf.mxu0
    %v1704 = vadd.f32 0.0, %v1703
    %v1705 = vpop.f32.mrf.mxu0
    %1706 = vdwg.mxu0
    %1709 = vrot.lane.b32.xlu0 %v1324, 8
    %v1710 = vpop.permute.xlu0 %1709
    %1711 = vrot.lane.b32.xlu0 %v1400, 8
    %v1712 = vpop.permute.xlu0 %1711
    %1717 = vrot.lane.b32.xlu0 %v1476, 16
    %v1718 = vpop.permute.xlu0 %1717
    %1719 = vrot.lane.b32.xlu0 %v1552, 16
    %v1720 = vpop.permute.xlu0 %1719
    %1725 = vrot.lane.b32.xlu0 %v1628, 24
    %v1726 = vpop.permute.xlu0 %1725
    %1727 = vrot.lane.b32.xlu0 %v1704, 24
    %v1728 = vpop.permute.xlu0 %1727
    %v1731 = vsel %vm378, %v1172, %v1710
    %v1732 = vsel %vm378, %v1248, %v1712
    %vm1733 = vcmask 130048
    %v1734 = vsel %vm1733, %v1731, %v1718
    %v1735 = vsel %vm1733, %v1732, %v1720
    %vm1736 = vcmask 195584
    %v1737 = vsel %vm1736, %v1734, %v1726
    %v1738 = vsel %vm1736, %v1735, %v1728
    %v1739 = vld [vmem:[%s9] sm:$0xff]
    %v1740 = vld [vmem:[%s9 + $0x8] sm:$0xff]
    %v1741 = vld [vmem:[%s9 + $0x10] sm:$0xff]
    %v1742 = vld [vmem:[%s9 + $0x18] sm:$0xff]
    %v1743 = vld [vmem:[%s10] sm:$0x1]
    %v1745 = vlaneseq
    %v1746 = vshrl.u32 %v1745, 7
    %v1747 = vsub.s32 0, %v1746
    %v1748 = vrot.slane %v1743, %v1747
    %v1751 = vsel %vm199, %v1737, 0
    %v1754 = vsel %vm199, %v1738, 0
    %1756 = vmatprep.subr.mxu0 0.0
    %1757 = vmatpush1.msra.mxu0 0.0
    %1758 = vmatprep.subr.mxu0 0.0
    %1759 = vmatpush1.msra.mxu0 0.0
    %1760 = vmatprep.subr.mxu0 0.0
    %1761 = vmatpush1.msra.mxu0 0.0
    %1762 = vmatprep.subr.mxu0 0.0
    %1763 = vmatpush1.msra.mxu0 0.0
    %1764 = vmatprep.subr.mxu0 0.0
    %1765 = vmatpush1.msra.mxu0 0.0
    %1766 = vmatprep.subr.mxu0 0.0
    %1767 = vmatpush1.msra.mxu0 0.0
    %1768 = vmatprep.subr.mxu0 0.0
    %1769 = vmatpush1.msra.mxu0 0.0
    %1770 = vmatprep.subr.mxu0 0.0
    %1771 = vmatpush1.msra.mxu0 0.0
    %1772 = vmatprep.subr.mxu0 0.0
    %1773 = vmatpush1.msra.mxu0 0.0
    %1774 = vmatprep.subr.mxu0 0.0
    %1775 = vmatpush1.msra.mxu0 0.0
    %1776 = vmatprep.subr.mxu0 0.0
    %1777 = vmatpush1.msra.mxu0 0.0
    %1778 = vmatprep.subr.mxu0 0.0
    %1779 = vmatpush1.msra.mxu0 0.0
    %1780 = vmatprep.subr.mxu0 0.0
    %1781 = vmatpush1.msra.mxu0 %v1742
    %1782 = vmatprep.subr.mxu0 0.0
    %1783 = vmatpush1.msra.mxu0 %v1741
    %1784 = vmatprep.subr.mxu0 0.0
    %1785 = vmatpush1.msra.mxu0 %v1740
    %1786 = vmatprep.subr.mxu0 0.0
    %1787 = vmatpush1.msra.mxu0 %v1739
    %1788 = vmatprep.subr.mxu0 0.0
    %1789 = vmatpush2.msra.mxu0 0.0
    %1790 = vmatprep.subr.mxu0 0.0
    %1791 = vmatpush2.msra.mxu0 0.0
    %1792 = vmatprep.subr.mxu0 0.0
    %1793 = vmatpush2.msra.mxu0 0.0
    %1794 = vmatprep.subr.mxu0 0.0
    %1795 = vmatpush2.msra.mxu0 0.0
    %1796 = vmatprep.subr.mxu0 0.0
    %1797 = vmatpush2.msra.mxu0 0.0
    %1798 = vmatprep.subr.mxu0 0.0
    %1799 = vmatpush2.msra.mxu0 0.0
    %1800 = vmatprep.subr.mxu0 0.0
    %1801 = vmatpush2.msra.mxu0 0.0
    %1802 = vmatprep.subr.mxu0 0.0
    %1803 = vmatpush2.msra.mxu0 0.0
    %1804 = vmatprep.subr.mxu0 0.0
    %1805 = vmatpush2.msra.mxu0 0.0
    %1806 = vmatprep.subr.mxu0 0.0
    %1807 = vmatpush2.msra.mxu0 0.0
    %1808 = vmatprep.subr.mxu0 0.0
    %1809 = vmatpush2.msra.mxu0 0.0
    %1810 = vmatprep.subr.mxu0 0.0
    %1811 = vmatpush2.msra.mxu0 0.0
    %1812 = vmatprep.subr.mxu0 0.0
    %1813 = vmatpush2.msra.mxu0 0.0
    %1814 = vmatprep.subr.mxu0 0.0
    %1815 = vmatpush2.msra.mxu0 0.0
    %1816 = vmatprep.subr.mxu0 0.0
    %1817 = vmatpush2.msra.mxu0 0.0
    %1818 = vmatprep.subr.mxu0 0.0
    %1819 = vmatpush2.msra.mxu0 0.0
    %1820 = vmatprep.mubr.f32.mxu0 0.0
    %1821 = vmatmul.mubr.f32.gmra.mxu0 %v1751
    %v1822 = vpop.f32.mrf.mxu0
    %v1823 = vadd.f32 %v1748, %v1822
    %v1824 = vpop.f32.mrf.mxu0
    %1825 = vmatprep.mubr.f32.mxu0 0.0
    %1826 = vmatmul.mubr.f32.gmra.mxu0 %v1754
    %v1827 = vpop.f32.mrf.mxu0
    %v1828 = vadd.f32 %v1748, %v1827
    %v1829 = vpop.f32.mrf.mxu0
    %1830 = vdwg.mxu0
    %v1831 = vadd.f32 %v1823, %v241
    %v1832 = vadd.f32 %v1828, %v242
    %v1833 = vld [vmem:[%s11] sm:$0x1]
    %v1834 = vld [vmem:[%s12] sm:$0x1]
    %v1835 = vsel %vm199, %v1831, 0.0
    %1836 = vadd.xlane.f32.xlu0 %v1835
    %v1837 = vpop.xlane.xlu0 %1836
    %v1838 = vsel %vm199, %v1832, 0.0
    %1839 = vadd.xlane.f32.xlu0 %v1838
    %v1840 = vpop.xlane.xlu0 %1839
    %v1841 = vmul.f32 %v1837, %v206
    %v1842 = vmul.f32 %v1840, %v206
    %v1843 = vsub.f32 %v1831, %v1841
    %v1844 = vsub.f32 %v1832, %v1842
    %v1845 = vmul.f32 %v1843, %v1843
    %v1846 = vmul.f32 %v1844, %v1844
    %v1847 = vsel %vm199, %v1845, 0.0
    %1848 = vadd.xlane.f32.xlu0 %v1847
    %v1849 = vpop.xlane.xlu0 %1848
    %v1850 = vsel %vm199, %v1846, 0.0
    %1851 = vadd.xlane.f32.xlu0 %v1850
    %v1852 = vpop.xlane.xlu0 %1851
    %v1853 = vmul.f32 %v1849, %v206
    %v1854 = vmul.f32 %v1852, %v206
    %v1855 = vadd.f32 %v1853, 1e-12
    %v1856 = vadd.f32 %v1854, 1e-12
    %v1857 = vrsqrt.pop %v1855
    %v1858 = vrsqrt.pop %v1856
    %v1859 = vmul.f32 %v1843, %v1857
    %v1860 = vmul.f32 %v1844, %v1858
    %v1862 = vlaneseq
    %v1863 = vshrl.u32 %v1862, 7
    %v1864 = vsub.s32 0, %v1863
    %v1865 = vrot.slane %v1833, %v1864
    %v1867 = vmul.f32 %v1859, %v1865
    %v1868 = vmul.f32 %v1860, %v1865
    %v1870 = vlaneseq
    %v1871 = vshrl.u32 %v1870, 7
    %v1872 = vsub.s32 0, %v1871
    %v1873 = vrot.slane %v1834, %v1872
    %v1875 = vadd.f32 %v1867, %v1873
    %v1876 = vadd.f32 %v1868, %v1873
    %v1877 = vld [vmem:[%s13] sm:$0xff]
    %v1878 = vld [vmem:[%s13 + $0x8] sm:$0xff]
    %v1879 = vld [vmem:[%s13 + $0x10] sm:$0xff]
    %v1880 = vld [vmem:[%s13 + $0x18] sm:$0xff]
    %v1881 = vld [vmem:[%s14] sm:$0x1]
    %v1883 = vlaneseq
    %v1884 = vshrl.u32 %v1883, 7
    %v1885 = vsub.s32 0, %v1884
    %v1886 = vrot.slane %v1881, %v1885
    %v1889 = vsel %vm199, %v1875, 0
    %v1892 = vsel %vm199, %v1876, 0
    %1894 = vmatprep.subr.mxu0 0.0
    %1895 = vmatpush1.msra.mxu0 0.0
    %1896 = vmatprep.subr.mxu0 0.0
    %1897 = vmatpush1.msra.mxu0 0.0
    %1898 = vmatprep.subr.mxu0 0.0
    %1899 = vmatpush1.msra.mxu0 0.0
    %1900 = vmatprep.subr.mxu0 0.0
    %1901 = vmatpush1.msra.mxu0 0.0
    %1902 = vmatprep.subr.mxu0 0.0
    %1903 = vmatpush1.msra.mxu0 0.0
    %1904 = vmatprep.subr.mxu0 0.0
    %1905 = vmatpush1.msra.mxu0 0.0
    %1906 = vmatprep.subr.mxu0 0.0
    %1907 = vmatpush1.msra.mxu0 0.0
    %1908 = vmatprep.subr.mxu0 0.0
    %1909 = vmatpush1.msra.mxu0 0.0
    %1910 = vmatprep.subr.mxu0 0.0
    %1911 = vmatpush1.msra.mxu0 0.0
    %1912 = vmatprep.subr.mxu0 0.0
    %1913 = vmatpush1.msra.mxu0 0.0
    %1914 = vmatprep.subr.mxu0 0.0
    %1915 = vmatpush1.msra.mxu0 0.0
    %1916 = vmatprep.subr.mxu0 0.0
    %1917 = vmatpush1.msra.mxu0 0.0
    %1918 = vmatprep.subr.mxu0 0.0
    %1919 = vmatpush1.msra.mxu0 %v1880
    %1920 = vmatprep.subr.mxu0 0.0
    %1921 = vmatpush1.msra.mxu0 %v1879
    %1922 = vmatprep.subr.mxu0 0.0
    %1923 = vmatpush1.msra.mxu0 %v1878
    %1924 = vmatprep.subr.mxu0 0.0
    %1925 = vmatpush1.msra.mxu0 %v1877
    %1926 = vmatprep.subr.mxu0 0.0
    %1927 = vmatpush2.msra.mxu0 0.0
    %1928 = vmatprep.subr.mxu0 0.0
    %1929 = vmatpush2.msra.mxu0 0.0
    %1930 = vmatprep.subr.mxu0 0.0
    %1931 = vmatpush2.msra.mxu0 0.0
    %1932 = vmatprep.subr.mxu0 0.0
    %1933 = vmatpush2.msra.mxu0 0.0
    %1934 = vmatprep.subr.mxu0 0.0
    %1935 = vmatpush2.msra.mxu0 0.0
    %1936 = vmatprep.subr.mxu0 0.0
    %1937 = vmatpush2.msra.mxu0 0.0
    %1938 = vmatprep.subr.mxu0 0.0
    %1939 = vmatpush2.msra.mxu0 0.0
    %1940 = vmatprep.subr.mxu0 0.0
    %1941 = vmatpush2.msra.mxu0 0.0
    %1942 = vmatprep.subr.mxu0 0.0
    %1943 = vmatpush2.msra.mxu0 0.0
    %1944 = vmatprep.subr.mxu0 0.0
    %1945 = vmatpush2.msra.mxu0 0.0
    %1946 = vmatprep.subr.mxu0 0.0
    %1947 = vmatpush2.msra.mxu0 0.0
    %1948 = vmatprep.subr.mxu0 0.0
    %1949 = vmatpush2.msra.mxu0 0.0
    %1950 = vmatprep.subr.mxu0 0.0
    %1951 = vmatpush2.msra.mxu0 0.0
    %1952 = vmatprep.subr.mxu0 0.0
    %1953 = vmatpush2.msra.mxu0 0.0
    %1954 = vmatprep.subr.mxu0 0.0
    %1955 = vmatpush2.msra.mxu0 0.0
    %1956 = vmatprep.subr.mxu0 0.0
    %1957 = vmatpush2.msra.mxu0 0.0
    %1958 = vmatprep.mubr.f32.mxu0 0.0
    %1959 = vmatmul.mubr.f32.gmra.mxu0 %v1889
    %v1960 = vpop.f32.mrf.mxu0
    %v1961 = vadd.f32 %v1886, %v1960
    %v1962 = vpop.f32.mrf.mxu0
    %1963 = vmatprep.mubr.f32.mxu0 0.0
    %1964 = vmatmul.mubr.f32.gmra.mxu0 %v1892
    %v1965 = vpop.f32.mrf.mxu0
    %v1966 = vadd.f32 %v1886, %v1965
    %v1967 = vpop.f32.mrf.mxu0
    %1968 = vdwg.mxu0
    %v1969 = vmul.f32 %v1961, 0.5
    %v1970 = vmul.f32 %v1966, 0.5
    %v1971 = vmul.f32 %v1961, 0.044715
    %v1972 = vmul.f32 %v1966, 0.044715
    %v1973 = vmul.f32 %v1971, %v1961
    %v1974 = vmul.f32 %v1972, %v1966
    %v1975 = vmul.f32 %v1973, %v1961
    %v1976 = vmul.f32 %v1974, %v1966
    %v1977 = vadd.f32 %v1961, %v1975
    %v1978 = vadd.f32 %v1966, %v1976
    %v1979 = vmul.f32 %v1977, 0.7978846
    %v1980 = vmul.f32 %v1978, 0.7978846
    %v1981 = vtanh.pop %v1979
    %v1982 = vtanh.pop %v1980
    %v1983 = vadd.f32 %v1981, 1.0
    %v1984 = vadd.f32 %v1982, 1.0
    %v1985 = vmul.f32 %v1969, %v1983
    %v1986 = vmul.f32 %v1970, %v1984
    %v1987 = vld [vmem:[%s15] sm:$0xff]
    %v1988 = vld [vmem:[%s15 + $0x8] sm:$0xff]
    %v1989 = vld [vmem:[%s15 + $0x10] sm:$0xff]
    %v1990 = vld [vmem:[%s15 + $0x18] sm:$0xff]
    %v1991 = vld [vmem:[%s15 + $0x20] sm:$0xff]
    %v1992 = vld [vmem:[%s15 + $0x28] sm:$0xff]
    %v1993 = vld [vmem:[%s15 + $0x30] sm:$0xff]
    %v1994 = vld [vmem:[%s15 + $0x38] sm:$0xff]
    %v1995 = vld [vmem:[%s16] sm:$0x1]
    %v1997 = vlaneseq
    %v1998 = vshrl.u32 %v1997, 7
    %v1999 = vsub.s32 0, %v1998
    %v2000 = vrot.slane %v1995, %v1999
    %vm2002 = vcmask 523264
    %v2004 = vsel %vm2002, %v1985, 0
    %v2007 = vsel %vm2002, %v1986, 0
    %2009 = vmatprep.subr.mxu0 0.0
    %2010 = vmatpush1.msra.mxu0 0.0
    %2011 = vmatprep.subr.mxu0 0.0
    %2012 = vmatpush1.msra.mxu0 0.0
    %2013 = vmatprep.subr.mxu0 0.0
    %2014 = vmatpush1.msra.mxu0 0.0
    %2015 = vmatprep.subr.mxu0 0.0
    %2016 = vmatpush1.msra.mxu0 0.0
    %2017 = vmatprep.subr.mxu0 0.0
    %2018 = vmatpush1.msra.mxu0 0.0
    %2019 = vmatprep.subr.mxu0 0.0
    %2020 = vmatpush1.msra.mxu0 0.0
    %2021 = vmatprep.subr.mxu0 0.0
    %2022 = vmatpush1.msra.mxu0 0.0
    %2023 = vmatprep.subr.mxu0 0.0
    %2024 = vmatpush1.msra.mxu0 0.0
    %2025 = vmatprep.subr.mxu0 0.0
    %2026 = vmatpush1.msra.mxu0 %v1994
    %2027 = vmatprep.subr.mxu0 0.0
    %2028 = vmatpush1.msra.mxu0 %v1993
    %2029 = vmatprep.subr.mxu0 0.0
    %2030 = vmatpush1.msra.mxu0 %v1992
    %2031 = vmatprep.subr.mxu0 0.0
    %2032 = vmatpush1.msra.mxu0 %v1991
    %2033 = vmatprep.subr.mxu0 0.0
    %2034 = vmatpush1.msra.mxu0 %v1990
    %2035 = vmatprep.subr.mxu0 0.0
    %2036 = vmatpush1.msra.mxu0 %v1989
    %2037 = vmatprep.subr.mxu0 0.0
    %2038 = vmatpush1.msra.mxu0 %v1988
    %2039 = vmatprep.subr.mxu0 0.0
    %2040 = vmatpush1.msra.mxu0 %v1987
    %2041 = vmatprep.subr.mxu0 0.0
    %2042 = vmatpush2.msra.mxu0 0.0
    %2043 = vmatprep.subr.mxu0 0.0
    %2044 = vmatpush2.msra.mxu0 0.0
    %2045 = vmatprep.subr.mxu0 0.0
    %2046 = vmatpush2.msra.mxu0 0.0
    %2047 = vmatprep.subr.mxu0 0.0
    %2048 = vmatpush2.msra.mxu0 0.0
    %2049 = vmatprep.subr.mxu0 0.0
    %2050 = vmatpush2.msra.mxu0 0.0
    %2051 = vmatprep.subr.mxu0 0.0
    %2052 = vmatpush2.msra.mxu0 0.0
    %2053 = vmatprep.subr.mxu0 0.0
    %2054 = vmatpush2.msra.mxu0 0.0
    %2055 = vmatprep.subr.mxu0 0.0
    %2056 = vmatpush2.msra.mxu0 0.0
    %2057 = vmatprep.subr.mxu0 0.0
    %2058 = vmatpush2.msra.mxu0 0.0
    %2059 = vmatprep.subr.mxu0 0.0
    %2060 = vmatpush2.msra.mxu0 0.0
    %2061 = vmatprep.subr.mxu0 0.0
    %2062 = vmatpush2.msra.mxu0 0.0
    %2063 = vmatprep.subr.mxu0 0.0
    %2064 = vmatpush2.msra.mxu0 0.0
    %2065 = vmatprep.subr.mxu0 0.0
    %2066 = vmatpush2.msra.mxu0 0.0
    %2067 = vmatprep.subr.mxu0 0.0
    %2068 = vmatpush2.msra.mxu0 0.0
    %2069 = vmatprep.subr.mxu0 0.0
    %2070 = vmatpush2.msra.mxu0 0.0
    %2071 = vmatprep.subr.mxu0 0.0
    %2072 = vmatpush2.msra.mxu0 0.0
    %2073 = vmatprep.mubr.f32.mxu0 0.0
    %2074 = vmatmul.mubr.f32.gmra.mxu0 %v2004
    %v2075 = vpop.f32.mrf.mxu0
    %v2076 = vadd.f32 %v2000, %v2075
    %v2077 = vpop.f32.mrf.mxu0
    %2078 = vmatprep.mubr.f32.mxu0 0.0
    %2079 = vmatmul.mubr.f32.gmra.mxu0 %v2007
    %v2080 = vpop.f32.mrf.mxu0
    %v2081 = vadd.f32 %v2000, %v2080
    %v2082 = vpop.f32.mrf.mxu0
    %2083 = vdwg.mxu0
    %v2084 = vadd.f32 %v2076, %v1875
    %v2085 = vadd.f32 %v2081, %v1876
    %v2086 = vld [vmem:[%s17] sm:$0x1]
    %v2087 = vld [vmem:[%s18] sm:$0x1]
    %v2088 = vsel %vm199, %v2084, 0.0
    %2089 = vadd.xlane.f32.xlu0 %v2088
    %v2090 = vpop.xlane.xlu0 %2089
    %v2091 = vsel %vm199, %v2085, 0.0
    %2092 = vadd.xlane.f32.xlu0 %v2091
    %v2093 = vpop.xlane.xlu0 %2092
    %v2094 = vmul.f32 %v2090, %v206
    %v2095 = vmul.f32 %v2093, %v206
    %v2096 = vsub.f32 %v2084, %v2094
    %v2097 = vsub.f32 %v2085, %v2095
    %v2098 = vmul.f32 %v2096, %v2096
    %v2099 = vmul.f32 %v2097, %v2097
    %v2100 = vsel %vm199, %v2098, 0.0
    %2101 = vadd.xlane.f32.xlu0 %v2100
    %v2102 = vpop.xlane.xlu0 %2101
    %v2103 = vsel %vm199, %v2099, 0.0
    %2104 = vadd.xlane.f32.xlu0 %v2103
    %v2105 = vpop.xlane.xlu0 %2104
    %v2106 = vmul.f32 %v2102, %v206
    %v2107 = vmul.f32 %v2105, %v206
    %v2108 = vadd.f32 %v2106, 1e-12
    %v2109 = vadd.f32 %v2107, 1e-12
    %v2110 = vrsqrt.pop %v2108
    %v2111 = vrsqrt.pop %v2109
    %v2112 = vmul.f32 %v2096, %v2110
    %v2113 = vmul.f32 %v2097, %v2111
    %v2115 = vlaneseq
    %v2116 = vshrl.u32 %v2115, 7
    %v2117 = vsub.s32 0, %v2116
    %v2118 = vrot.slane %v2086, %v2117
    %v2120 = vmul.f32 %v2112, %v2118
    %v2121 = vmul.f32 %v2113, %v2118
    %v2123 = vlaneseq
    %v2124 = vshrl.u32 %v2123, 7
    %v2125 = vsub.s32 0, %v2124
    %v2126 = vrot.slane %v2087, %v2125
    %v2128 = vadd.f32 %v2120, %v2126
    %v2129 = vadd.f32 %v2121, %v2126
    %s2130 = scalar_lea.vmem %s7, 32
    %v2131 = vld [vmem:[%s2130] sm:$0xff]
    %v2132 = vld [vmem:[%s2130 + $0x8] sm:$0xff]
    %v2133 = vld [vmem:[%s2130 + $0x10] sm:$0xff]
    %v2134 = vld [vmem:[%s2130 + $0x18] sm:$0xff]
    %s2135 = scalar_lea.vmem %s8, 1
    %v2136 = vld [vmem:[%s2135] sm:$0x1]
    %v2138 = vlaneseq
    %v2139 = vshrl.u32 %v2138, 7
    %v2140 = vsub.s32 0, %v2139
    %v2141 = vrot.slane %v2136, %v2140
    %v2144 = vsel %vm199, %v2128, 0
    %v2147 = vsel %vm199, %v2129, 0
    %2149 = vmatprep.subr.mxu0 0.0
    %2150 = vmatpush1.msra.mxu0 0.0
    %2151 = vmatprep.subr.mxu0 0.0
    %2152 = vmatpush1.msra.mxu0 0.0
    %2153 = vmatprep.subr.mxu0 0.0
    %2154 = vmatpush1.msra.mxu0 0.0
    %2155 = vmatprep.subr.mxu0 0.0
    %2156 = vmatpush1.msra.mxu0 0.0
    %2157 = vmatprep.subr.mxu0 0.0
    %2158 = vmatpush1.msra.mxu0 0.0
    %2159 = vmatprep.subr.mxu0 0.0
    %2160 = vmatpush1.msra.mxu0 0.0
    %2161 = vmatprep.subr.mxu0 0.0
    %2162 = vmatpush1.msra.mxu0 0.0
    %2163 = vmatprep.subr.mxu0 0.0
    %2164 = vmatpush1.msra.mxu0 0.0
    %2165 = vmatprep.subr.mxu0 0.0
    %2166 = vmatpush1.msra.mxu0 0.0
    %2167 = vmatprep.subr.mxu0 0.0
    %2168 = vmatpush1.msra.mxu0 0.0
    %2169 = vmatprep.subr.mxu0 0.0
    %2170 = vmatpush1.msra.mxu0 0.0
    %2171 = vmatprep.subr.mxu0 0.0
    %2172 = vmatpush1.msra.mxu0 0.0
    %2173 = vmatprep.subr.mxu0 0.0
    %2174 = vmatpush1.msra.mxu0 %v2134
    %2175 = vmatprep.subr.mxu0 0.0
    %2176 = vmatpush1.msra.mxu0 %v2133
    %2177 = vmatprep.subr.mxu0 0.0
    %2178 = vmatpush1.msra.mxu0 %v2132
    %2179 = vmatprep.subr.mxu0 0.0
    %2180 = vmatpush1.msra.mxu0 %v2131
    %2181 = vmatprep.subr.mxu0 0.0
    %2182 = vmatpush2.msra.mxu0 0.0
    %2183 = vmatprep.subr.mxu0 0.0
    %2184 = vmatpush2.msra.mxu0 0.0
    %2185 = vmatprep.subr.mxu0 0.0
    %2186 = vmatpush2.msra.mxu0 0.0
    %2187 = vmatprep.subr.mxu0 0.0
    %2188 = vmatpush2.msra.mxu0 0.0
    %2189 = vmatprep.subr.mxu0 0.0
    %2190 = vmatpush2.msra.mxu0 0.0
    %2191 = vmatprep.subr.mxu0 0.0
    %2192 = vmatpush2.msra.mxu0 0.0
    %2193 = vmatprep.subr.mxu0 0.0
    %2194 = vmatpush2.msra.mxu0 0.0
    %2195 = vmatprep.subr.mxu0 0.0
    %2196 = vmatpush2.msra.mxu0 0.0
    %2197 = vmatprep.subr.mxu0 0.0
    %2198 = vmatpush2.msra.mxu0 0.0
    %2199 = vmatprep.subr.mxu0 0.0
    %2200 = vmatpush2.msra.mxu0 0.0
    %2201 = vmatprep.subr.mxu0 0.0
    %2202 = vmatpush2.msra.mxu0 0.0
    %2203 = vmatprep.subr.mxu0 0.0
    %2204 = vmatpush2.msra.mxu0 0.0
    %2205 = vmatprep.subr.mxu0 0.0
    %2206 = vmatpush2.msra.mxu0 0.0
    %2207 = vmatprep.subr.mxu0 0.0
    %2208 = vmatpush2.msra.mxu0 0.0
    %2209 = vmatprep.subr.mxu0 0.0
    %2210 = vmatpush2.msra.mxu0 0.0
    %2211 = vmatprep.subr.mxu0 0.0
    %2212 = vmatpush2.msra.mxu0 0.0
    %2213 = vmatprep.mubr.f32.mxu0 0.0
    %2214 = vmatmul.mubr.f32.gmra.mxu0 %v2144
    %v2215 = vpop.f32.mrf.mxu0
    %v2216 = vadd.f32 %v2141, %v2215
    %v2217 = vpop.f32.mrf.mxu0
    %2218 = vmatprep.mubr.f32.mxu0 0.0
    %2219 = vmatmul.mubr.f32.gmra.mxu0 %v2147
    %v2220 = vpop.f32.mrf.mxu0
    %v2221 = vadd.f32 %v2141, %v2220
    %v2222 = vpop.f32.mrf.mxu0
    %2223 = vdwg.mxu0
    %2226 = vrot.lane.b32.xlu0 %v2216, 120
    %v2227 = vpop.permute.xlu0 %2226
    %2228 = vrot.lane.b32.xlu0 %v2221, 120
    %v2229 = vpop.permute.xlu0 %2228
    %2230 = vrot.lane.b32.xlu0 %v2216, 112
    %v2231 = vpop.permute.xlu0 %2230
    %2232 = vrot.lane.b32.xlu0 %v2221, 112
    %v2233 = vpop.permute.xlu0 %2232
    %2234 = vrot.lane.b32.xlu0 %v2216, 104
    %v2235 = vpop.permute.xlu0 %2234
    %2236 = vrot.lane.b32.xlu0 %v2221, 104
    %v2237 = vpop.permute.xlu0 %2236
    %2238 = vrot.lane.b32.xlu0 %v2216, 96
    %v2239 = vpop.permute.xlu0 %2238
    %v2240 = vsel %vm378, %v2216, 0
    %v2242 = vsel %vm378, %v2239, 0
    %2244 = vmatprep.subr.mxu0 0.0
    %2245 = vmatpush1.xpose.msra.mxu0 0.0
    %2246 = vmatprep.subr.mxu0 0.0
    %2247 = vmatpush1.xpose.msra.mxu0 0.0
    %2248 = vmatprep.subr.mxu0 0.0
    %2249 = vmatpush1.xpose.msra.mxu0 0.0
    %2250 = vmatprep.subr.mxu0 0.0
    %2251 = vmatpush1.xpose.msra.mxu0 0.0
    %2252 = vmatprep.subr.mxu0 0.0
    %2253 = vmatpush1.xpose.msra.mxu0 0.0
    %2254 = vmatprep.subr.mxu0 0.0
    %2255 = vmatpush1.xpose.msra.mxu0 0.0
    %2256 = vmatprep.subr.mxu0 0.0
    %2257 = vmatpush1.xpose.msra.mxu0 0.0
    %2258 = vmatprep.subr.mxu0 0.0
    %2259 = vmatpush1.xpose.msra.mxu0 0.0
    %2260 = vmatprep.subr.mxu0 0.0
    %2261 = vmatpush1.xpose.msra.mxu0 0.0
    %2262 = vmatprep.subr.mxu0 0.0
    %2263 = vmatpush1.xpose.msra.mxu0 0.0
    %2264 = vmatprep.subr.mxu0 0.0
    %2265 = vmatpush1.xpose.msra.mxu0 0.0
    %2266 = vmatprep.subr.mxu0 0.0
    %2267 = vmatpush1.xpose.msra.mxu0 0.0
    %2268 = vmatprep.subr.mxu0 0.0
    %2269 = vmatpush1.xpose.msra.mxu0 0.0
    %2270 = vmatprep.subr.mxu0 0.0
    %2271 = vmatpush1.xpose.msra.mxu0 0.0
    %2272 = vmatprep.subr.mxu0 0.0
    %2273 = vmatpush1.xpose.msra.mxu0 0.0
    %2274 = vmatprep.subr.mxu0 0.0
    %2275 = vmatpush1.xpose.msra.mxu0 %v2242
    %2276 = vmatprep.subr.mxu0 0.0
    %2277 = vmatpush2.xpose.msra.mxu0 0.0
    %2278 = vmatprep.subr.mxu0 0.0
    %2279 = vmatpush2.xpose.msra.mxu0 0.0
    %2280 = vmatprep.subr.mxu0 0.0
    %2281 = vmatpush2.xpose.msra.mxu0 0.0
    %2282 = vmatprep.subr.mxu0 0.0
    %2283 = vmatpush2.xpose.msra.mxu0 0.0
    %2284 = vmatprep.subr.mxu0 0.0
    %2285 = vmatpush2.xpose.msra.mxu0 0.0
    %2286 = vmatprep.subr.mxu0 0.0
    %2287 = vmatpush2.xpose.msra.mxu0 0.0
    %2288 = vmatprep.subr.mxu0 0.0
    %2289 = vmatpush2.xpose.msra.mxu0 0.0
    %2290 = vmatprep.subr.mxu0 0.0
    %2291 = vmatpush2.xpose.msra.mxu0 0.0
    %2292 = vmatprep.subr.mxu0 0.0
    %2293 = vmatpush2.xpose.msra.mxu0 0.0
    %2294 = vmatprep.subr.mxu0 0.0
    %2295 = vmatpush2.xpose.msra.mxu0 0.0
    %2296 = vmatprep.subr.mxu0 0.0
    %2297 = vmatpush2.xpose.msra.mxu0 0.0
    %2298 = vmatprep.subr.mxu0 0.0
    %2299 = vmatpush2.xpose.msra.mxu0 0.0
    %2300 = vmatprep.subr.mxu0 0.0
    %2301 = vmatpush2.xpose.msra.mxu0 0.0
    %2302 = vmatprep.subr.mxu0 0.0
    %2303 = vmatpush2.xpose.msra.mxu0 0.0
    %2304 = vmatprep.subr.mxu0 0.0
    %2305 = vmatpush2.xpose.msra.mxu0 0.0
    %2306 = vmatprep.subr.mxu0 0.0
    %2307 = vmatpush2.xpose.msra.mxu0 0.0
    %2308 = vmatprep.mubr.f32.mxu0 0.0
    %2309 = vmatmul.mubr.f32.gmra.mxu0 %v2240
    %v2310 = vpop.f32.mrf.mxu0
    %v2311 = vadd.f32 0.0, %v2310
    %v2312 = vpop.f32.mrf.mxu0
    %2313 = vdwg.mxu0
    %2314 = vrot.lane.b32.xlu0 %v2221, 96
    %v2315 = vpop.permute.xlu0 %2314
    %v2316 = vsel %vm378, %v2221, 0
    %v2318 = vsel %vm378, %v2315, 0
    %2320 = vmatprep.subr.mxu0 0.0
    %2321 = vmatpush1.xpose.msra.mxu0 0.0
    %2322 = vmatprep.subr.mxu0 0.0
    %2323 = vmatpush1.xpose.msra.mxu0 0.0
    %2324 = vmatprep.subr.mxu0 0.0
    %2325 = vmatpush1.xpose.msra.mxu0 0.0
    %2326 = vmatprep.subr.mxu0 0.0
    %2327 = vmatpush1.xpose.msra.mxu0 0.0
    %2328 = vmatprep.subr.mxu0 0.0
    %2329 = vmatpush1.xpose.msra.mxu0 0.0
    %2330 = vmatprep.subr.mxu0 0.0
    %2331 = vmatpush1.xpose.msra.mxu0 0.0
    %2332 = vmatprep.subr.mxu0 0.0
    %2333 = vmatpush1.xpose.msra.mxu0 0.0
    %2334 = vmatprep.subr.mxu0 0.0
    %2335 = vmatpush1.xpose.msra.mxu0 0.0
    %2336 = vmatprep.subr.mxu0 0.0
    %2337 = vmatpush1.xpose.msra.mxu0 0.0
    %2338 = vmatprep.subr.mxu0 0.0
    %2339 = vmatpush1.xpose.msra.mxu0 0.0
    %2340 = vmatprep.subr.mxu0 0.0
    %2341 = vmatpush1.xpose.msra.mxu0 0.0
    %2342 = vmatprep.subr.mxu0 0.0
    %2343 = vmatpush1.xpose.msra.mxu0 0.0
    %2344 = vmatprep.subr.mxu0 0.0
    %2345 = vmatpush1.xpose.msra.mxu0 0.0
    %2346 = vmatprep.subr.mxu0 0.0
    %2347 = vmatpush1.xpose.msra.mxu0 0.0
    %2348 = vmatprep.subr.mxu0 0.0
    %2349 = vmatpush1.xpose.msra.mxu0 0.0
    %2350 = vmatprep.subr.mxu0 0.0
    %2351 = vmatpush1.xpose.msra.mxu0 %v2318
    %2352 = vmatprep.subr.mxu0 0.0
    %2353 = vmatpush2.xpose.msra.mxu0 0.0
    %2354 = vmatprep.subr.mxu0 0.0
    %2355 = vmatpush2.xpose.msra.mxu0 0.0
    %2356 = vmatprep.subr.mxu0 0.0
    %2357 = vmatpush2.xpose.msra.mxu0 0.0
    %2358 = vmatprep.subr.mxu0 0.0
    %2359 = vmatpush2.xpose.msra.mxu0 0.0
    %2360 = vmatprep.subr.mxu0 0.0
    %2361 = vmatpush2.xpose.msra.mxu0 0.0
    %2362 = vmatprep.subr.mxu0 0.0
    %2363 = vmatpush2.xpose.msra.mxu0 0.0
    %2364 = vmatprep.subr.mxu0 0.0
    %2365 = vmatpush2.xpose.msra.mxu0 0.0
    %2366 = vmatprep.subr.mxu0 0.0
    %2367 = vmatpush2.xpose.msra.mxu0 0.0
    %2368 = vmatprep.subr.mxu0 0.0
    %2369 = vmatpush2.xpose.msra.mxu0 0.0
    %2370 = vmatprep.subr.mxu0 0.0
    %2371 = vmatpush2.xpose.msra.mxu0 0.0
    %2372 = vmatprep.subr.mxu0 0.0
    %2373 = vmatpush2.xpose.msra.mxu0 0.0
    %2374 = vmatprep.subr.mxu0 0.0
    %2375 = vmatpush2.xpose.msra.mxu0 0.0
    %2376 = vmatprep.subr.mxu0 0.0
    %2377 = vmatpush2.xpose.msra.mxu0 0.0
    %2378 = vmatprep.subr.mxu0 0.0
    %2379 = vmatpush2.xpose.msra.mxu0 0.0
    %2380 = vmatprep.subr.mxu0 0.0
    %2381 = vmatpush2.xpose.msra.mxu0 0.0
    %2382 = vmatprep.subr.mxu0 0.0
    %2383 = vmatpush2.xpose.msra.mxu0 0.0
    %2384 = vmatprep.mubr.f32.mxu0 0.0
    %2385 = vmatmul.mubr.f32.gmra.mxu0 %v2316
    %v2386 = vpop.f32.mrf.mxu0
    %v2387 = vadd.f32 0.0, %v2386
    %v2388 = vpop.f32.mrf.mxu0
    %2389 = vdwg.mxu0
    %2390 = vrot.lane.b32.xlu0 %v2227, 96
    %v2391 = vpop.permute.xlu0 %2390
    %v2392 = vsel %vm378, %v2227, 0
    %v2394 = vsel %vm378, %v2391, 0
    %2396 = vmatprep.subr.mxu0 0.0
    %2397 = vmatpush1.xpose.msra.mxu0 0.0
    %2398 = vmatprep.subr.mxu0 0.0
    %2399 = vmatpush1.xpose.msra.mxu0 0.0
    %2400 = vmatprep.subr.mxu0 0.0
    %2401 = vmatpush1.xpose.msra.mxu0 0.0
    %2402 = vmatprep.subr.mxu0 0.0
    %2403 = vmatpush1.xpose.msra.mxu0 0.0
    %2404 = vmatprep.subr.mxu0 0.0
    %2405 = vmatpush1.xpose.msra.mxu0 0.0
    %2406 = vmatprep.subr.mxu0 0.0
    %2407 = vmatpush1.xpose.msra.mxu0 0.0
    %2408 = vmatprep.subr.mxu0 0.0
    %2409 = vmatpush1.xpose.msra.mxu0 0.0
    %2410 = vmatprep.subr.mxu0 0.0
    %2411 = vmatpush1.xpose.msra.mxu0 0.0
    %2412 = vmatprep.subr.mxu0 0.0
    %2413 = vmatpush1.xpose.msra.mxu0 0.0
    %2414 = vmatprep.subr.mxu0 0.0
    %2415 = vmatpush1.xpose.msra.mxu0 0.0
    %2416 = vmatprep.subr.mxu0 0.0
    %2417 = vmatpush1.xpose.msra.mxu0 0.0
    %2418 = vmatprep.subr.mxu0 0.0
    %2419 = vmatpush1.xpose.msra.mxu0 0.0
    %2420 = vmatprep.subr.mxu0 0.0
    %2421 = vmatpush1.xpose.msra.mxu0 0.0
    %2422 = vmatprep.subr.mxu0 0.0
    %2423 = vmatpush1.xpose.msra.mxu0 0.0
    %2424 = vmatprep.subr.mxu0 0.0
    %2425 = vmatpush1.xpose.msra.mxu0 0.0
    %2426 = vmatprep.subr.mxu0 0.0
    %2427 = vmatpush1.xpose.msra.mxu0 %v2394
    %2428 = vmatprep.subr.mxu0 0.0
    %2429 = vmatpush2.xpose.msra.mxu0 0.0
    %2430 = vmatprep.subr.mxu0 0.0
    %2431 = vmatpush2.xpose.msra.mxu0 0.0
    %2432 = vmatprep.subr.mxu0 0.0
    %2433 = vmatpush2.xpose.msra.mxu0 0.0
    %2434 = vmatprep.subr.mxu0 0.0
    %2435 = vmatpush2.xpose.msra.mxu0 0.0
    %2436 = vmatprep.subr.mxu0 0.0
    %2437 = vmatpush2.xpose.msra.mxu0 0.0
    %2438 = vmatprep.subr.mxu0 0.0
    %2439 = vmatpush2.xpose.msra.mxu0 0.0
    %2440 = vmatprep.subr.mxu0 0.0
    %2441 = vmatpush2.xpose.msra.mxu0 0.0
    %2442 = vmatprep.subr.mxu0 0.0
    %2443 = vmatpush2.xpose.msra.mxu0 0.0
    %2444 = vmatprep.subr.mxu0 0.0
    %2445 = vmatpush2.xpose.msra.mxu0 0.0
    %2446 = vmatprep.subr.mxu0 0.0
    %2447 = vmatpush2.xpose.msra.mxu0 0.0
    %2448 = vmatprep.subr.mxu0 0.0
    %2449 = vmatpush2.xpose.msra.mxu0 0.0
    %2450 = vmatprep.subr.mxu0 0.0
    %2451 = vmatpush2.xpose.msra.mxu0 0.0
    %2452 = vmatprep.subr.mxu0 0.0
    %2453 = vmatpush2.xpose.msra.mxu0 0.0
    %2454 = vmatprep.subr.mxu0 0.0
    %2455 = vmatpush2.xpose.msra.mxu0 0.0
    %2456 = vmatprep.subr.mxu0 0.0
    %2457 = vmatpush2.xpose.msra.mxu0 0.0
    %2458 = vmatprep.subr.mxu0 0.0
    %2459 = vmatpush2.xpose.msra.mxu0 0.0
    %2460 = vmatprep.mubr.f32.mxu0 0.0
    %2461 = vmatmul.mubr.f32.gmra.mxu0 %v2392
    %v2462 = vpop.f32.mrf.mxu0
    %v2463 = vadd.f32 0.0, %v2462
    %v2464 = vpop.f32.mrf.mxu0
    %2465 = vdwg.mxu0
    %2466 = vrot.lane.b32.xlu0 %v2229, 96
    %v2467 = vpop.permute.xlu0 %2466
    %v2468 = vsel %vm378, %v2229, 0
    %v2470 = vsel %vm378, %v2467, 0
    %2472 = vmatprep.subr.mxu0 0.0
    %2473 = vmatpush1.xpose.msra.mxu0 0.0
    %2474 = vmatprep.subr.mxu0 0.0
    %2475 = vmatpush1.xpose.msra.mxu0 0.0
    %2476 = vmatprep.subr.mxu0 0.0
    %2477 = vmatpush1.xpose.msra.mxu0 0.0
    %2478 = vmatprep.subr.mxu0 0.0
    %2479 = vmatpush1.xpose.msra.mxu0 0.0
    %2480 = vmatprep.subr.mxu0 0.0
    %2481 = vmatpush1.xpose.msra.mxu0 0.0
    %2482 = vmatprep.subr.mxu0 0.0
    %2483 = vmatpush1.xpose.msra.mxu0 0.0
    %2484 = vmatprep.subr.mxu0 0.0
    %2485 = vmatpush1.xpose.msra.mxu0 0.0
    %2486 = vmatprep.subr.mxu0 0.0
    %2487 = vmatpush1.xpose.msra.mxu0 0.0
    %2488 = vmatprep.subr.mxu0 0.0
    %2489 = vmatpush1.xpose.msra.mxu0 0.0
    %2490 = vmatprep.subr.mxu0 0.0
    %2491 = vmatpush1.xpose.msra.mxu0 0.0
    %2492 = vmatprep.subr.mxu0 0.0
    %2493 = vmatpush1.xpose.msra.mxu0 0.0
    %2494 = vmatprep.subr.mxu0 0.0
    %2495 = vmatpush1.xpose.msra.mxu0 0.0
    %2496 = vmatprep.subr.mxu0 0.0
    %2497 = vmatpush1.xpose.msra.mxu0 0.0
    %2498 = vmatprep.subr.mxu0 0.0
    %2499 = vmatpush1.xpose.msra.mxu0 0.0
    %2500 = vmatprep.subr.mxu0 0.0
    %2501 = vmatpush1.xpose.msra.mxu0 0.0
    %2502 = vmatprep.subr.mxu0 0.0
    %2503 = vmatpush1.xpose.msra.mxu0 %v2470
    %2504 = vmatprep.subr.mxu0 0.0
    %2505 = vmatpush2.xpose.msra.mxu0 0.0
    %2506 = vmatprep.subr.mxu0 0.0
    %2507 = vmatpush2.xpose.msra.mxu0 0.0
    %2508 = vmatprep.subr.mxu0 0.0
    %2509 = vmatpush2.xpose.msra.mxu0 0.0
    %2510 = vmatprep.subr.mxu0 0.0
    %2511 = vmatpush2.xpose.msra.mxu0 0.0
    %2512 = vmatprep.subr.mxu0 0.0
    %2513 = vmatpush2.xpose.msra.mxu0 0.0
    %2514 = vmatprep.subr.mxu0 0.0
    %2515 = vmatpush2.xpose.msra.mxu0 0.0
    %2516 = vmatprep.subr.mxu0 0.0
    %2517 = vmatpush2.xpose.msra.mxu0 0.0
    %2518 = vmatprep.subr.mxu0 0.0
    %2519 = vmatpush2.xpose.msra.mxu0 0.0
    %2520 = vmatprep.subr.mxu0 0.0
    %2521 = vmatpush2.xpose.msra.mxu0 0.0
    %2522 = vmatprep.subr.mxu0 0.0
    %2523 = vmatpush2.xpose.msra.mxu0 0.0
    %2524 = vmatprep.subr.mxu0 0.0
    %2525 = vmatpush2.xpose.msra.mxu0 0.0
    %2526 = vmatprep.subr.mxu0 0.0
    %2527 = vmatpush2.xpose.msra.mxu0 0.0
    %2528 = vmatprep.subr.mxu0 0.0
    %2529 = vmatpush2.xpose.msra.mxu0 0.0
    %2530 = vmatprep.subr.mxu0 0.0
    %2531 = vmatpush2.xpose.msra.mxu0 0.0
    %2532 = vmatprep.subr.mxu0 0.0
    %2533 = vmatpush2.xpose.msra.mxu0 0.0
    %2534 = vmatprep.subr.mxu0 0.0
    %2535 = vmatpush2.xpose.msra.mxu0 0.0
    %2536 = vmatprep.mubr.f32.mxu0 0.0
    %2537 = vmatmul.mubr.f32.gmra.mxu0 %v2468
    %v2538 = vpop.f32.mrf.mxu0
    %v2539 = vadd.f32 0.0, %v2538
    %v2540 = vpop.f32.mrf.mxu0
    %2541 = vdwg.mxu0
    %2542 = vrot.lane.b32.xlu0 %v2231, 96
    %v2543 = vpop.permute.xlu0 %2542
    %v2544 = vsel %vm378, %v2231, 0
    %v2546 = vsel %vm378, %v2543, 0
    %2548 = vmatprep.subr.mxu0 0.0
    %2549 = vmatpush1.xpose.msra.mxu0 0.0
    %2550 = vmatprep.subr.mxu0 0.0
    %2551 = vmatpush1.xpose.msra.mxu0 0.0
    %2552 = vmatprep.subr.mxu0 0.0
    %2553 = vmatpush1.xpose.msra.mxu0 0.0
    %2554 = vmatprep.subr.mxu0 0.0
    %2555 = vmatpush1.xpose.msra.mxu0 0.0
    %2556 = vmatprep.subr.mxu0 0.0
    %2557 = vmatpush1.xpose.msra.mxu0 0.0
    %2558 = vmatprep.subr.mxu0 0.0
    %2559 = vmatpush1.xpose.msra.mxu0 0.0
    %2560 = vmatprep.subr.mxu0 0.0
    %2561 = vmatpush1.xpose.msra.mxu0 0.0
    %2562 = vmatprep.subr.mxu0 0.0
    %2563 = vmatpush1.xpose.msra.mxu0 0.0
    %2564 = vmatprep.subr.mxu0 0.0
    %2565 = vmatpush1.xpose.msra.mxu0 0.0
    %2566 = vmatprep.subr.mxu0 0.0
    %2567 = vmatpush1.xpose.msra.mxu0 0.0
    %2568 = vmatprep.subr.mxu0 0.0
    %2569 = vmatpush1.xpose.msra.mxu0 0.0
    %2570 = vmatprep.subr.mxu0 0.0
    %2571 = vmatpush1.xpose.msra.mxu0 0.0
    %2572 = vmatprep.subr.mxu0 0.0
    %2573 = vmatpush1.xpose.msra.mxu0 0.0
    %2574 = vmatprep.subr.mxu0 0.0
    %2575 = vmatpush1.xpose.msra.mxu0 0.0
    %2576 = vmatprep.subr.mxu0 0.0
    %2577 = vmatpush1.xpose.msra.mxu0 0.0
    %2578 = vmatprep.subr.mxu0 0.0
    %2579 = vmatpush1.xpose.msra.mxu0 %v2546
    %2580 = vmatprep.subr.mxu0 0.0
    %2581 = vmatpush2.xpose.msra.mxu0 0.0
    %2582 = vmatprep.subr.mxu0 0.0
    %2583 = vmatpush2.xpose.msra.mxu0 0.0
    %2584 = vmatprep.subr.mxu0 0.0
    %2585 = vmatpush2.xpose.msra.mxu0 0.0
    %2586 = vmatprep.subr.mxu0 0.0
    %2587 = vmatpush2.xpose.msra.mxu0 0.0
    %2588 = vmatprep.subr.mxu0 0.0
    %2589 = vmatpush2.xpose.msra.mxu0 0.0
    %2590 = vmatprep.subr.mxu0 0.0
    %2591 = vmatpush2.xpose.msra.mxu0 0.0
    %2592 = vmatprep.subr.mxu0 0.0
    %2593 = vmatpush2.xpose.msra.mxu0 0.0
    %2594 = vmatprep.subr.mxu0 0.0
    %2595 = vmatpush2.xpose.msra.mxu0 0.0
    %2596 = vmatprep.subr.mxu0 0.0
    %2597 = vmatpush2.xpose.msra.mxu0 0.0
    %2598 = vmatprep.subr.mxu0 0.0
    %2599 = vmatpush2.xpose.msra.mxu0 0.0
    %2600 = vmatprep.subr.mxu0 0.0
    %2601 = vmatpush2.xpose.msra.mxu0 0.0
    %2602 = vmatprep.subr.mxu0 0.0
    %2603 = vmatpush2.xpose.msra.mxu0 0.0
    %2604 = vmatprep.subr.mxu0 0.0
    %2605 = vmatpush2.xpose.msra.mxu0 0.0
    %2606 = vmatprep.subr.mxu0 0.0
    %2607 = vmatpush2.xpose.msra.mxu0 0.0
    %2608 = vmatprep.subr.mxu0 0.0
    %2609 = vmatpush2.xpose.msra.mxu0 0.0
    %2610 = vmatprep.subr.mxu0 0.0
    %2611 = vmatpush2.xpose.msra.mxu0 0.0
    %2612 = vmatprep.mubr.f32.mxu0 0.0
    %2613 = vmatmul.mubr.f32.gmra.mxu0 %v2544
    %v2614 = vpop.f32.mrf.mxu0
    %v2615 = vadd.f32 0.0, %v2614
    %v2616 = vpop.f32.mrf.mxu0
    %2617 = vdwg.mxu0
    %2618 = vrot.lane.b32.xlu0 %v2233, 96
    %v2619 = vpop.permute.xlu0 %2618
    %v2620 = vsel %vm378, %v2233, 0
    %v2622 = vsel %vm378, %v2619, 0
    %2624 = vmatprep.subr.mxu0 0.0
    %2625 = vmatpush1.xpose.msra.mxu0 0.0
    %2626 = vmatprep.subr.mxu0 0.0
    %2627 = vmatpush1.xpose.msra.mxu0 0.0
    %2628 = vmatprep.subr.mxu0 0.0
    %2629 = vmatpush1.xpose.msra.mxu0 0.0
    %2630 = vmatprep.subr.mxu0 0.0
    %2631 = vmatpush1.xpose.msra.mxu0 0.0
    %2632 = vmatprep.subr.mxu0 0.0
    %2633 = vmatpush1.xpose.msra.mxu0 0.0
    %2634 = vmatprep.subr.mxu0 0.0
    %2635 = vmatpush1.xpose.msra.mxu0 0.0
    %2636 = vmatprep.subr.mxu0 0.0
    %2637 = vmatpush1.xpose.msra.mxu0 0.0
    %2638 = vmatprep.subr.mxu0 0.0
    %2639 = vmatpush1.xpose.msra.mxu0 0.0
    %2640 = vmatprep.subr.mxu0 0.0
    %2641 = vmatpush1.xpose.msra.mxu0 0.0
    %2642 = vmatprep.subr.mxu0 0.0
    %2643 = vmatpush1.xpose.msra.mxu0 0.0
    %2644 = vmatprep.subr.mxu0 0.0
    %2645 = vmatpush1.xpose.msra.mxu0 0.0
    %2646 = vmatprep.subr.mxu0 0.0
    %2647 = vmatpush1.xpose.msra.mxu0 0.0
    %2648 = vmatprep.subr.mxu0 0.0
    %2649 = vmatpush1.xpose.msra.mxu0 0.0
    %2650 = vmatprep.subr.mxu0 0.0
    %2651 = vmatpush1.xpose.msra.mxu0 0.0
    %2652 = vmatprep.subr.mxu0 0.0
    %2653 = vmatpush1.xpose.msra.mxu0 0.0
    %2654 = vmatprep.subr.mxu0 0.0
    %2655 = vmatpush1.xpose.msra.mxu0 %v2622
    %2656 = vmatprep.subr.mxu0 0.0
    %2657 = vmatpush2.xpose.msra.mxu0 0.0
    %2658 = vmatprep.subr.mxu0 0.0
    %2659 = vmatpush2.xpose.msra.mxu0 0.0
    %2660 = vmatprep.subr.mxu0 0.0
    %2661 = vmatpush2.xpose.msra.mxu0 0.0
    %2662 = vmatprep.subr.mxu0 0.0
    %2663 = vmatpush2.xpose.msra.mxu0 0.0
    %2664 = vmatprep.subr.mxu0 0.0
    %2665 = vmatpush2.xpose.msra.mxu0 0.0
    %2666 = vmatprep.subr.mxu0 0.0
    %2667 = vmatpush2.xpose.msra.mxu0 0.0
    %2668 = vmatprep.subr.mxu0 0.0
    %2669 = vmatpush2.xpose.msra.mxu0 0.0
    %2670 = vmatprep.subr.mxu0 0.0
    %2671 = vmatpush2.xpose.msra.mxu0 0.0
    %2672 = vmatprep.subr.mxu0 0.0
    %2673 = vmatpush2.xpose.msra.mxu0 0.0
    %2674 = vmatprep.subr.mxu0 0.0
    %2675 = vmatpush2.xpose.msra.mxu0 0.0
    %2676 = vmatprep.subr.mxu0 0.0
    %2677 = vmatpush2.xpose.msra.mxu0 0.0
    %2678 = vmatprep.subr.mxu0 0.0
    %2679 = vmatpush2.xpose.msra.mxu0 0.0
    %2680 = vmatprep.subr.mxu0 0.0
    %2681 = vmatpush2.xpose.msra.mxu0 0.0
    %2682 = vmatprep.subr.mxu0 0.0
    %2683 = vmatpush2.xpose.msra.mxu0 0.0
    %2684 = vmatprep.subr.mxu0 0.0
    %2685 = vmatpush2.xpose.msra.mxu0 0.0
    %2686 = vmatprep.subr.mxu0 0.0
    %2687 = vmatpush2.xpose.msra.mxu0 0.0
    %2688 = vmatprep.mubr.f32.mxu0 0.0
    %2689 = vmatmul.mubr.f32.gmra.mxu0 %v2620
    %v2690 = vpop.f32.mrf.mxu0
    %v2691 = vadd.f32 0.0, %v2690
    %v2692 = vpop.f32.mrf.mxu0
    %2693 = vdwg.mxu0
    %2694 = vrot.lane.b32.xlu0 %v2235, 96
    %v2695 = vpop.permute.xlu0 %2694
    %v2696 = vsel %vm378, %v2235, 0
    %v2698 = vsel %vm378, %v2695, 0
    %2700 = vmatprep.subr.mxu0 0.0
    %2701 = vmatpush1.xpose.msra.mxu0 0.0
    %2702 = vmatprep.subr.mxu0 0.0
    %2703 = vmatpush1.xpose.msra.mxu0 0.0
    %2704 = vmatprep.subr.mxu0 0.0
    %2705 = vmatpush1.xpose.msra.mxu0 0.0
    %2706 = vmatprep.subr.mxu0 0.0
    %2707 = vmatpush1.xpose.msra.mxu0 0.0
    %2708 = vmatprep.subr.mxu0 0.0
    %2709 = vmatpush1.xpose.msra.mxu0 0.0
    %2710 = vmatprep.subr.mxu0 0.0
    %2711 = vmatpush1.xpose.msra.mxu0 0.0
    %2712 = vmatprep.subr.mxu0 0.0
    %2713 = vmatpush1.xpose.msra.mxu0 0.0
    %2714 = vmatprep.subr.mxu0 0.0
    %2715 = vmatpush1.xpose.msra.mxu0 0.0
    %2716 = vmatprep.subr.mxu0 0.0
    %2717 = vmatpush1.xpose.msra.mxu0 0.0
    %2718 = vmatprep.subr.mxu0 0.0
    %2719 = vmatpush1.xpose.msra.mxu0 0.0
    %2720 = vmatprep.subr.mxu0 0.0
    %2721 = vmatpush1.xpose.msra.mxu0 0.0
    %2722 = vmatprep.subr.mxu0 0.0
    %2723 = vmatpush1.xpose.msra.mxu0 0.0
    %2724 = vmatprep.subr.mxu0 0.0
    %2725 = vmatpush1.xpose.msra.mxu0 0.0
    %2726 = vmatprep.subr.mxu0 0.0
    %2727 = vmatpush1.xpose.msra.mxu0 0.0
    %2728 = vmatprep.subr.mxu0 0.0
    %2729 = vmatpush1.xpose.msra.mxu0 0.0
    %2730 = vmatprep.subr.mxu0 0.0
    %2731 = vmatpush1.xpose.msra.mxu0 %v2698
    %2732 = vmatprep.subr.mxu0 0.0
    %2733 = vmatpush2.xpose.msra.mxu0 0.0
    %2734 = vmatprep.subr.mxu0 0.0
    %2735 = vmatpush2.xpose.msra.mxu0 0.0
    %2736 = vmatprep.subr.mxu0 0.0
    %2737 = vmatpush2.xpose.msra.mxu0 0.0
    %2738 = vmatprep.subr.mxu0 0.0
    %2739 = vmatpush2.xpose.msra.mxu0 0.0
    %2740 = vmatprep.subr.mxu0 0.0
    %2741 = vmatpush2.xpose.msra.mxu0 0.0
    %2742 = vmatprep.subr.mxu0 0.0
    %2743 = vmatpush2.xpose.msra.mxu0 0.0
    %2744 = vmatprep.subr.mxu0 0.0
    %2745 = vmatpush2.xpose.msra.mxu0 0.0
    %2746 = vmatprep.subr.mxu0 0.0
    %2747 = vmatpush2.xpose.msra.mxu0 0.0
    %2748 = vmatprep.subr.mxu0 0.0
    %2749 = vmatpush2.xpose.msra.mxu0 0.0
    %2750 = vmatprep.subr.mxu0 0.0
    %2751 = vmatpush2.xpose.msra.mxu0 0.0
    %2752 = vmatprep.subr.mxu0 0.0
    %2753 = vmatpush2.xpose.msra.mxu0 0.0
    %2754 = vmatprep.subr.mxu0 0.0
    %2755 = vmatpush2.xpose.msra.mxu0 0.0
    %2756 = vmatprep.subr.mxu0 0.0
    %2757 = vmatpush2.xpose.msra.mxu0 0.0
    %2758 = vmatprep.subr.mxu0 0.0
    %2759 = vmatpush2.xpose.msra.mxu0 0.0
    %2760 = vmatprep.subr.mxu0 0.0
    %2761 = vmatpush2.xpose.msra.mxu0 0.0
    %2762 = vmatprep.subr.mxu0 0.0
    %2763 = vmatpush2.xpose.msra.mxu0 0.0
    %2764 = vmatprep.mubr.f32.mxu0 0.0
    %2765 = vmatmul.mubr.f32.gmra.mxu0 %v2696
    %v2766 = vpop.f32.mrf.mxu0
    %v2767 = vadd.f32 0.0, %v2766
    %v2768 = vpop.f32.mrf.mxu0
    %2769 = vdwg.mxu0
    %2770 = vrot.lane.b32.xlu0 %v2237, 96
    %v2771 = vpop.permute.xlu0 %2770
    %v2772 = vsel %vm378, %v2237, 0
    %v2774 = vsel %vm378, %v2771, 0
    %2776 = vmatprep.subr.mxu0 0.0
    %2777 = vmatpush1.xpose.msra.mxu0 0.0
    %2778 = vmatprep.subr.mxu0 0.0
    %2779 = vmatpush1.xpose.msra.mxu0 0.0
    %2780 = vmatprep.subr.mxu0 0.0
    %2781 = vmatpush1.xpose.msra.mxu0 0.0
    %2782 = vmatprep.subr.mxu0 0.0
    %2783 = vmatpush1.xpose.msra.mxu0 0.0
    %2784 = vmatprep.subr.mxu0 0.0
    %2785 = vmatpush1.xpose.msra.mxu0 0.0
    %2786 = vmatprep.subr.mxu0 0.0
    %2787 = vmatpush1.xpose.msra.mxu0 0.0
    %2788 = vmatprep.subr.mxu0 0.0
    %2789 = vmatpush1.xpose.msra.mxu0 0.0
    %2790 = vmatprep.subr.mxu0 0.0
    %2791 = vmatpush1.xpose.msra.mxu0 0.0
    %2792 = vmatprep.subr.mxu0 0.0
    %2793 = vmatpush1.xpose.msra.mxu0 0.0
    %2794 = vmatprep.subr.mxu0 0.0
    %2795 = vmatpush1.xpose.msra.mxu0 0.0
    %2796 = vmatprep.subr.mxu0 0.0
    %2797 = vmatpush1.xpose.msra.mxu0 0.0
    %2798 = vmatprep.subr.mxu0 0.0
    %2799 = vmatpush1.xpose.msra.mxu0 0.0
    %2800 = vmatprep.subr.mxu0 0.0
    %2801 = vmatpush1.xpose.msra.mxu0 0.0
    %2802 = vmatprep.subr.mxu0 0.0
    %2803 = vmatpush1.xpose.msra.mxu0 0.0
    %2804 = vmatprep.subr.mxu0 0.0
    %2805 = vmatpush1.xpose.msra.mxu0 0.0
    %2806 = vmatprep.subr.mxu0 0.0
    %2807 = vmatpush1.xpose.msra.mxu0 %v2774
    %2808 = vmatprep.subr.mxu0 0.0
    %2809 = vmatpush2.xpose.msra.mxu0 0.0
    %2810 = vmatprep.subr.mxu0 0.0
    %2811 = vmatpush2.xpose.msra.mxu0 0.0
    %2812 = vmatprep.subr.mxu0 0.0
    %2813 = vmatpush2.xpose.msra.mxu0 0.0
    %2814 = vmatprep.subr.mxu0 0.0
    %2815 = vmatpush2.xpose.msra.mxu0 0.0
    %2816 = vmatprep.subr.mxu0 0.0
    %2817 = vmatpush2.xpose.msra.mxu0 0.0
    %2818 = vmatprep.subr.mxu0 0.0
    %2819 = vmatpush2.xpose.msra.mxu0 0.0
    %2820 = vmatprep.subr.mxu0 0.0
    %2821 = vmatpush2.xpose.msra.mxu0 0.0
    %2822 = vmatprep.subr.mxu0 0.0
    %2823 = vmatpush2.xpose.msra.mxu0 0.0
    %2824 = vmatprep.subr.mxu0 0.0
    %2825 = vmatpush2.xpose.msra.mxu0 0.0
    %2826 = vmatprep.subr.mxu0 0.0
    %2827 = vmatpush2.xpose.msra.mxu0 0.0
    %2828 = vmatprep.subr.mxu0 0.0
    %2829 = vmatpush2.xpose.msra.mxu0 0.0
    %2830 = vmatprep.subr.mxu0 0.0
    %2831 = vmatpush2.xpose.msra.mxu0 0.0
    %2832 = vmatprep.subr.mxu0 0.0
    %2833 = vmatpush2.xpose.msra.mxu0 0.0
    %2834 = vmatprep.subr.mxu0 0.0
    %2835 = vmatpush2.xpose.msra.mxu0 0.0
    %2836 = vmatprep.subr.mxu0 0.0
    %2837 = vmatpush2.xpose.msra.mxu0 0.0
    %2838 = vmatprep.subr.mxu0 0.0
    %2839 = vmatpush2.xpose.msra.mxu0 0.0
    %2840 = vmatprep.mubr.f32.mxu0 0.0
    %2841 = vmatmul.mubr.f32.gmra.mxu0 %v2772
    %v2842 = vpop.f32.mrf.mxu0
    %v2843 = vadd.f32 0.0, %v2842
    %v2844 = vpop.f32.mrf.mxu0
    %2845 = vdwg.mxu0
    %v2846 = vmul.f32 %v2311, 0.35355338
    %v2847 = vmul.f32 %v2387, 0.35355338
    %v2848 = vmul.f32 %v2463, 0.35355338
    %v2849 = vmul.f32 %v2539, 0.35355338
    %v2850 = vmul.f32 %v2615, 0.35355338
    %v2851 = vmul.f32 %v2691, 0.35355338
    %v2852 = vmul.f32 %v2767, 0.35355338
    %v2853 = vmul.f32 %v2843, 0.35355338
    %v2854 = vadd.f32 %v2846, %v996
    %v2855 = vadd.f32 %v2847, %v1000
    %v2856 = vadd.f32 %v2848, %v996
    %v2857 = vadd.f32 %v2849, %v1000
    %v2858 = vadd.f32 %v2850, %v996
    %v2859 = vadd.f32 %v2851, %v1000
    %v2860 = vadd.f32 %v2852, %v996
    %v2861 = vadd.f32 %v2853, %v1000
    %v2862 = vsel %vm378, %v2854, -inf
    %2863 = vmax.xlane.f32.xlu0 %v2862
    %v2864 = vpop.xlane.xlu0 %2863
    %v2865 = vsel %vm378, %v2855, -inf
    %2866 = vmax.xlane.f32.xlu0 %v2865
    %v2867 = vpop.xlane.xlu0 %2866
    %v2868 = vsel %vm378, %v2856, -inf
    %2869 = vmax.xlane.f32.xlu0 %v2868
    %v2870 = vpop.xlane.xlu0 %2869
    %v2871 = vsel %vm378, %v2857, -inf
    %2872 = vmax.xlane.f32.xlu0 %v2871
    %v2873 = vpop.xlane.xlu0 %2872
    %v2874 = vsel %vm378, %v2858, -inf
    %2875 = vmax.xlane.f32.xlu0 %v2874
    %v2876 = vpop.xlane.xlu0 %2875
    %v2877 = vsel %vm378, %v2859, -inf
    %2878 = vmax.xlane.f32.xlu0 %v2877
    %v2879 = vpop.xlane.xlu0 %2878
    %v2880 = vsel %vm378, %v2860, -inf
    %2881 = vmax.xlane.f32.xlu0 %v2880
    %v2882 = vpop.xlane.xlu0 %2881
    %v2883 = vsel %vm378, %v2861, -inf
    %2884 = vmax.xlane.f32.xlu0 %v2883
    %v2885 = vpop.xlane.xlu0 %2884
    %v2886 = vsub.f32 %v2854, %v2864
    %v2887 = vsub.f32 %v2855, %v2867
    %v2888 = vsub.f32 %v2856, %v2870
    %v2889 = vsub.f32 %v2857, %v2873
    %v2890 = vsub.f32 %v2858, %v2876
    %v2891 = vsub.f32 %v2859, %v2879
    %v2892 = vsub.f32 %v2860, %v2882
    %v2893 = vsub.f32 %v2861, %v2885
    %v2894 = vmul.f32 %v2886, 1.442695
    %v2895 = vpow.pop %v2894
    %v2896 = vmul.f32 %v2887, 1.442695
    %v2897 = vpow.pop %v2896
    %v2898 = vmul.f32 %v2888, 1.442695
    %v2899 = vpow.pop %v2898
    %v2900 = vmul.f32 %v2889, 1.442695
    %v2901 = vpow.pop %v2900
    %v2902 = vmul.f32 %v2890, 1.442695
    %v2903 = vpow.pop %v2902
    %v2904 = vmul.f32 %v2891, 1.442695
    %v2905 = vpow.pop %v2904
    %v2906 = vmul.f32 %v2892, 1.442695
    %v2907 = vpow.pop %v2906
    %v2908 = vmul.f32 %v2893, 1.442695
    %v2909 = vpow.pop %v2908
    %v2910 = vsel %vm378, %v2895, 0.0
    %2911 = vadd.xlane.f32.xlu0 %v2910
    %v2912 = vpop.xlane.xlu0 %2911
    %v2913 = vsel %vm378, %v2897, 0.0
    %2914 = vadd.xlane.f32.xlu0 %v2913
    %v2915 = vpop.xlane.xlu0 %2914
    %v2916 = vsel %vm378, %v2899, 0.0
    %2917 = vadd.xlane.f32.xlu0 %v2916
    %v2918 = vpop.xlane.xlu0 %2917
    %v2919 = vsel %vm378, %v2901, 0.0
    %2920 = vadd.xlane.f32.xlu0 %v2919
    %v2921 = vpop.xlane.xlu0 %2920
    %v2922 = vsel %vm378, %v2903, 0.0
    %2923 = vadd.xlane.f32.xlu0 %v2922
    %v2924 = vpop.xlane.xlu0 %2923
    %v2925 = vsel %vm378, %v2905, 0.0
    %2926 = vadd.xlane.f32.xlu0 %v2925
    %v2927 = vpop.xlane.xlu0 %2926
    %v2928 = vsel %vm378, %v2907, 0.0
    %2929 = vadd.xlane.f32.xlu0 %v2928
    %v2930 = vpop.xlane.xlu0 %2929
    %v2931 = vsel %vm378, %v2909, 0.0
    %2932 = vadd.xlane.f32.xlu0 %v2931
    %v2933 = vpop.xlane.xlu0 %2932
    %v2934 = vrcp.pop %v2912
    %v2935 = vrcp.pop %v2915
    %v2936 = vrcp.pop %v2918
    %v2937 = vrcp.pop %v2921
    %v2938 = vrcp.pop %v2924
    %v2939 = vrcp.pop %v2927
    %v2940 = vrcp.pop %v2930
    %v2941 = vrcp.pop %v2933
    %v2942 = vmul.f32 %v2895, %v2934
    %v2943 = vmul.f32 %v2897, %v2935
    %v2944 = vmul.f32 %v2899, %v2936
    %v2945 = vmul.f32 %v2901, %v2937
    %v2946 = vmul.f32 %v2903, %v2938
    %v2947 = vmul.f32 %v2905, %v2939
    %v2948 = vmul.f32 %v2907, %v2940
    %v2949 = vmul.f32 %v2909, %v2941
    %2950 = vrot.lane.b32.xlu0 %v2216, 64
    %v2951 = vpop.permute.xlu0 %2950
    %v2954 = vsel %vm378, %v2942, 0
    %2956 = vmatprep.subr.mxu0 0.0
    %2957 = vmatpush1.msra.mxu0 0.0
    %2958 = vmatprep.subr.mxu0 0.0
    %2959 = vmatpush1.msra.mxu0 0.0
    %2960 = vmatprep.subr.mxu0 0.0
    %2961 = vmatpush1.msra.mxu0 0.0
    %2962 = vmatprep.subr.mxu0 0.0
    %2963 = vmatpush1.msra.mxu0 0.0
    %2964 = vmatprep.subr.mxu0 0.0
    %2965 = vmatpush1.msra.mxu0 0.0
    %2966 = vmatprep.subr.mxu0 0.0
    %2967 = vmatpush1.msra.mxu0 0.0
    %2968 = vmatprep.subr.mxu0 0.0
    %2969 = vmatpush1.msra.mxu0 0.0
    %2970 = vmatprep.subr.mxu0 0.0
    %2971 = vmatpush1.msra.mxu0 0.0
    %2972 = vmatprep.subr.mxu0 0.0
    %2973 = vmatpush1.msra.mxu0 0.0
    %2974 = vmatprep.subr.mxu0 0.0
    %2975 = vmatpush1.msra.mxu0 0.0
    %2976 = vmatprep.subr.mxu0 0.0
    %2977 = vmatpush1.msra.mxu0 0.0
    %2978 = vmatprep.subr.mxu0 0.0
    %2979 = vmatpush1.msra.mxu0 0.0
    %2980 = vmatprep.subr.mxu0 0.0
    %2981 = vmatpush1.msra.mxu0 0.0
    %2982 = vmatprep.subr.mxu0 0.0
    %2983 = vmatpush1.msra.mxu0 0.0
    %2984 = vmatprep.subr.mxu0 0.0
    %2985 = vmatpush1.msra.mxu0 0.0
    %2986 = vmatprep.subr.mxu0 0.0
    %2987 = vmatpush1.msra.mxu0 %v2951
    %2988 = vmatprep.subr.mxu0 0.0
    %2989 = vmatpush2.msra.mxu0 0.0
    %2990 = vmatprep.subr.mxu0 0.0
    %2991 = vmatpush2.msra.mxu0 0.0
    %2992 = vmatprep.subr.mxu0 0.0
    %2993 = vmatpush2.msra.mxu0 0.0
    %2994 = vmatprep.subr.mxu0 0.0
    %2995 = vmatpush2.msra.mxu0 0.0
    %2996 = vmatprep.subr.mxu0 0.0
    %2997 = vmatpush2.msra.mxu0 0.0
    %2998 = vmatprep.subr.mxu0 0.0
    %2999 = vmatpush2.msra.mxu0 0.0
    %3000 = vmatprep.subr.mxu0 0.0
    %3001 = vmatpush2.msra.mxu0 0.0
    %3002 = vmatprep.subr.mxu0 0.0
    %3003 = vmatpush2.msra.mxu0 0.0
    %3004 = vmatprep.subr.mxu0 0.0
    %3005 = vmatpush2.msra.mxu0 0.0
    %3006 = vmatprep.subr.mxu0 0.0
    %3007 = vmatpush2.msra.mxu0 0.0
    %3008 = vmatprep.subr.mxu0 0.0
    %3009 = vmatpush2.msra.mxu0 0.0
    %3010 = vmatprep.subr.mxu0 0.0
    %3011 = vmatpush2.msra.mxu0 0.0
    %3012 = vmatprep.subr.mxu0 0.0
    %3013 = vmatpush2.msra.mxu0 0.0
    %3014 = vmatprep.subr.mxu0 0.0
    %3015 = vmatpush2.msra.mxu0 0.0
    %3016 = vmatprep.subr.mxu0 0.0
    %3017 = vmatpush2.msra.mxu0 0.0
    %3018 = vmatprep.subr.mxu0 0.0
    %3019 = vmatpush2.msra.mxu0 0.0
    %3020 = vmatprep.mubr.f32.mxu0 0.0
    %3021 = vmatmul.mubr.f32.gmra.mxu0 %v2954
    %v3022 = vpop.f32.mrf.mxu0
    %v3023 = vadd.f32 0.0, %v3022
    %v3024 = vpop.f32.mrf.mxu0
    %3025 = vdwg.mxu0
    %3026 = vrot.lane.b32.xlu0 %v2221, 64
    %v3027 = vpop.permute.xlu0 %3026
    %v3030 = vsel %vm378, %v2943, 0
    %3032 = vmatprep.subr.mxu0 0.0
    %3033 = vmatpush1.msra.mxu0 0.0
    %3034 = vmatprep.subr.mxu0 0.0
    %3035 = vmatpush1.msra.mxu0 0.0
    %3036 = vmatprep.subr.mxu0 0.0
    %3037 = vmatpush1.msra.mxu0 0.0
    %3038 = vmatprep.subr.mxu0 0.0
    %3039 = vmatpush1.msra.mxu0 0.0
    %3040 = vmatprep.subr.mxu0 0.0
    %3041 = vmatpush1.msra.mxu0 0.0
    %3042 = vmatprep.subr.mxu0 0.0
    %3043 = vmatpush1.msra.mxu0 0.0
    %3044 = vmatprep.subr.mxu0 0.0
    %3045 = vmatpush1.msra.mxu0 0.0
    %3046 = vmatprep.subr.mxu0 0.0
    %3047 = vmatpush1.msra.mxu0 0.0
    %3048 = vmatprep.subr.mxu0 0.0
    %3049 = vmatpush1.msra.mxu0 0.0
    %3050 = vmatprep.subr.mxu0 0.0
    %3051 = vmatpush1.msra.mxu0 0.0
    %3052 = vmatprep.subr.mxu0 0.0
    %3053 = vmatpush1.msra.mxu0 0.0
    %3054 = vmatprep.subr.mxu0 0.0
    %3055 = vmatpush1.msra.mxu0 0.0
    %3056 = vmatprep.subr.mxu0 0.0
    %3057 = vmatpush1.msra.mxu0 0.0
    %3058 = vmatprep.subr.mxu0 0.0
    %3059 = vmatpush1.msra.mxu0 0.0
    %3060 = vmatprep.subr.mxu0 0.0
    %3061 = vmatpush1.msra.mxu0 0.0
    %3062 = vmatprep.subr.mxu0 0.0
    %3063 = vmatpush1.msra.mxu0 %v3027
    %3064 = vmatprep.subr.mxu0 0.0
    %3065 = vmatpush2.msra.mxu0 0.0
    %3066 = vmatprep.subr.mxu0 0.0
    %3067 = vmatpush2.msra.mxu0 0.0
    %3068 = vmatprep.subr.mxu0 0.0
    %3069 = vmatpush2.msra.mxu0 0.0
    %3070 = vmatprep.subr.mxu0 0.0
    %3071 = vmatpush2.msra.mxu0 0.0
    %3072 = vmatprep.subr.mxu0 0.0
    %3073 = vmatpush2.msra.mxu0 0.0
    %3074 = vmatprep.subr.mxu0 0.0
    %3075 = vmatpush2.msra.mxu0 0.0
    %3076 = vmatprep.subr.mxu0 0.0
    %3077 = vmatpush2.msra.mxu0 0.0
    %3078 = vmatprep.subr.mxu0 0.0
    %3079 = vmatpush2.msra.mxu0 0.0
    %3080 = vmatprep.subr.mxu0 0.0
    %3081 = vmatpush2.msra.mxu0 0.0
    %3082 = vmatprep.subr.mxu0 0.0
    %3083 = vmatpush2.msra.mxu0 0.0
    %3084 = vmatprep.subr.mxu0 0.0
    %3085 = vmatpush2.msra.mxu0 0.0
    %3086 = vmatprep.subr.mxu0 0.0
    %3087 = vmatpush2.msra.mxu0 0.0
    %3088 = vmatprep.subr.mxu0 0.0
    %3089 = vmatpush2.msra.mxu0 0.0
    %3090 = vmatprep.subr.mxu0 0.0
    %3091 = vmatpush2.msra.mxu0 0.0
    %3092 = vmatprep.subr.mxu0 0.0
    %3093 = vmatpush2.msra.mxu0 0.0
    %3094 = vmatprep.subr.mxu0 0.0
    %3095 = vmatpush2.msra.mxu0 0.0
    %3096 = vmatprep.mubr.f32.mxu0 0.0
    %3097 = vmatmul.mubr.f32.gmra.mxu0 %v3030
    %v3098 = vpop.f32.mrf.mxu0
    %v3099 = vadd.f32 0.0, %v3098
    %v3100 = vpop.f32.mrf.mxu0
    %3101 = vdwg.mxu0
    %3102 = vrot.lane.b32.xlu0 %v2227, 64
    %v3103 = vpop.permute.xlu0 %3102
    %v3106 = vsel %vm378, %v2944, 0
    %3108 = vmatprep.subr.mxu0 0.0
    %3109 = vmatpush1.msra.mxu0 0.0
    %3110 = vmatprep.subr.mxu0 0.0
    %3111 = vmatpush1.msra.mxu0 0.0
    %3112 = vmatprep.subr.mxu0 0.0
    %3113 = vmatpush1.msra.mxu0 0.0
    %3114 = vmatprep.subr.mxu0 0.0
    %3115 = vmatpush1.msra.mxu0 0.0
    %3116 = vmatprep.subr.mxu0 0.0
    %3117 = vmatpush1.msra.mxu0 0.0
    %3118 = vmatprep.subr.mxu0 0.0
    %3119 = vmatpush1.msra.mxu0 0.0
    %3120 = vmatprep.subr.mxu0 0.0
    %3121 = vmatpush1.msra.mxu0 0.0
    %3122 = vmatprep.subr.mxu0 0.0
    %3123 = vmatpush1.msra.mxu0 0.0
    %3124 = vmatprep.subr.mxu0 0.0
    %3125 = vmatpush1.msra.mxu0 0.0
    %3126 = vmatprep.subr.mxu0 0.0
    %3127 = vmatpush1.msra.mxu0 0.0
    %3128 = vmatprep.subr.mxu0 0.0
    %3129 = vmatpush1.msra.mxu0 0.0
    %3130 = vmatprep.subr.mxu0 0.0
    %3131 = vmatpush1.msra.mxu0 0.0
    %3132 = vmatprep.subr.mxu0 0.0
    %3133 = vmatpush1.msra.mxu0 0.0
    %3134 = vmatprep.subr.mxu0 0.0
    %3135 = vmatpush1.msra.mxu0 0.0
    %3136 = vmatprep.subr.mxu0 0.0
    %3137 = vmatpush1.msra.mxu0 0.0
    %3138 = vmatprep.subr.mxu0 0.0
    %3139 = vmatpush1.msra.mxu0 %v3103
    %3140 = vmatprep.subr.mxu0 0.0
    %3141 = vmatpush2.msra.mxu0 0.0
    %3142 = vmatprep.subr.mxu0 0.0
    %3143 = vmatpush2.msra.mxu0 0.0
    %3144 = vmatprep.subr.mxu0 0.0
    %3145 = vmatpush2.msra.mxu0 0.0
    %3146 = vmatprep.subr.mxu0 0.0
    %3147 = vmatpush2.msra.mxu0 0.0
    %3148 = vmatprep.subr.mxu0 0.0
    %3149 = vmatpush2.msra.mxu0 0.0
    %3150 = vmatprep.subr.mxu0 0.0
    %3151 = vmatpush2.msra.mxu0 0.0
    %3152 = vmatprep.subr.mxu0 0.0
    %3153 = vmatpush2.msra.mxu0 0.0
    %3154 = vmatprep.subr.mxu0 0.0
    %3155 = vmatpush2.msra.mxu0 0.0
    %3156 = vmatprep.subr.mxu0 0.0
    %3157 = vmatpush2.msra.mxu0 0.0
    %3158 = vmatprep.subr.mxu0 0.0
    %3159 = vmatpush2.msra.mxu0 0.0
    %3160 = vmatprep.subr.mxu0 0.0
    %3161 = vmatpush2.msra.mxu0 0.0
    %3162 = vmatprep.subr.mxu0 0.0
    %3163 = vmatpush2.msra.mxu0 0.0
    %3164 = vmatprep.subr.mxu0 0.0
    %3165 = vmatpush2.msra.mxu0 0.0
    %3166 = vmatprep.subr.mxu0 0.0
    %3167 = vmatpush2.msra.mxu0 0.0
    %3168 = vmatprep.subr.mxu0 0.0
    %3169 = vmatpush2.msra.mxu0 0.0
    %3170 = vmatprep.subr.mxu0 0.0
    %3171 = vmatpush2.msra.mxu0 0.0
    %3172 = vmatprep.mubr.f32.mxu0 0.0
    %3173 = vmatmul.mubr.f32.gmra.mxu0 %v3106
    %v3174 = vpop.f32.mrf.mxu0
    %v3175 = vadd.f32 0.0, %v3174
    %v3176 = vpop.f32.mrf.mxu0
    %3177 = vdwg.mxu0
    %3178 = vrot.lane.b32.xlu0 %v2229, 64
    %v3179 = vpop.permute.xlu0 %3178
    %v3182 = vsel %vm378, %v2945, 0
    %3184 = vmatprep.subr.mxu0 0.0
    %3185 = vmatpush1.msra.mxu0 0.0
    %3186 = vmatprep.subr.mxu0 0.0
    %3187 = vmatpush1.msra.mxu0 0.0
    %3188 = vmatprep.subr.mxu0 0.0
    %3189 = vmatpush1.msra.mxu0 0.0
    %3190 = vmatprep.subr.mxu0 0.0
    %3191 = vmatpush1.msra.mxu0 0.0
    %3192 = vmatprep.subr.mxu0 0.0
    %3193 = vmatpush1.msra.mxu0 0.0
    %3194 = vmatprep.subr.mxu0 0.0
    %3195 = vmatpush1.msra.mxu0 0.0
    %3196 = vmatprep.subr.mxu0 0.0
    %3197 = vmatpush1.msra.mxu0 0.0
    %3198 = vmatprep.subr.mxu0 0.0
    %3199 = vmatpush1.msra.mxu0 0.0
    %3200 = vmatprep.subr.mxu0 0.0
    %3201 = vmatpush1.msra.mxu0 0.0
    %3202 = vmatprep.subr.mxu0 0.0
    %3203 = vmatpush1.msra.mxu0 0.0
    %3204 = vmatprep.subr.mxu0 0.0
    %3205 = vmatpush1.msra.mxu0 0.0
    %3206 = vmatprep.subr.mxu0 0.0
    %3207 = vmatpush1.msra.mxu0 0.0
    %3208 = vmatprep.subr.mxu0 0.0
    %3209 = vmatpush1.msra.mxu0 0.0
    %3210 = vmatprep.subr.mxu0 0.0
    %3211 = vmatpush1.msra.mxu0 0.0
    %3212 = vmatprep.subr.mxu0 0.0
    %3213 = vmatpush1.msra.mxu0 0.0
    %3214 = vmatprep.subr.mxu0 0.0
    %3215 = vmatpush1.msra.mxu0 %v3179
    %3216 = vmatprep.subr.mxu0 0.0
    %3217 = vmatpush2.msra.mxu0 0.0
    %3218 = vmatprep.subr.mxu0 0.0
    %3219 = vmatpush2.msra.mxu0 0.0
    %3220 = vmatprep.subr.mxu0 0.0
    %3221 = vmatpush2.msra.mxu0 0.0
    %3222 = vmatprep.subr.mxu0 0.0
    %3223 = vmatpush2.msra.mxu0 0.0
    %3224 = vmatprep.subr.mxu0 0.0
    %3225 = vmatpush2.msra.mxu0 0.0
    %3226 = vmatprep.subr.mxu0 0.0
    %3227 = vmatpush2.msra.mxu0 0.0
    %3228 = vmatprep.subr.mxu0 0.0
    %3229 = vmatpush2.msra.mxu0 0.0
    %3230 = vmatprep.subr.mxu0 0.0
    %3231 = vmatpush2.msra.mxu0 0.0
    %3232 = vmatprep.subr.mxu0 0.0
    %3233 = vmatpush2.msra.mxu0 0.0
    %3234 = vmatprep.subr.mxu0 0.0
    %3235 = vmatpush2.msra.mxu0 0.0
    %3236 = vmatprep.subr.mxu0 0.0
    %3237 = vmatpush2.msra.mxu0 0.0
    %3238 = vmatprep.subr.mxu0 0.0
    %3239 = vmatpush2.msra.mxu0 0.0
    %3240 = vmatprep.subr.mxu0 0.0
    %3241 = vmatpush2.msra.mxu0 0.0
    %3242 = vmatprep.subr.mxu0 0.0
    %3243 = vmatpush2.msra.mxu0 0.0
    %3244 = vmatprep.subr.mxu0 0.0
    %3245 = vmatpush2.msra.mxu0 0.0
    %3246 = vmatprep.subr.mxu0 0.0
    %3247 = vmatpush2.msra.mxu0 0.0
    %3248 = vmatprep.mubr.f32.mxu0 0.0
    %3249 = vmatmul.mubr.f32.gmra.mxu0 %v3182
    %v3250 = vpop.f32.mrf.mxu0
    %v3251 = vadd.f32 0.0, %v3250
    %v3252 = vpop.f32.mrf.mxu0
    %3253 = vdwg.mxu0
    %3254 = vrot.lane.b32.xlu0 %v2231, 64
    %v3255 = vpop.permute.xlu0 %3254
    %v3258 = vsel %vm378, %v2946, 0
    %3260 = vmatprep.subr.mxu0 0.0
    %3261 = vmatpush1.msra.mxu0 0.0
    %3262 = vmatprep.subr.mxu0 0.0
    %3263 = vmatpush1.msra.mxu0 0.0
    %3264 = vmatprep.subr.mxu0 0.0
    %3265 = vmatpush1.msra.mxu0 0.0
    %3266 = vmatprep.subr.mxu0 0.0
    %3267 = vmatpush1.msra.mxu0 0.0
    %3268 = vmatprep.subr.mxu0 0.0
    %3269 = vmatpush1.msra.mxu0 0.0
    %3270 = vmatprep.subr.mxu0 0.0
    %3271 = vmatpush1.msra.mxu0 0.0
    %3272 = vmatprep.subr.mxu0 0.0
    %3273 = vmatpush1.msra.mxu0 0.0
    %3274 = vmatprep.subr.mxu0 0.0
    %3275 = vmatpush1.msra.mxu0 0.0
    %3276 = vmatprep.subr.mxu0 0.0
    %3277 = vmatpush1.msra.mxu0 0.0
    %3278 = vmatprep.subr.mxu0 0.0
    %3279 = vmatpush1.msra.mxu0 0.0
    %3280 = vmatprep.subr.mxu0 0.0
    %3281 = vmatpush1.msra.mxu0 0.0
    %3282 = vmatprep.subr.mxu0 0.0
    %3283 = vmatpush1.msra.mxu0 0.0
    %3284 = vmatprep.subr.mxu0 0.0
    %3285 = vmatpush1.msra.mxu0 0.0
    %3286 = vmatprep.subr.mxu0 0.0
    %3287 = vmatpush1.msra.mxu0 0.0
    %3288 = vmatprep.subr.mxu0 0.0
    %3289 = vmatpush1.msra.mxu0 0.0
    %3290 = vmatprep.subr.mxu0 0.0
    %3291 = vmatpush1.msra.mxu0 %v3255
    %3292 = vmatprep.subr.mxu0 0.0
    %3293 = vmatpush2.msra.mxu0 0.0
    %3294 = vmatprep.subr.mxu0 0.0
    %3295 = vmatpush2.msra.mxu0 0.0
    %3296 = vmatprep.subr.mxu0 0.0
    %3297 = vmatpush2.msra.mxu0 0.0
    %3298 = vmatprep.subr.mxu0 0.0
    %3299 = vmatpush2.msra.mxu0 0.0
    %3300 = vmatprep.subr.mxu0 0.0
    %3301 = vmatpush2.msra.mxu0 0.0
    %3302 = vmatprep.subr.mxu0 0.0
    %3303 = vmatpush2.msra.mxu0 0.0
    %3304 = vmatprep.subr.mxu0 0.0
    %3305 = vmatpush2.msra.mxu0 0.0
    %3306 = vmatprep.subr.mxu0 0.0
    %3307 = vmatpush2.msra.mxu0 0.0
    %3308 = vmatprep.subr.mxu0 0.0
    %3309 = vmatpush2.msra.mxu0 0.0
    %3310 = vmatprep.subr.mxu0 0.0
    %3311 = vmatpush2.msra.mxu0 0.0
    %3312 = vmatprep.subr.mxu0 0.0
    %3313 = vmatpush2.msra.mxu0 0.0
    %3314 = vmatprep.subr.mxu0 0.0
    %3315 = vmatpush2.msra.mxu0 0.0
    %3316 = vmatprep.subr.mxu0 0.0
    %3317 = vmatpush2.msra.mxu0 0.0
    %3318 = vmatprep.subr.mxu0 0.0
    %3319 = vmatpush2.msra.mxu0 0.0
    %3320 = vmatprep.subr.mxu0 0.0
    %3321 = vmatpush2.msra.mxu0 0.0
    %3322 = vmatprep.subr.mxu0 0.0
    %3323 = vmatpush2.msra.mxu0 0.0
    %3324 = vmatprep.mubr.f32.mxu0 0.0
    %3325 = vmatmul.mubr.f32.gmra.mxu0 %v3258
    %v3326 = vpop.f32.mrf.mxu0
    %v3327 = vadd.f32 0.0, %v3326
    %v3328 = vpop.f32.mrf.mxu0
    %3329 = vdwg.mxu0
    %3330 = vrot.lane.b32.xlu0 %v2233, 64
    %v3331 = vpop.permute.xlu0 %3330
    %v3334 = vsel %vm378, %v2947, 0
    %3336 = vmatprep.subr.mxu0 0.0
    %3337 = vmatpush1.msra.mxu0 0.0
    %3338 = vmatprep.subr.mxu0 0.0
    %3339 = vmatpush1.msra.mxu0 0.0
    %3340 = vmatprep.subr.mxu0 0.0
    %3341 = vmatpush1.msra.mxu0 0.0
    %3342 = vmatprep.subr.mxu0 0.0
    %3343 = vmatpush1.msra.mxu0 0.0
    %3344 = vmatprep.subr.mxu0 0.0
    %3345 = vmatpush1.msra.mxu0 0.0
    %3346 = vmatprep.subr.mxu0 0.0
    %3347 = vmatpush1.msra.mxu0 0.0
    %3348 = vmatprep.subr.mxu0 0.0
    %3349 = vmatpush1.msra.mxu0 0.0
    %3350 = vmatprep.subr.mxu0 0.0
    %3351 = vmatpush1.msra.mxu0 0.0
    %3352 = vmatprep.subr.mxu0 0.0
    %3353 = vmatpush1.msra.mxu0 0.0
    %3354 = vmatprep.subr.mxu0 0.0
    %3355 = vmatpush1.msra.mxu0 0.0
    %3356 = vmatprep.subr.mxu0 0.0
    %3357 = vmatpush1.msra.mxu0 0.0
    %3358 = vmatprep.subr.mxu0 0.0
    %3359 = vmatpush1.msra.mxu0 0.0
    %3360 = vmatprep.subr.mxu0 0.0
    %3361 = vmatpush1.msra.mxu0 0.0
    %3362 = vmatprep.subr.mxu0 0.0
    %3363 = vmatpush1.msra.mxu0 0.0
    %3364 = vmatprep.subr.mxu0 0.0
    %3365 = vmatpush1.msra.mxu0 0.0
    %3366 = vmatprep.subr.mxu0 0.0
    %3367 = vmatpush1.msra.mxu0 %v3331
    %3368 = vmatprep.subr.mxu0 0.0
    %3369 = vmatpush2.msra.mxu0 0.0
    %3370 = vmatprep.subr.mxu0 0.0
    %3371 = vmatpush2.msra.mxu0 0.0
    %3372 = vmatprep.subr.mxu0 0.0
    %3373 = vmatpush2.msra.mxu0 0.0
    %3374 = vmatprep.subr.mxu0 0.0
    %3375 = vmatpush2.msra.mxu0 0.0
    %3376 = vmatprep.subr.mxu0 0.0
    %3377 = vmatpush2.msra.mxu0 0.0
    %3378 = vmatprep.subr.mxu0 0.0
    %3379 = vmatpush2.msra.mxu0 0.0
    %3380 = vmatprep.subr.mxu0 0.0
    %3381 = vmatpush2.msra.mxu0 0.0
    %3382 = vmatprep.subr.mxu0 0.0
    %3383 = vmatpush2.msra.mxu0 0.0
    %3384 = vmatprep.subr.mxu0 0.0
    %3385 = vmatpush2.msra.mxu0 0.0
    %3386 = vmatprep.subr.mxu0 0.0
    %3387 = vmatpush2.msra.mxu0 0.0
    %3388 = vmatprep.subr.mxu0 0.0
    %3389 = vmatpush2.msra.mxu0 0.0
    %3390 = vmatprep.subr.mxu0 0.0
    %3391 = vmatpush2.msra.mxu0 0.0
    %3392 = vmatprep.subr.mxu0 0.0
    %3393 = vmatpush2.msra.mxu0 0.0
    %3394 = vmatprep.subr.mxu0 0.0
    %3395 = vmatpush2.msra.mxu0 0.0
    %3396 = vmatprep.subr.mxu0 0.0
    %3397 = vmatpush2.msra.mxu0 0.0
    %3398 = vmatprep.subr.mxu0 0.0
    %3399 = vmatpush2.msra.mxu0 0.0
    %3400 = vmatprep.mubr.f32.mxu0 0.0
    %3401 = vmatmul.mubr.f32.gmra.mxu0 %v3334
    %v3402 = vpop.f32.mrf.mxu0
    %v3403 = vadd.f32 0.0, %v3402
    %v3404 = vpop.f32.mrf.mxu0
    %3405 = vdwg.mxu0
    %3406 = vrot.lane.b32.xlu0 %v2235, 64
    %v3407 = vpop.permute.xlu0 %3406
    %v3410 = vsel %vm378, %v2948, 0
    %3412 = vmatprep.subr.mxu0 0.0
    %3413 = vmatpush1.msra.mxu0 0.0
    %3414 = vmatprep.subr.mxu0 0.0
    %3415 = vmatpush1.msra.mxu0 0.0
    %3416 = vmatprep.subr.mxu0 0.0
    %3417 = vmatpush1.msra.mxu0 0.0
    %3418 = vmatprep.subr.mxu0 0.0
    %3419 = vmatpush1.msra.mxu0 0.0
    %3420 = vmatprep.subr.mxu0 0.0
    %3421 = vmatpush1.msra.mxu0 0.0
    %3422 = vmatprep.subr.mxu0 0.0
    %3423 = vmatpush1.msra.mxu0 0.0
    %3424 = vmatprep.subr.mxu0 0.0
    %3425 = vmatpush1.msra.mxu0 0.0
    %3426 = vmatprep.subr.mxu0 0.0
    %3427 = vmatpush1.msra.mxu0 0.0
    %3428 = vmatprep.subr.mxu0 0.0
    %3429 = vmatpush1.msra.mxu0 0.0
    %3430 = vmatprep.subr.mxu0 0.0
    %3431 = vmatpush1.msra.mxu0 0.0
    %3432 = vmatprep.subr.mxu0 0.0
    %3433 = vmatpush1.msra.mxu0 0.0
    %3434 = vmatprep.subr.mxu0 0.0
    %3435 = vmatpush1.msra.mxu0 0.0
    %3436 = vmatprep.subr.mxu0 0.0
    %3437 = vmatpush1.msra.mxu0 0.0
    %3438 = vmatprep.subr.mxu0 0.0
    %3439 = vmatpush1.msra.mxu0 0.0
    %3440 = vmatprep.subr.mxu0 0.0
    %3441 = vmatpush1.msra.mxu0 0.0
    %3442 = vmatprep.subr.mxu0 0.0
    %3443 = vmatpush1.msra.mxu0 %v3407
    %3444 = vmatprep.subr.mxu0 0.0
    %3445 = vmatpush2.msra.mxu0 0.0
    %3446 = vmatprep.subr.mxu0 0.0
    %3447 = vmatpush2.msra.mxu0 0.0
    %3448 = vmatprep.subr.mxu0 0.0
    %3449 = vmatpush2.msra.mxu0 0.0
    %3450 = vmatprep.subr.mxu0 0.0
    %3451 = vmatpush2.msra.mxu0 0.0
    %3452 = vmatprep.subr.mxu0 0.0
    %3453 = vmatpush2.msra.mxu0 0.0
    %3454 = vmatprep.subr.mxu0 0.0
    %3455 = vmatpush2.msra.mxu0 0.0
    %3456 = vmatprep.subr.mxu0 0.0
    %3457 = vmatpush2.msra.mxu0 0.0
    %3458 = vmatprep.subr.mxu0 0.0
    %3459 = vmatpush2.msra.mxu0 0.0
    %3460 = vmatprep.subr.mxu0 0.0
    %3461 = vmatpush2.msra.mxu0 0.0
    %3462 = vmatprep.subr.mxu0 0.0
    %3463 = vmatpush2.msra.mxu0 0.0
    %3464 = vmatprep.subr.mxu0 0.0
    %3465 = vmatpush2.msra.mxu0 0.0
    %3466 = vmatprep.subr.mxu0 0.0
    %3467 = vmatpush2.msra.mxu0 0.0
    %3468 = vmatprep.subr.mxu0 0.0
    %3469 = vmatpush2.msra.mxu0 0.0
    %3470 = vmatprep.subr.mxu0 0.0
    %3471 = vmatpush2.msra.mxu0 0.0
    %3472 = vmatprep.subr.mxu0 0.0
    %3473 = vmatpush2.msra.mxu0 0.0
    %3474 = vmatprep.subr.mxu0 0.0
    %3475 = vmatpush2.msra.mxu0 0.0
    %3476 = vmatprep.mubr.f32.mxu0 0.0
    %3477 = vmatmul.mubr.f32.gmra.mxu0 %v3410
    %v3478 = vpop.f32.mrf.mxu0
    %v3479 = vadd.f32 0.0, %v3478
    %v3480 = vpop.f32.mrf.mxu0
    %3481 = vdwg.mxu0
    %3482 = vrot.lane.b32.xlu0 %v2237, 64
    %v3483 = vpop.permute.xlu0 %3482
    %v3486 = vsel %vm378, %v2949, 0
    %3488 = vmatprep.subr.mxu0 0.0
    %3489 = vmatpush1.msra.mxu0 0.0
    %3490 = vmatprep.subr.mxu0 0.0
    %3491 = vmatpush1.msra.mxu0 0.0
    %3492 = vmatprep.subr.mxu0 0.0
    %3493 = vmatpush1.msra.mxu0 0.0
    %3494 = vmatprep.subr.mxu0 0.0
    %3495 = vmatpush1.msra.mxu0 0.0
    %3496 = vmatprep.subr.mxu0 0.0
    %3497 = vmatpush1.msra.mxu0 0.0
    %3498 = vmatprep.subr.mxu0 0.0
    %3499 = vmatpush1.msra.mxu0 0.0
    %3500 = vmatprep.subr.mxu0 0.0
    %3501 = vmatpush1.msra.mxu0 0.0
    %3502 = vmatprep.subr.mxu0 0.0
    %3503 = vmatpush1.msra.mxu0 0.0
    %3504 = vmatprep.subr.mxu0 0.0
    %3505 = vmatpush1.msra.mxu0 0.0
    %3506 = vmatprep.subr.mxu0 0.0
    %3507 = vmatpush1.msra.mxu0 0.0
    %3508 = vmatprep.subr.mxu0 0.0
    %3509 = vmatpush1.msra.mxu0 0.0
    %3510 = vmatprep.subr.mxu0 0.0
    %3511 = vmatpush1.msra.mxu0 0.0
    %3512 = vmatprep.subr.mxu0 0.0
    %3513 = vmatpush1.msra.mxu0 0.0
    %3514 = vmatprep.subr.mxu0 0.0
    %3515 = vmatpush1.msra.mxu0 0.0
    %3516 = vmatprep.subr.mxu0 0.0
    %3517 = vmatpush1.msra.mxu0 0.0
    %3518 = vmatprep.subr.mxu0 0.0
    %3519 = vmatpush1.msra.mxu0 %v3483
    %3520 = vmatprep.subr.mxu0 0.0
    %3521 = vmatpush2.msra.mxu0 0.0
    %3522 = vmatprep.subr.mxu0 0.0
    %3523 = vmatpush2.msra.mxu0 0.0
    %3524 = vmatprep.subr.mxu0 0.0
    %3525 = vmatpush2.msra.mxu0 0.0
    %3526 = vmatprep.subr.mxu0 0.0
    %3527 = vmatpush2.msra.mxu0 0.0
    %3528 = vmatprep.subr.mxu0 0.0
    %3529 = vmatpush2.msra.mxu0 0.0
    %3530 = vmatprep.subr.mxu0 0.0
    %3531 = vmatpush2.msra.mxu0 0.0
    %3532 = vmatprep.subr.mxu0 0.0
    %3533 = vmatpush2.msra.mxu0 0.0
    %3534 = vmatprep.subr.mxu0 0.0
    %3535 = vmatpush2.msra.mxu0 0.0
    %3536 = vmatprep.subr.mxu0 0.0
    %3537 = vmatpush2.msra.mxu0 0.0
    %3538 = vmatprep.subr.mxu0 0.0
    %3539 = vmatpush2.msra.mxu0 0.0
    %3540 = vmatprep.subr.mxu0 0.0
    %3541 = vmatpush2.msra.mxu0 0.0
    %3542 = vmatprep.subr.mxu0 0.0
    %3543 = vmatpush2.msra.mxu0 0.0
    %3544 = vmatprep.subr.mxu0 0.0
    %3545 = vmatpush2.msra.mxu0 0.0
    %3546 = vmatprep.subr.mxu0 0.0
    %3547 = vmatpush2.msra.mxu0 0.0
    %3548 = vmatprep.subr.mxu0 0.0
    %3549 = vmatpush2.msra.mxu0 0.0
    %3550 = vmatprep.subr.mxu0 0.0
    %3551 = vmatpush2.msra.mxu0 0.0
    %3552 = vmatprep.mubr.f32.mxu0 0.0
    %3553 = vmatmul.mubr.f32.gmra.mxu0 %v3486
    %v3554 = vpop.f32.mrf.mxu0
    %v3555 = vadd.f32 0.0, %v3554
    %v3556 = vpop.f32.mrf.mxu0
    %3557 = vdwg.mxu0
    %3560 = vrot.lane.b32.xlu0 %v3175, 8
    %v3561 = vpop.permute.xlu0 %3560
    %3562 = vrot.lane.b32.xlu0 %v3251, 8
    %v3563 = vpop.permute.xlu0 %3562
    %3568 = vrot.lane.b32.xlu0 %v3327, 16
    %v3569 = vpop.permute.xlu0 %3568
    %3570 = vrot.lane.b32.xlu0 %v3403, 16
    %v3571 = vpop.permute.xlu0 %3570
    %3576 = vrot.lane.b32.xlu0 %v3479, 24
    %v3577 = vpop.permute.xlu0 %3576
    %3578 = vrot.lane.b32.xlu0 %v3555, 24
    %v3579 = vpop.permute.xlu0 %3578
    %v3582 = vsel %vm378, %v3023, %v3561
    %v3583 = vsel %vm378, %v3099, %v3563
    %v3584 = vsel %vm1733, %v3582, %v3569
    %v3585 = vsel %vm1733, %v3583, %v3571
    %v3586 = vsel %vm1736, %v3584, %v3577
    %v3587 = vsel %vm1736, %v3585, %v3579
    %s3588 = scalar_lea.vmem %s9, 32
    %v3589 = vld [vmem:[%s3588] sm:$0xff]
    %v3590 = vld [vmem:[%s3588 + $0x8] sm:$0xff]
    %v3591 = vld [vmem:[%s3588 + $0x10] sm:$0xff]
    %v3592 = vld [vmem:[%s3588 + $0x18] sm:$0xff]
    %s3593 = scalar_lea.vmem %s10, 1
    %v3594 = vld [vmem:[%s3593] sm:$0x1]
    %v3596 = vlaneseq
    %v3597 = vshrl.u32 %v3596, 7
    %v3598 = vsub.s32 0, %v3597
    %v3599 = vrot.slane %v3594, %v3598
    %v3602 = vsel %vm199, %v3586, 0
    %v3605 = vsel %vm199, %v3587, 0
    %3607 = vmatprep.subr.mxu0 0.0
    %3608 = vmatpush1.msra.mxu0 0.0
    %3609 = vmatprep.subr.mxu0 0.0
    %3610 = vmatpush1.msra.mxu0 0.0
    %3611 = vmatprep.subr.mxu0 0.0
    %3612 = vmatpush1.msra.mxu0 0.0
    %3613 = vmatprep.subr.mxu0 0.0
    %3614 = vmatpush1.msra.mxu0 0.0
    %3615 = vmatprep.subr.mxu0 0.0
    %3616 = vmatpush1.msra.mxu0 0.0
    %3617 = vmatprep.subr.mxu0 0.0
    %3618 = vmatpush1.msra.mxu0 0.0
    %3619 = vmatprep.subr.mxu0 0.0
    %3620 = vmatpush1.msra.mxu0 0.0
    %3621 = vmatprep.subr.mxu0 0.0
    %3622 = vmatpush1.msra.mxu0 0.0
    %3623 = vmatprep.subr.mxu0 0.0
    %3624 = vmatpush1.msra.mxu0 0.0
    %3625 = vmatprep.subr.mxu0 0.0
    %3626 = vmatpush1.msra.mxu0 0.0
    %3627 = vmatprep.subr.mxu0 0.0
    %3628 = vmatpush1.msra.mxu0 0.0
    %3629 = vmatprep.subr.mxu0 0.0
    %3630 = vmatpush1.msra.mxu0 0.0
    %3631 = vmatprep.subr.mxu0 0.0
    %3632 = vmatpush1.msra.mxu0 %v3592
    %3633 = vmatprep.subr.mxu0 0.0
    %3634 = vmatpush1.msra.mxu0 %v3591
    %3635 = vmatprep.subr.mxu0 0.0
    %3636 = vmatpush1.msra.mxu0 %v3590
    %3637 = vmatprep.subr.mxu0 0.0
    %3638 = vmatpush1.msra.mxu0 %v3589
    %3639 = vmatprep.subr.mxu0 0.0
    %3640 = vmatpush2.msra.mxu0 0.0
    %3641 = vmatprep.subr.mxu0 0.0
    %3642 = vmatpush2.msra.mxu0 0.0
    %3643 = vmatprep.subr.mxu0 0.0
    %3644 = vmatpush2.msra.mxu0 0.0
    %3645 = vmatprep.subr.mxu0 0.0
    %3646 = vmatpush2.msra.mxu0 0.0
    %3647 = vmatprep.subr.mxu0 0.0
    %3648 = vmatpush2.msra.mxu0 0.0
    %3649 = vmatprep.subr.mxu0 0.0
    %3650 = vmatpush2.msra.mxu0 0.0
    %3651 = vmatprep.subr.mxu0 0.0
    %3652 = vmatpush2.msra.mxu0 0.0
    %3653 = vmatprep.subr.mxu0 0.0
    %3654 = vmatpush2.msra.mxu0 0.0
    %3655 = vmatprep.subr.mxu0 0.0
    %3656 = vmatpush2.msra.mxu0 0.0
    %3657 = vmatprep.subr.mxu0 0.0
    %3658 = vmatpush2.msra.mxu0 0.0
    %3659 = vmatprep.subr.mxu0 0.0
    %3660 = vmatpush2.msra.mxu0 0.0
    %3661 = vmatprep.subr.mxu0 0.0
    %3662 = vmatpush2.msra.mxu0 0.0
    %3663 = vmatprep.subr.mxu0 0.0
    %3664 = vmatpush2.msra.mxu0 0.0
    %3665 = vmatprep.subr.mxu0 0.0
    %3666 = vmatpush2.msra.mxu0 0.0
    %3667 = vmatprep.subr.mxu0 0.0
    %3668 = vmatpush2.msra.mxu0 0.0
    %3669 = vmatprep.subr.mxu0 0.0
    %3670 = vmatpush2.msra.mxu0 0.0
    %3671 = vmatprep.mubr.f32.mxu0 0.0
    %3672 = vmatmul.mubr.f32.gmra.mxu0 %v3602
    %v3673 = vpop.f32.mrf.mxu0
    %v3674 = vadd.f32 %v3599, %v3673
    %v3675 = vpop.f32.mrf.mxu0
    %3676 = vmatprep.mubr.f32.mxu0 0.0
    %3677 = vmatmul.mubr.f32.gmra.mxu0 %v3605
    %v3678 = vpop.f32.mrf.mxu0
    %v3679 = vadd.f32 %v3599, %v3678
    %v3680 = vpop.f32.mrf.mxu0
    %3681 = vdwg.mxu0
    %v3682 = vadd.f32 %v3674, %v2128
    %v3683 = vadd.f32 %v3679, %v2129
    %s3684 = scalar_lea.vmem %s11, 1
    %v3685 = vld [vmem:[%s3684] sm:$0x1]
    %s3686 = scalar_lea.vmem %s12, 1
    %v3687 = vld [vmem:[%s3686] sm:$0x1]
    %v3688 = vsel %vm199, %v3682, 0.0
    %3689 = vadd.xlane.f32.xlu0 %v3688
    %v3690 = vpop.xlane.xlu0 %3689
    %v3691 = vsel %vm199, %v3683, 0.0
    %3692 = vadd.xlane.f32.xlu0 %v3691
    %v3693 = vpop.xlane.xlu0 %3692
    %v3694 = vmul.f32 %v3690, %v206
    %v3695 = vmul.f32 %v3693, %v206
    %v3696 = vsub.f32 %v3682, %v3694
    %v3697 = vsub.f32 %v3683, %v3695
    %v3698 = vmul.f32 %v3696, %v3696
    %v3699 = vmul.f32 %v3697, %v3697
    %v3700 = vsel %vm199, %v3698, 0.0
    %3701 = vadd.xlane.f32.xlu0 %v3700
    %v3702 = vpop.xlane.xlu0 %3701
    %v3703 = vsel %vm199, %v3699, 0.0
    %3704 = vadd.xlane.f32.xlu0 %v3703
    %v3705 = vpop.xlane.xlu0 %3704
    %v3706 = vmul.f32 %v3702, %v206
    %v3707 = vmul.f32 %v3705, %v206
    %v3708 = vadd.f32 %v3706, 1e-12
    %v3709 = vadd.f32 %v3707, 1e-12
    %v3710 = vrsqrt.pop %v3708
    %v3711 = vrsqrt.pop %v3709
    %v3712 = vmul.f32 %v3696, %v3710
    %v3713 = vmul.f32 %v3697, %v3711
    %v3715 = vlaneseq
    %v3716 = vshrl.u32 %v3715, 7
    %v3717 = vsub.s32 0, %v3716
    %v3718 = vrot.slane %v3685, %v3717
    %v3720 = vmul.f32 %v3712, %v3718
    %v3721 = vmul.f32 %v3713, %v3718
    %v3723 = vlaneseq
    %v3724 = vshrl.u32 %v3723, 7
    %v3725 = vsub.s32 0, %v3724
    %v3726 = vrot.slane %v3687, %v3725
    %v3728 = vadd.f32 %v3720, %v3726
    %v3729 = vadd.f32 %v3721, %v3726
    %s3730 = scalar_lea.vmem %s13, 32
    %v3731 = vld [vmem:[%s3730] sm:$0xff]
    %v3732 = vld [vmem:[%s3730 + $0x8] sm:$0xff]
    %v3733 = vld [vmem:[%s3730 + $0x10] sm:$0xff]
    %v3734 = vld [vmem:[%s3730 + $0x18] sm:$0xff]
    %s3735 = scalar_lea.vmem %s14, 1
    %v3736 = vld [vmem:[%s3735] sm:$0x1]
    %v3738 = vlaneseq
    %v3739 = vshrl.u32 %v3738, 7
    %v3740 = vsub.s32 0, %v3739
    %v3741 = vrot.slane %v3736, %v3740
    %v3744 = vsel %vm199, %v3728, 0
    %v3747 = vsel %vm199, %v3729, 0
    %3749 = vmatprep.subr.mxu0 0.0
    %3750 = vmatpush1.msra.mxu0 0.0
    %3751 = vmatprep.subr.mxu0 0.0
    %3752 = vmatpush1.msra.mxu0 0.0
    %3753 = vmatprep.subr.mxu0 0.0
    %3754 = vmatpush1.msra.mxu0 0.0
    %3755 = vmatprep.subr.mxu0 0.0
    %3756 = vmatpush1.msra.mxu0 0.0
    %3757 = vmatprep.subr.mxu0 0.0
    %3758 = vmatpush1.msra.mxu0 0.0
    %3759 = vmatprep.subr.mxu0 0.0
    %3760 = vmatpush1.msra.mxu0 0.0
    %3761 = vmatprep.subr.mxu0 0.0
    %3762 = vmatpush1.msra.mxu0 0.0
    %3763 = vmatprep.subr.mxu0 0.0
    %3764 = vmatpush1.msra.mxu0 0.0
    %3765 = vmatprep.subr.mxu0 0.0
    %3766 = vmatpush1.msra.mxu0 0.0
    %3767 = vmatprep.subr.mxu0 0.0
    %3768 = vmatpush1.msra.mxu0 0.0
    %3769 = vmatprep.subr.mxu0 0.0
    %3770 = vmatpush1.msra.mxu0 0.0
    %3771 = vmatprep.subr.mxu0 0.0
    %3772 = vmatpush1.msra.mxu0 0.0
    %3773 = vmatprep.subr.mxu0 0.0
    %3774 = vmatpush1.msra.mxu0 %v3734
    %3775 = vmatprep.subr.mxu0 0.0
    %3776 = vmatpush1.msra.mxu0 %v3733
    %3777 = vmatprep.subr.mxu0 0.0
    %3778 = vmatpush1.msra.mxu0 %v3732
    %3779 = vmatprep.subr.mxu0 0.0
    %3780 = vmatpush1.msra.mxu0 %v3731
    %3781 = vmatprep.subr.mxu0 0.0
    %3782 = vmatpush2.msra.mxu0 0.0
    %3783 = vmatprep.subr.mxu0 0.0
    %3784 = vmatpush2.msra.mxu0 0.0
    %3785 = vmatprep.subr.mxu0 0.0
    %3786 = vmatpush2.msra.mxu0 0.0
    %3787 = vmatprep.subr.mxu0 0.0
    %3788 = vmatpush2.msra.mxu0 0.0
    %3789 = vmatprep.subr.mxu0 0.0
    %3790 = vmatpush2.msra.mxu0 0.0
    %3791 = vmatprep.subr.mxu0 0.0
    %3792 = vmatpush2.msra.mxu0 0.0
    %3793 = vmatprep.subr.mxu0 0.0
    %3794 = vmatpush2.msra.mxu0 0.0
    %3795 = vmatprep.subr.mxu0 0.0
    %3796 = vmatpush2.msra.mxu0 0.0
    %3797 = vmatprep.subr.mxu0 0.0
    %3798 = vmatpush2.msra.mxu0 0.0
    %3799 = vmatprep.subr.mxu0 0.0
    %3800 = vmatpush2.msra.mxu0 0.0
    %3801 = vmatprep.subr.mxu0 0.0
    %3802 = vmatpush2.msra.mxu0 0.0
    %3803 = vmatprep.subr.mxu0 0.0
    %3804 = vmatpush2.msra.mxu0 0.0
    %3805 = vmatprep.subr.mxu0 0.0
    %3806 = vmatpush2.msra.mxu0 0.0
    %3807 = vmatprep.subr.mxu0 0.0
    %3808 = vmatpush2.msra.mxu0 0.0
    %3809 = vmatprep.subr.mxu0 0.0
    %3810 = vmatpush2.msra.mxu0 0.0
    %3811 = vmatprep.subr.mxu0 0.0
    %3812 = vmatpush2.msra.mxu0 0.0
    %3813 = vmatprep.mubr.f32.mxu0 0.0
    %3814 = vmatmul.mubr.f32.gmra.mxu0 %v3744
    %v3815 = vpop.f32.mrf.mxu0
    %v3816 = vadd.f32 %v3741, %v3815
    %v3817 = vpop.f32.mrf.mxu0
    %3818 = vmatprep.mubr.f32.mxu0 0.0
    %3819 = vmatmul.mubr.f32.gmra.mxu0 %v3747
    %v3820 = vpop.f32.mrf.mxu0
    %v3821 = vadd.f32 %v3741, %v3820
    %v3822 = vpop.f32.mrf.mxu0
    %3823 = vdwg.mxu0
    %v3824 = vmul.f32 %v3816, 0.5
    %v3825 = vmul.f32 %v3821, 0.5
    %v3826 = vmul.f32 %v3816, 0.044715
    %v3827 = vmul.f32 %v3821, 0.044715
    %v3828 = vmul.f32 %v3826, %v3816
    %v3829 = vmul.f32 %v3827, %v3821
    %v3830 = vmul.f32 %v3828, %v3816
    %v3831 = vmul.f32 %v3829, %v3821
    %v3832 = vadd.f32 %v3816, %v3830
    %v3833 = vadd.f32 %v3821, %v3831
    %v3834 = vmul.f32 %v3832, 0.7978846
    %v3835 = vmul.f32 %v3833, 0.7978846
    %v3836 = vtanh.pop %v3834
    %v3837 = vtanh.pop %v3835
    %v3838 = vadd.f32 %v3836, 1.0
    %v3839 = vadd.f32 %v3837, 1.0
    %v3840 = vmul.f32 %v3824, %v3838
    %v3841 = vmul.f32 %v3825, %v3839
    %s3842 = scalar_lea.vmem %s15, 64
    %v3843 = vld [vmem:[%s3842] sm:$0xff]
    %v3844 = vld [vmem:[%s3842 + $0x8] sm:$0xff]
    %v3845 = vld [vmem:[%s3842 + $0x10] sm:$0xff]
    %v3846 = vld [vmem:[%s3842 + $0x18] sm:$0xff]
    %v3847 = vld [vmem:[%s3842 + $0x20] sm:$0xff]
    %v3848 = vld [vmem:[%s3842 + $0x28] sm:$0xff]
    %v3849 = vld [vmem:[%s3842 + $0x30] sm:$0xff]
    %v3850 = vld [vmem:[%s3842 + $0x38] sm:$0xff]
    %s3851 = scalar_lea.vmem %s16, 1
    %v3852 = vld [vmem:[%s3851] sm:$0x1]
    %v3854 = vlaneseq
    %v3855 = vshrl.u32 %v3854, 7
    %v3856 = vsub.s32 0, %v3855
    %v3857 = vrot.slane %v3852, %v3856
    %v3860 = vsel %vm2002, %v3840, 0
    %v3863 = vsel %vm2002, %v3841, 0
    %3865 = vmatprep.subr.mxu0 0.0
    %3866 = vmatpush1.msra.mxu0 0.0
    %3867 = vmatprep.subr.mxu0 0.0
    %3868 = vmatpush1.msra.mxu0 0.0
    %3869 = vmatprep.subr.mxu0 0.0
    %3870 = vmatpush1.msra.mxu0 0.0
    %3871 = vmatprep.subr.mxu0 0.0
    %3872 = vmatpush1.msra.mxu0 0.0
    %3873 = vmatprep.subr.mxu0 0.0
    %3874 = vmatpush1.msra.mxu0 0.0
    %3875 = vmatprep.subr.mxu0 0.0
    %3876 = vmatpush1.msra.mxu0 0.0
    %3877 = vmatprep.subr.mxu0 0.0
    %3878 = vmatpush1.msra.mxu0 0.0
    %3879 = vmatprep.subr.mxu0 0.0
    %3880 = vmatpush1.msra.mxu0 0.0
    %3881 = vmatprep.subr.mxu0 0.0
    %3882 = vmatpush1.msra.mxu0 %v3850
    %3883 = vmatprep.subr.mxu0 0.0
    %3884 = vmatpush1.msra.mxu0 %v3849
    %3885 = vmatprep.subr.mxu0 0.0
    %3886 = vmatpush1.msra.mxu0 %v3848
    %3887 = vmatprep.subr.mxu0 0.0
    %3888 = vmatpush1.msra.mxu0 %v3847
    %3889 = vmatprep.subr.mxu0 0.0
    %3890 = vmatpush1.msra.mxu0 %v3846
    %3891 = vmatprep.subr.mxu0 0.0
    %3892 = vmatpush1.msra.mxu0 %v3845
    %3893 = vmatprep.subr.mxu0 0.0
    %3894 = vmatpush1.msra.mxu0 %v3844
    %3895 = vmatprep.subr.mxu0 0.0
    %3896 = vmatpush1.msra.mxu0 %v3843
    %3897 = vmatprep.subr.mxu0 0.0
    %3898 = vmatpush2.msra.mxu0 0.0
    %3899 = vmatprep.subr.mxu0 0.0
    %3900 = vmatpush2.msra.mxu0 0.0
    %3901 = vmatprep.subr.mxu0 0.0
    %3902 = vmatpush2.msra.mxu0 0.0
    %3903 = vmatprep.subr.mxu0 0.0
    %3904 = vmatpush2.msra.mxu0 0.0
    %3905 = vmatprep.subr.mxu0 0.0
    %3906 = vmatpush2.msra.mxu0 0.0
    %3907 = vmatprep.subr.mxu0 0.0
    %3908 = vmatpush2.msra.mxu0 0.0
    %3909 = vmatprep.subr.mxu0 0.0
    %3910 = vmatpush2.msra.mxu0 0.0
    %3911 = vmatprep.subr.mxu0 0.0
    %3912 = vmatpush2.msra.mxu0 0.0
    %3913 = vmatprep.subr.mxu0 0.0
    %3914 = vmatpush2.msra.mxu0 0.0
    %3915 = vmatprep.subr.mxu0 0.0
    %3916 = vmatpush2.msra.mxu0 0.0
    %3917 = vmatprep.subr.mxu0 0.0
    %3918 = vmatpush2.msra.mxu0 0.0
    %3919 = vmatprep.subr.mxu0 0.0
    %3920 = vmatpush2.msra.mxu0 0.0
    %3921 = vmatprep.subr.mxu0 0.0
    %3922 = vmatpush2.msra.mxu0 0.0
    %3923 = vmatprep.subr.mxu0 0.0
    %3924 = vmatpush2.msra.mxu0 0.0
    %3925 = vmatprep.subr.mxu0 0.0
    %3926 = vmatpush2.msra.mxu0 0.0
    %3927 = vmatprep.subr.mxu0 0.0
    %3928 = vmatpush2.msra.mxu0 0.0
    %3929 = vmatprep.mubr.f32.mxu0 0.0
    %3930 = vmatmul.mubr.f32.gmra.mxu0 %v3860
    %v3931 = vpop.f32.mrf.mxu0
    %v3932 = vadd.f32 %v3857, %v3931
    %v3933 = vpop.f32.mrf.mxu0
    %3934 = vmatprep.mubr.f32.mxu0 0.0
    %3935 = vmatmul.mubr.f32.gmra.mxu0 %v3863
    %v3936 = vpop.f32.mrf.mxu0
    %v3937 = vadd.f32 %v3857, %v3936
    %v3938 = vpop.f32.mrf.mxu0
    %3939 = vdwg.mxu0
    %v3940 = vadd.f32 %v3932, %v3728
    %v3941 = vadd.f32 %v3937, %v3729
    %s3942 = scalar_lea.vmem %s17, 1
    %v3943 = vld [vmem:[%s3942] sm:$0x1]
    %s3944 = scalar_lea.vmem %s18, 1
    %v3945 = vld [vmem:[%s3944] sm:$0x1]
    %v3946 = vsel %vm199, %v3940, 0.0
    %3947 = vadd.xlane.f32.xlu0 %v3946
    %v3948 = vpop.xlane.xlu0 %3947
    %v3949 = vsel %vm199, %v3941, 0.0
    %3950 = vadd.xlane.f32.xlu0 %v3949
    %v3951 = vpop.xlane.xlu0 %3950
    %v3952 = vmul.f32 %v3948, %v206
    %v3953 = vmul.f32 %v3951, %v206
    %v3954 = vsub.f32 %v3940, %v3952
    %v3955 = vsub.f32 %v3941, %v3953
    %v3956 = vmul.f32 %v3954, %v3954
    %v3957 = vmul.f32 %v3955, %v3955
    %v3958 = vsel %vm199, %v3956, 0.0
    %3959 = vadd.xlane.f32.xlu0 %v3958
    %v3960 = vpop.xlane.xlu0 %3959
    %v3961 = vsel %vm199, %v3957, 0.0
    %3962 = vadd.xlane.f32.xlu0 %v3961
    %v3963 = vpop.xlane.xlu0 %3962
    %v3964 = vmul.f32 %v3960, %v206
    %v3965 = vmul.f32 %v3963, %v206
    %v3966 = vadd.f32 %v3964, 1e-12
    %v3967 = vadd.f32 %v3965, 1e-12
    %v3968 = vrsqrt.pop %v3966
    %v3969 = vrsqrt.pop %v3967
    %v3970 = vmul.f32 %v3954, %v3968
    %v3971 = vmul.f32 %v3955, %v3969
    %v3973 = vlaneseq
    %v3974 = vshrl.u32 %v3973, 7
    %v3975 = vsub.s32 0, %v3974
    %v3976 = vrot.slane %v3943, %v3975
    %v3978 = vmul.f32 %v3970, %v3976
    %v3979 = vmul.f32 %v3971, %v3976
    %v3981 = vlaneseq
    %v3982 = vshrl.u32 %v3981, 7
    %v3983 = vsub.s32 0, %v3982
    %v3984 = vrot.slane %v3945, %v3983
    %v3986 = vadd.f32 %v3978, %v3984
    %v3987 = vadd.f32 %v3979, %v3984
    %v3989 = vrot.slane %v3987, 7
    %v3991 = vsel %vm166, %v3986, %v3989
    %vm3992 = vcmask 254976
    %3993 = vst.msk [vmem:[#allocation5] sm:$0x3] %vm3992, %v3991
    // Predicated region
    $region82: #{bert_finetune_forward.1} parent=1 // pred_check
      _
    $region83: #{bert_finetune_forward.1} parent=1 // pred_check_branch
      %3995 = sbr.rel (0) target = $region85
    $region84: #{bert_finetune_forward.1} parent=1 // pred_region
      %s3997 = ssub.s32 32, 32
      %3998 = vsyncadd [#allocation3], %s3997
      %s4000 = sshll.u32 [#allocation5], 4
      %s4001 = int_to_ptr.vmem [resolvable:$true] %s4000
      %4003 = dma.vmem_to_hbm [thread:$0]  %s4001, 32, %s19, [#allocation3]
    $region85: #{bert_finetune_forward.1} parent=1 // pred_fallthru
      _
    // Predicated region
    $region86: #{bert_finetune_forward.1} parent=1 // pred_check
      _
    $region87: #{bert_finetune_forward.1} parent=1 // pred_check_branch
      %4005 = sbr.rel (0) target = $region89
    $region88: #{bert_finetune_forward.1} parent=1 // pred_region
      %4006 = dma.done [#allocation3], 32
    $region89: #{bert_finetune_forward.1} parent=1 // pred_fallthru
      _
    %4007 = vsyncpa [#allocation3], 1
    %4008 = vsyncpa [#allocation4], 1

</llo_original>
